<compile_context>
chip_gen: v6e
topology: v6e:2x2x1
jax: 0.10.0
libtpu: 0.0.40
codegen_flags: <defaults>
</compile_context>

<pallas_src>
import math

import jax
import jax.numpy as jnp
from jax.experimental import pallas as pl
from jax.experimental.pallas import tpu as pltpu


# --------------------------------------------------------------------------
# Small helpers.
# --------------------------------------------------------------------------
def _vmem_limit_bytes():
    """Use most of VMEM but leave headroom; re-derived per chip (v7x: 64 MiB/TC)."""
    try:
        cap = pltpu.get_tpu_info().vmem_capacity_bytes
    except Exception:  # conservative fallback (works on every generation)
        cap = 64 * 1024 * 1024
    return int(min(100 * 1024 * 1024, max(cap - 16 * 1024 * 1024, 32 * 1024 * 1024)))


def _pick_time_block(T, B, max_steps=32):
    """Largest divisor TT of T with TT <= max_steps such that the (TT*B, I)
    input slab keeps an 8-aligned sublane dim (or spans the whole array).
    Falls back to the smallest valid divisor above max_steps (worst case T)."""
    divs = [d for d in range(1, T + 1) if T % d == 0]
    ok = [d for d in divs if d == T or (d * B) % 8 == 0]
    small = [d for d in ok if d <= max_steps]
    if small:
        return max(small)
    return min(ok)  # never empty: T itself always qualifies


def _sigmoid(x):
    # exp() rides the EUP slot; approx reciprocal also goes to the EUP, so no
    # f32 divide on the serialized per-step critical path.
    return pl.reciprocal(1.0 + jnp.exp(-x), approx=True)


# --------------------------------------------------------------------------
# Fused time-blocked LSTM scan kernel (all directions of one layer at once).
# --------------------------------------------------------------------------
def _make_scan_kernel(*, ndir, TT, B, H, has_bias, reverse_flags, out_dtype):
    n_in_per_dir = 5 + (1 if has_bias else 0)

    def kernel(*refs):
        n_in = ndir * n_in_per_dir
        n_out = ndir * 3
        in_refs = refs[:n_in]
        out_refs = refs[n_in:n_in + n_out]
        scr_refs = refs[n_in + n_out:]

        blk = pl.program_id(0)

        x_refs, h0_refs, c0_refs, wih_refs, whh_refs, b_refs = [], [], [], [], [], []
        y_refs, hy_refs, cy_refs = [], [], []
        h_scr, c_scr, gx_scr = [], [], []
        for d in range(ndir):
            base = d * n_in_per_dir
            x_refs.append(in_refs[base + 0])
            h0_refs.append(in_refs[base + 1])
            c0_refs.append(in_refs[base + 2])
            wih_refs.append(in_refs[base + 3])
            whh_refs.append(in_refs[base + 4])
            b_refs.append(in_refs[base + 5] if has_bias else None)
            y_refs.append(out_refs[3 * d + 0])
            hy_refs.append(out_refs[3 * d + 1])
            cy_refs.append(out_refs[3 * d + 2])
            h_scr.append(scr_refs[3 * d + 0])
            c_scr.append(scr_refs[3 * d + 1])
            gx_scr.append(scr_refs[3 * d + 2])

        # Seed the f32 VMEM carry on the first time block only.
        @pl.when(blk == 0)
        def _init():
            for d in range(ndir):
                h_scr[d][...] = h0_refs[d][...].astype(jnp.float32)
                c_scr[d][...] = c0_refs[d][...].astype(jnp.float32)

        # Per-block input projection: one big lane-dense MXU matmul per
        # direction against the VMEM-resident W_ih^T (+ pre-fused bias).
        for d in range(ndir):
            xb = x_refs[d][...]
            gx = jnp.dot(xb.astype(wih_refs[d].dtype), wih_refs[d][...],
                         preferred_element_type=jnp.float32)
            if has_bias:
                gx = gx + b_refs[d][...].astype(jnp.float32)
            gx_scr[d][...] = gx

        # Load the recurrent carry once per block; keep it in (f32) registers
        # across the unrolled inner time loop.
        h = [h_scr[d][...] for d in range(ndir)]
        c = [c_scr[d][...] for d in range(ndir)]

        # Unrolled inner loop over the TT timesteps of this block.  The two
        # directions are interleaved per step so their independent
        # MXU->EUP->VPU chains overlap.
        for u in range(TT):
            for d in range(ndir):
                s = (TT - 1 - u) if reverse_flags[d] else u        # static index
                gx_u = gx_scr[d][s * B:(s + 1) * B, :]
                gates = gx_u + jnp.dot(
                    h[d].astype(whh_refs[d].dtype), whh_refs[d][...],
                    preferred_element_type=jnp.float32)
                i_g = _sigmoid(gates[:, 0 * H:1 * H])
                f_g = _sigmoid(gates[:, 1 * H:2 * H])
                g_g = jnp.tanh(gates[:, 2 * H:3 * H])
                o_g = _sigmoid(gates[:, 3 * H:4 * H])
                c_new = f_g * c[d] + i_g * g_g
                h_new = o_g * jnp.tanh(c_new)
                y_refs[d][s] = h_new.astype(out_dtype)
                h[d] = h_new
                c[d] = c_new

        # Persist the carry for the next time block and surface the state.
        for d in range(ndir):
            h_scr[d][...] = h[d]
            c_scr[d][...] = c[d]
            hy_refs[d][...] = h[d].astype(hy_refs[d].dtype)
            cy_refs[d][...] = c[d].astype(cy_refs[d].dtype)

    return kernel


def lstm_layer_forward(x, h0s, c0s, dir_params, *, time_block=32):
    """All directions of one stacked layer in a single fused Pallas scan.

    x:          (T, B, I)
    h0s, c0s:   lists (len = ndir) of (B, H)
    dir_params: list of (W_ih^T (I,4H), W_hh^T (H,4H), fused bias (1,4H) or None)
    returns     (hy list, cy list, y list) with y[d] of shape (T, B, H),
                time-aligned with x (reverse direction already flipped back).
    """
    T, B, I = x.shape
    ndir = len(dir_params)
    H = h0s[0].shape[-1]
    G = 4 * H
    has_bias = dir_params[0][2] is not None

    TT = _pick_time_block(T, B, time_block)
    assert T % TT == 0
    nblk = T // TT

    x2d = x.reshape(T * B, I)  # contiguous metadata reshape, no HBM copy/pad

    fwd2 = lambda b: (b, 0)
    rev2 = lambda b: (nblk - 1 - b, 0)
    fwd3 = lambda b: (b, 0, 0)
    rev3 = lambda b: (nblk - 1 - b, 0, 0)
    const2 = lambda b: (0, 0)

    in_specs, operands, reverse_flags = [], [], []
    for d in range(ndir):
        rev = (d % 2 == 1)                       # PyTorch: odd directions reversed
        reverse_flags.append(rev)
        w_ih_t, w_hh_t, b_row = dir_params[d]
        in_specs.append(pl.BlockSpec((TT * B, I), rev2 if rev else fwd2))
        operands.append(x2d)
        in_specs.append(pl.BlockSpec((B, H), const2)); operands.append(h0s[d])
        in_specs.append(pl.BlockSpec((B, H), const2)); operands.append(c0s[d])
        in_specs.append(pl.BlockSpec((I, G), const2)); operands.append(w_ih_t)
        in_specs.append(pl.BlockSpec((H, G), const2)); operands.append(w_hh_t)
        if has_bias:
            in_specs.append(pl.BlockSpec((1, G), const2)); operands.append(b_row)

    out_specs, out_shapes = [], []
    for d in range(ndir):
        rev = reverse_flags[d]
        out_specs.append(pl.BlockSpec((TT, B, H), rev3 if rev else fwd3))
        out_shapes.append(jax.ShapeDtypeStruct((T, B, H), x.dtype))
        out_specs.append(pl.BlockSpec((B, H), const2))
        out_shapes.append(jax.ShapeDtypeStruct((B, H), h0s[d].dtype))
        out_specs.append(pl.BlockSpec((B, H), const2))
        out_shapes.append(jax.ShapeDtypeStruct((B, H), c0s[d].dtype))

    scratch = []
    for _ in range(ndir):
        scratch += [pltpu.VMEM((B, H), jnp.float32),        # h carry (f32)
                    pltpu.VMEM((B, H), jnp.float32),        # c carry (f32)
                    pltpu.VMEM((TT * B, G), jnp.float32)]   # gates_x for the block

    kernel = _make_scan_kernel(ndir=ndir, TT=TT, B=B, H=H, has_bias=has_bias,
                               reverse_flags=tuple(reverse_flags),
                               out_dtype=x.dtype)

    outs = pl.pallas_call(
        kernel,
        grid=(nblk,),
        in_specs=in_specs,
        out_specs=tuple(out_specs),
        out_shape=tuple(out_shapes),
        scratch_shapes=scratch,
        compiler_params=pltpu.CompilerParams(
            dimension_semantics=("arbitrary",),   # true sequential dependence
            vmem_limit_bytes=_vmem_limit_bytes()),
    )(*operands)

    ys = [outs[3 * d + 0] for d in range(ndir)]
    hys = [outs[3 * d + 1] for d in range(ndir)]
    cys = [outs[3 * d + 2] for d in range(ndir)]
    return hys, cys, ys


# --------------------------------------------------------------------------
# StackedRNN forward (LSTM configuration).
# --------------------------------------------------------------------------
def fuse_cell_params(params_raw, *, compute_dtype=None):
    """One-time repack: transpose weights (out,in)->(in,out), optionally cast to
    bf16 (MXU-native), and fold b_ih+b_hh into a single f32 row.  Done once at
    init, NOT per forward call."""
    fused = []
    for w_ih, w_hh, b_ih, b_hh in params_raw:
        wd = compute_dtype if compute_dtype is not None else w_ih.dtype
        G = w_ih.shape[0]
        if b_ih is None and b_hh is None:
            b_row = None
        else:
            b = jnp.zeros((G,), jnp.float32)
            if b_ih is not None:
                b = b + b_ih.astype(jnp.float32)
            if b_hh is not None:
                b = b + b_hh.astype(jnp.float32)
            b_row = b.reshape(1, G)
        fused.append((jnp.asarray(w_ih.T, dtype=wd),
                      jnp.asarray(w_hh.T, dtype=wd),
                      b_row))
    return fused


def stacked_rnn_forward(input_, hidden, fused_params, *, num_layers,
                        num_directions, dropout=0.0, training=False,
                        dropout_rng=None, batch_sizes=None):
    """Pallas equivalent of StackedRNN.forward (lstm=True).

    input_:       (T, B, input_size)
    hidden:       (h0, c0), each (num_layers*num_directions, B, H)
    fused_params: list over k = layer*num_directions + direction
    returns:      ((next_h, next_c), output), output (T, B, num_directions*H)
    """
    del batch_sizes  # TODO(synk): variable-length (PackedSequence) unsupported.
    h_all, c_all = hidden
    next_h, next_c = [], []
    x = input_
    for i in range(num_layers):
        ks = [i * num_directions + j for j in range(num_directions)]
        hys, cys, ys = lstm_layer_forward(
            x, [h_all[k] for k in ks], [c_all[k] for k in ks],
            [fused_params[k] for k in ks])
        next_h += hys
        next_c += cys
        # StackedRNNResetPoint: concat direction outputs along the feature dim.
        x = ys[0] if num_directions == 1 else jnp.concatenate(ys, axis=-1)
        if dropout != 0 and i < num_layers - 1 and training:
            # Inter-layer dropout is plain-JAX glue (matches F.dropout semantics).
            dropout_rng, sub = jax.random.split(dropout_rng)
            keep = 1.0 - dropout
            mask = jax.random.bernoulli(sub, keep, x.shape)
            x = jnp.where(mask, x / keep, 0.0).astype(x.dtype)
    return (jnp.stack(next_h, axis=0), jnp.stack(next_c, axis=0)), x


# --------------------------------------------------------------------------
# Parameter init (reset_parameters: U(-stdv, stdv)) and pure-JAX reference.
# --------------------------------------------------------------------------
def init_stacked_lstm_params(key, input_size, hidden_size, num_layers,
                             num_directions, bias=True, dtype=jnp.float32):
    stdv = 1.0 / math.sqrt(hidden_size)
    G = 4 * hidden_size
    params = []
    for i in range(num_layers):
        layer_in = input_size if i == 0 else hidden_size * num_directions
        for _ in range(num_directions):
            key, k1, k2, k3, k4 = jax.random.split(key, 5)
            w_ih = jax.random.uniform(k1, (G, layer_in), dtype, -stdv, stdv)
            w_hh = jax.random.uniform(k2, (G, hidden_size), dtype, -stdv, stdv)
            b_ih = jax.random.uniform(k3, (G,), dtype, -stdv, stdv) if bias else None
            b_hh = jax.random.uniform(k4, (G,), dtype, -stdv, stdv) if bias else None
            params.append((w_ih, w_hh, b_ih, b_hh))
    return params


def _ref_lstm_cell(x, h, c, w_ih, w_hh, b_ih, b_hh):
    hi = jax.lax.Precision.HIGHEST
    gates = jnp.dot(x, w_ih.T, precision=hi) + jnp.dot(h, w_hh.T, precision=hi)
    if b_ih is not None:
        gates = gates + b_ih
    if b_hh is not None:
        gates = gates + b_hh
    H = h.shape[-1]
    i = jax.nn.sigmoid(gates[:, :H])
    f = jax.nn.sigmoid(gates[:, H:2 * H])
    g = jnp.tanh(gates[:, 2 * H:3 * H])
    o = jax.nn.sigmoid(gates[:, 3 * H:])
    c_new = f * c + i * g
    h_new = o * jnp.tanh(c_new)
    return h_new, c_new


def ref_stacked_lstm(input_, hidden, params_raw, *, num_layers, num_directions):
    h_all, c_all = hidden
    next_h, next_c = [], []
    x = input_
    T = x.shape[0]
    for i in range(num_layers):
        outs = []
        for j in range(num_directions):
            k = i * num_directions + j
            w_ih, w_hh, b_ih, b_hh = params_raw[k]
            h, c = h_all[k], c_all[k]
            ys = [None] * T
            steps = range(T - 1, -1, -1) if j % 2 == 1 else range(T)
            for t in steps:
                h, c = _ref_lstm_cell(x[t], h, c, w_ih, w_hh, b_ih, b_hh)
                ys[t] = h
            next_h.append(h)
            next_c.append(c)
            outs.append(jnp.stack(ys, axis=0))
        x = outs[0] if num_directions == 1 else jnp.concatenate(outs, axis=-1)
    return (jnp.stack(next_h, 0), jnp.stack(next_c, 0)), x


if __name__ == "__main__":
    # Small bidirectional 2-layer LSTM stack: T=8, B=2, input=16, hidden=32.
    T, B, input_size, hidden_size = 8, 2, 16, 32
    num_layers, num_directions = 2, 2
    total_layers = num_layers * num_directions

    key = jax.random.PRNGKey(0)
    kp, kx, kh, kc = jax.random.split(key, 4)

    params_raw = init_stacked_lstm_params(
        kp, input_size, hidden_size, num_layers, num_directions, bias=True)

    x = jax.random.normal(kx, (T, B, input_size), jnp.float32)
    h0 = jax.random.normal(kh, (total_layers, B, hidden_size), jnp.float32)
    c0 = jax.random.normal(kc, (total_layers, B, hidden_size), jnp.float32)

    (ref_h, ref_c), ref_out = ref_stacked_lstm(
        x, (h0, c0), params_raw,
        num_layers=num_layers, num_directions=num_directions)

    # Run the Pallas path twice: f32 weights (tight check) and bf16 weights
    # (the production setting from the perf review; looser tolerance).
    for wdtype, tol in ((jnp.float32, 2e-2), (jnp.bfloat16, 1e-1)):
        fused_params = fuse_cell_params(params_raw, compute_dtype=wdtype)
        (next_h, next_c), out = stacked_rnn_forward(
            x, (h0, c0), fused_params,
            num_layers=num_layers, num_directions=num_directions, dropout=0.0)
        (next_h, next_c), out = jax.block_until_ready(((next_h, next_c), out))

        assert out.shape == (T, B, num_directions * hidden_size)
        assert next_h.shape == (total_layers, B, hidden_size)
        assert next_c.shape == (total_layers, B, hidden_size)
        assert jnp.allclose(out, ref_out, atol=tol, rtol=tol), f"output mismatch ({wdtype})"
        assert jnp.allclose(next_h, ref_h, atol=tol, rtol=tol), f"next_h mismatch ({wdtype})"
        assert jnp.allclose(next_c, ref_c, atol=tol, rtol=tol), f"next_c mismatch ({wdtype})"

    print("KERNEL_OK")
</pallas_src>

<mosaic_0001>
module attributes {stable_mosaic.version = 11 : i64} {
  func.func @kernel(%arg0: i32, %arg1: memref<16x16xf32, #tpu.memory_space<vmem>>, %arg2: memref<2x32xf32, #tpu.memory_space<vmem>>, %arg3: memref<2x32xf32, #tpu.memory_space<vmem>>, %arg4: memref<16x128xf32, #tpu.memory_space<vmem>>, %arg5: memref<32x128xf32, #tpu.memory_space<vmem>>, %arg6: memref<1x128xf32, #tpu.memory_space<vmem>>, %arg7: memref<16x16xf32, #tpu.memory_space<vmem>>, %arg8: memref<2x32xf32, #tpu.memory_space<vmem>>, %arg9: memref<2x32xf32, #tpu.memory_space<vmem>>, %arg10: memref<16x128xf32, #tpu.memory_space<vmem>>, %arg11: memref<32x128xf32, #tpu.memory_space<vmem>>, %arg12: memref<1x128xf32, #tpu.memory_space<vmem>>, %arg13: memref<8x2x32xf32, #tpu.memory_space<vmem>>, %arg14: memref<2x32xf32, #tpu.memory_space<vmem>>, %arg15: memref<2x32xf32, #tpu.memory_space<vmem>>, %arg16: memref<8x2x32xf32, #tpu.memory_space<vmem>>, %arg17: memref<2x32xf32, #tpu.memory_space<vmem>>, %arg18: memref<2x32xf32, #tpu.memory_space<vmem>>, %arg19: memref<2x32xf32, #tpu.memory_space<vmem>>, %arg20: memref<2x32xf32, #tpu.memory_space<vmem>>, %arg21: memref<16x128xf32, #tpu.memory_space<vmem>>, %arg22: memref<2x32xf32, #tpu.memory_space<vmem>>, %arg23: memref<2x32xf32, #tpu.memory_space<vmem>>, %arg24: memref<16x128xf32, #tpu.memory_space<vmem>>) attributes {dimension_semantics = [#tpu.dimension_semantics<arbitrary>], iteration_bounds = array<i64: 1>, scalar_prefetch = 0 : i64, scratch_operands = 6 : i64, tpu.core_type = #tpu.core_type<tc>, window_params = [{transform_indices = @transform_0, window_bounds = array<i64: 16, 16>}, {pipeline_mode = #tpu.pipeline_mode<synchronous>, transform_indices = @transform_1, window_bounds = array<i64: 2, 32>}, {pipeline_mode = #tpu.pipeline_mode<synchronous>, transform_indices = @transform_2, window_bounds = array<i64: 2, 32>}, {pipeline_mode = #tpu.pipeline_mode<synchronous>, transform_indices = @transform_3, window_bounds = array<i64: 16, 128>}, {pipeline_mode = #tpu.pipeline_mode<synchronous>, transform_indices = @transform_4, window_bounds = array<i64: 32, 128>}, {pipeline_mode = #tpu.pipeline_mode<synchronous>, transform_indices = @transform_5, window_bounds = array<i64: 1, 128>}, {transform_indices = @transform_6, window_bounds = array<i64: 16, 16>}, {pipeline_mode = #tpu.pipeline_mode<synchronous>, transform_indices = @transform_7, window_bounds = array<i64: 2, 32>}, {pipeline_mode = #tpu.pipeline_mode<synchronous>, transform_indices = @transform_8, window_bounds = array<i64: 2, 32>}, {pipeline_mode = #tpu.pipeline_mode<synchronous>, transform_indices = @transform_9, window_bounds = array<i64: 16, 128>}, {pipeline_mode = #tpu.pipeline_mode<synchronous>, transform_indices = @transform_10, window_bounds = array<i64: 32, 128>}, {pipeline_mode = #tpu.pipeline_mode<synchronous>, transform_indices = @transform_11, window_bounds = array<i64: 1, 128>}, {transform_indices = @transform_12, window_bounds = array<i64: 8, 2, 32>}, {pipeline_mode = #tpu.pipeline_mode<synchronous>, transform_indices = @transform_13, window_bounds = array<i64: 2, 32>}, {pipeline_mode = #tpu.pipeline_mode<synchronous>, transform_indices = @transform_14, window_bounds = array<i64: 2, 32>}, {transform_indices = @transform_15, window_bounds = array<i64: 8, 2, 32>}, {pipeline_mode = #tpu.pipeline_mode<synchronous>, transform_indices = @transform_16, window_bounds = array<i64: 2, 32>}, {pipeline_mode = #tpu.pipeline_mode<synchronous>, transform_indices = @transform_17, window_bounds = array<i64: 2, 32>}]} {
    %c0_i32 = arith.constant 0 : i32
    %0 = arith.cmpi eq, %arg0, %c0_i32 : i32
    %1 = arith.extui %0 : i1 to i32
    %c0_i32_0 = arith.constant 0 : i32
    %2 = arith.cmpi ne, %1, %c0_i32_0 : i32
    scf.if %2 {
      %c0_254 = arith.constant 0 : index
      %c0_255 = arith.constant 0 : index
      %589 = vector.load %arg2[%c0_254, %c0_255] : memref<2x32xf32, #tpu.memory_space<vmem>>, vector<2x32xf32>
      %c0_256 = arith.constant 0 : index
      %c0_257 = arith.constant 0 : index
      %590 = vector.load %arg19[%c0_256, %c0_257] : memref<2x32xf32, #tpu.memory_space<vmem>>, vector<2x32xf32>
      tpu.vector_store %arg19[%c0_256, %c0_257], %589 {strides = array<i32>} : memref<2x32xf32, #tpu.memory_space<vmem>>, vector<2x32xf32>,
      %c0_258 = arith.constant 0 : index
      %c0_259 = arith.constant 0 : index
      %591 = vector.load %arg3[%c0_258, %c0_259] : memref<2x32xf32, #tpu.memory_space<vmem>>, vector<2x32xf32>
      %c0_260 = arith.constant 0 : index
      %c0_261 = arith.constant 0 : index
      %592 = vector.load %arg20[%c0_260, %c0_261] : memref<2x32xf32, #tpu.memory_space<vmem>>, vector<2x32xf32>
      tpu.vector_store %arg20[%c0_260, %c0_261], %591 {strides = array<i32>} : memref<2x32xf32, #tpu.memory_space<vmem>>, vector<2x32xf32>,
      %c0_262 = arith.constant 0 : index
      %c0_263 = arith.constant 0 : index
      %593 = vector.load %arg8[%c0_262, %c0_263] : memref<2x32xf32, #tpu.memory_space<vmem>>, vector<2x32xf32>
      %c0_264 = arith.constant 0 : index
      %c0_265 = arith.constant 0 : index
      %594 = vector.load %arg22[%c0_264, %c0_265] : memref<2x32xf32, #tpu.memory_space<vmem>>, vector<2x32xf32>
      tpu.vector_store %arg22[%c0_264, %c0_265], %593 {strides = array<i32>} : memref<2x32xf32, #tpu.memory_space<vmem>>, vector<2x32xf32>,
      %c0_266 = arith.constant 0 : index
      %c0_267 = arith.constant 0 : index
      %595 = vector.load %arg9[%c0_266, %c0_267] : memref<2x32xf32, #tpu.memory_space<vmem>>, vector<2x32xf32>
      %c0_268 = arith.constant 0 : index
      %c0_269 = arith.constant 0 : index
      %596 = vector.load %arg23[%c0_268, %c0_269] : memref<2x32xf32, #tpu.memory_space<vmem>>, vector<2x32xf32>
      tpu.vector_store %arg23[%c0_268, %c0_269], %595 {strides = array<i32>} : memref<2x32xf32, #tpu.memory_space<vmem>>, vector<2x32xf32>,
    } else {
    }
    %c0 = arith.constant 0 : index
    %c0_1 = arith.constant 0 : index
    %3 = vector.load %arg1[%c0, %c0_1] : memref<16x16xf32, #tpu.memory_space<vmem>>, vector<16x16xf32>
    %c0_2 = arith.constant 0 : index
    %c0_3 = arith.constant 0 : index
    %4 = vector.load %arg4[%c0_2, %c0_3] : memref<16x128xf32, #tpu.memory_space<vmem>>, vector<16x128xf32>
    %cst = arith.constant dense<0.000000e+00> : vector<16x128xf32>
    %5 = tpu.matmul %3, %4, %cst {dimension_numbers = #tpu.dot_dimension_numbers<[1], [0], [0], [1], [0, 0, 1, 1], [], []>} : vector<16x16xf32>, vector<16x128xf32>, vector<16x128xf32> -> vector<16x128xf32>
    %c0_4 = arith.constant 0 : index
    %c0_5 = arith.constant 0 : index
    %6 = vector.load %arg6[%c0_4, %c0_5] : memref<1x128xf32, #tpu.memory_space<vmem>>, vector<1x128xf32>
    %7 = vector.broadcast %6 : vector<1x128xf32> to vector<16x128xf32>
    %8 = arith.addf %5, %7 : vector<16x128xf32>
    %c0_6 = arith.constant 0 : index
    %c0_7 = arith.constant 0 : index
    %9 = vector.load %arg21[%c0_6, %c0_7] : memref<16x128xf32, #tpu.memory_space<vmem>>, vector<16x128xf32>
    tpu.vector_store %arg21[%c0_6, %c0_7], %8 {strides = array<i32>} : memref<16x128xf32, #tpu.memory_space<vmem>>, vector<16x128xf32>,
    %c0_8 = arith.constant 0 : index
    %c0_9 = arith.constant 0 : index
    %10 = vector.load %arg7[%c0_8, %c0_9] : memref<16x16xf32, #tpu.memory_space<vmem>>, vector<16x16xf32>
    %c0_10 = arith.constant 0 : index
    %c0_11 = arith.constant 0 : index
    %11 = vector.load %arg10[%c0_10, %c0_11] : memref<16x128xf32, #tpu.memory_space<vmem>>, vector<16x128xf32>
    %cst_12 = arith.constant dense<0.000000e+00> : vector<16x128xf32>
    %12 = tpu.matmul %10, %11, %cst_12 {dimension_numbers = #tpu.dot_dimension_numbers<[1], [0], [0], [1], [0, 0, 1, 1], [], []>} : vector<16x16xf32>, vector<16x128xf32>, vector<16x128xf32> -> vector<16x128xf32>
    %c0_13 = arith.constant 0 : index
    %c0_14 = arith.constant 0 : index
    %13 = vector.load %arg12[%c0_13, %c0_14] : memref<1x128xf32, #tpu.memory_space<vmem>>, vector<1x128xf32>
    %14 = vector.broadcast %13 : vector<1x128xf32> to vector<16x128xf32>
    %15 = arith.addf %12, %14 : vector<16x128xf32>
    %c0_15 = arith.constant 0 : index
    %c0_16 = arith.constant 0 : index
    %16 = vector.load %arg24[%c0_15, %c0_16] : memref<16x128xf32, #tpu.memory_space<vmem>>, vector<16x128xf32>
    tpu.vector_store %arg24[%c0_15, %c0_16], %15 {strides = array<i32>} : memref<16x128xf32, #tpu.memory_space<vmem>>, vector<16x128xf32>,
    %c0_17 = arith.constant 0 : index
    %c0_18 = arith.constant 0 : index
    %17 = vector.load %arg19[%c0_17, %c0_18] : memref<2x32xf32, #tpu.memory_space<vmem>>, vector<2x32xf32>
    %c0_19 = arith.constant 0 : index
    %c0_20 = arith.constant 0 : index
    %18 = vector.load %arg22[%c0_19, %c0_20] : memref<2x32xf32, #tpu.memory_space<vmem>>, vector<2x32xf32>
    %c0_21 = arith.constant 0 : index
    %c0_22 = arith.constant 0 : index
    %19 = vector.load %arg20[%c0_21, %c0_22] : memref<2x32xf32, #tpu.memory_space<vmem>>, vector<2x32xf32>
    %c0_23 = arith.constant 0 : index
    %c0_24 = arith.constant 0 : index
    %20 = vector.load %arg23[%c0_23, %c0_24] : memref<2x32xf32, #tpu.memory_space<vmem>>, vector<2x32xf32>
    %c0_25 = arith.constant 0 : index
    %c0_26 = arith.constant 0 : index
    %21 = vector.load %arg21[%c0_25, %c0_26] : memref<16x128xf32, #tpu.memory_space<vmem>>, vector<2x128xf32>
    %c0_27 = arith.constant 0 : index
    %c0_28 = arith.constant 0 : index
    %22 = vector.load %arg5[%c0_27, %c0_28] : memref<32x128xf32, #tpu.memory_space<vmem>>, vector<32x128xf32>
    %cst_29 = arith.constant dense<0.000000e+00> : vector<2x128xf32>
    %23 = tpu.matmul %17, %22, %cst_29 {dimension_numbers = #tpu.dot_dimension_numbers<[1], [0], [0], [1], [0, 0, 1, 1], [], []>} : vector<2x32xf32>, vector<32x128xf32>, vector<2x128xf32> -> vector<2x128xf32>
    %24 = arith.addf %21, %23 : vector<2x128xf32>
    %25 = vector.extract_strided_slice %24 {offsets = [0, 0], sizes = [2, 32], strides = [1, 1]} : vector<2x128xf32> to vector<2x32xf32>
    %cst_30 = arith.constant 0.000000e+00 : f32
    %26 = vector.broadcast %cst_30 : f32 to vector<2x32xf32>
    %27 = arith.subf %26, %25 : vector<2x32xf32>
    %28 = math.exp %27 : vector<2x32xf32>
    %cst_31 = arith.constant 1.000000e+00 : f32
    %29 = vector.broadcast %cst_31 : f32 to vector<2x32xf32>
    %30 = arith.addf %29, %28 : vector<2x32xf32>
    %31 = tpu.reciprocal %30 {approx = true} : vector<2x32xf32> -> vector<2x32xf32>
    %32 = vector.extract_strided_slice %24 {offsets = [0, 32], sizes = [2, 32], strides = [1, 1]} : vector<2x128xf32> to vector<2x32xf32>
    %cst_32 = arith.constant 0.000000e+00 : f32
    %33 = vector.broadcast %cst_32 : f32 to vector<2x32xf32>
    %34 = arith.subf %33, %32 : vector<2x32xf32>
    %35 = math.exp %34 : vector<2x32xf32>
    %cst_33 = arith.constant 1.000000e+00 : f32
    %36 = vector.broadcast %cst_33 : f32 to vector<2x32xf32>
    %37 = arith.addf %36, %35 : vector<2x32xf32>
    %38 = tpu.reciprocal %37 {approx = true} : vector<2x32xf32> -> vector<2x32xf32>
    %39 = vector.extract_strided_slice %24 {offsets = [0, 64], sizes = [2, 32], strides = [1, 1]} : vector<2x128xf32> to vector<2x32xf32>
    %40 = math.tanh %39 : vector<2x32xf32>
    %41 = vector.extract_strided_slice %24 {offsets = [0, 96], sizes = [2, 32], strides = [1, 1]} : vector<2x128xf32> to vector<2x32xf32>
    %cst_34 = arith.constant 0.000000e+00 : f32
    %42 = vector.broadcast %cst_34 : f32 to vector<2x32xf32>
    %43 = arith.subf %42, %41 : vector<2x32xf32>
    %44 = math.exp %43 : vector<2x32xf32>
    %cst_35 = arith.constant 1.000000e+00 : f32
    %45 = vector.broadcast %cst_35 : f32 to vector<2x32xf32>
    %46 = arith.addf %45, %44 : vector<2x32xf32>
    %47 = tpu.reciprocal %46 {approx = true} : vector<2x32xf32> -> vector<2x32xf32>
    %48 = arith.mulf %38, %19 : vector<2x32xf32>
    %49 = arith.mulf %31, %40 : vector<2x32xf32>
    %50 = arith.addf %48, %49 : vector<2x32xf32>
    %51 = math.tanh %50 : vector<2x32xf32>
    %52 = arith.mulf %47, %51 : vector<2x32xf32>
    %c0_36 = arith.constant 0 : index
    %c0_37 = arith.constant 0 : index
    %c0_38 = arith.constant 0 : index
    %53 = vector.load %arg13[%c0_36, %c0_37, %c0_38] : memref<8x2x32xf32, #tpu.memory_space<vmem>>, vector<1x2x32xf32>
    %54 = vector.shape_cast %53 : vector<1x2x32xf32> to vector<2x32xf32>
    %55 = vector.shape_cast %52 : vector<2x32xf32> to vector<1x2x32xf32>
    tpu.vector_store %arg13[%c0_36, %c0_37, %c0_38], %55 {strides = array<i32>} : memref<8x2x32xf32, #tpu.memory_space<vmem>>, vector<1x2x32xf32>,
    %c14 = arith.constant 14 : index
    %c0_39 = arith.constant 0 : index
    %56 = vector.load %arg24[%c14, %c0_39] : memref<16x128xf32, #tpu.memory_space<vmem>>, vector<2x128xf32>
    %c0_40 = arith.constant 0 : index
    %c0_41 = arith.constant 0 : index
    %57 = vector.load %arg11[%c0_40, %c0_41] : memref<32x128xf32, #tpu.memory_space<vmem>>, vector<32x128xf32>
    %cst_42 = arith.constant dense<0.000000e+00> : vector<2x128xf32>
    %58 = tpu.matmul %18, %57, %cst_42 {dimension_numbers = #tpu.dot_dimension_numbers<[1], [0], [0], [1], [0, 0, 1, 1], [], []>} : vector<2x32xf32>, vector<32x128xf32>, vector<2x128xf32> -> vector<2x128xf32>
    %59 = arith.addf %56, %58 : vector<2x128xf32>
    %60 = vector.extract_strided_slice %59 {offsets = [0, 0], sizes = [2, 32], strides = [1, 1]} : vector<2x128xf32> to vector<2x32xf32>
    %cst_43 = arith.constant 0.000000e+00 : f32
    %61 = vector.broadcast %cst_43 : f32 to vector<2x32xf32>
    %62 = arith.subf %61, %60 : vector<2x32xf32>
    %63 = math.exp %62 : vector<2x32xf32>
    %cst_44 = arith.constant 1.000000e+00 : f32
    %64 = vector.broadcast %cst_44 : f32 to vector<2x32xf32>
    %65 = arith.addf %64, %63 : vector<2x32xf32>
    %66 = tpu.reciprocal %65 {approx = true} : vector<2x32xf32> -> vector<2x32xf32>
    %67 = vector.extract_strided_slice %59 {offsets = [0, 32], sizes = [2, 32], strides = [1, 1]} : vector<2x128xf32> to vector<2x32xf32>
    %cst_45 = arith.constant 0.000000e+00 : f32
    %68 = vector.broadcast %cst_45 : f32 to vector<2x32xf32>
    %69 = arith.subf %68, %67 : vector<2x32xf32>
    %70 = math.exp %69 : vector<2x32xf32>
    %cst_46 = arith.constant 1.000000e+00 : f32
    %71 = vector.broadcast %cst_46 : f32 to vector<2x32xf32>
    %72 = arith.addf %71, %70 : vector<2x32xf32>
    %73 = tpu.reciprocal %72 {approx = true} : vector<2x32xf32> -> vector<2x32xf32>
    %74 = vector.extract_strided_slice %59 {offsets = [0, 64], sizes = [2, 32], strides = [1, 1]} : vector<2x128xf32> to vector<2x32xf32>
    %75 = math.tanh %74 : vector<2x32xf32>
    %76 = vector.extract_strided_slice %59 {offsets = [0, 96], sizes = [2, 32], strides = [1, 1]} : vector<2x128xf32> to vector<2x32xf32>
    %cst_47 = arith.constant 0.000000e+00 : f32
    %77 = vector.broadcast %cst_47 : f32 to vector<2x32xf32>
    %78 = arith.subf %77, %76 : vector<2x32xf32>
    %79 = math.exp %78 : vector<2x32xf32>
    %cst_48 = arith.constant 1.000000e+00 : f32
    %80 = vector.broadcast %cst_48 : f32 to vector<2x32xf32>
    %81 = arith.addf %80, %79 : vector<2x32xf32>
    %82 = tpu.reciprocal %81 {approx = true} : vector<2x32xf32> -> vector<2x32xf32>
    %83 = arith.mulf %73, %20 : vector<2x32xf32>
    %84 = arith.mulf %66, %75 : vector<2x32xf32>
    %85 = arith.addf %83, %84 : vector<2x32xf32>
    %86 = math.tanh %85 : vector<2x32xf32>
    %87 = arith.mulf %82, %86 : vector<2x32xf32>
    %c7 = arith.constant 7 : index
    %c0_49 = arith.constant 0 : index
    %c0_50 = arith.constant 0 : index
    %88 = vector.load %arg16[%c7, %c0_49, %c0_50] : memref<8x2x32xf32, #tpu.memory_space<vmem>>, vector<1x2x32xf32>
    %89 = vector.shape_cast %88 : vector<1x2x32xf32> to vector<2x32xf32>
    %90 = vector.shape_cast %87 : vector<2x32xf32> to vector<1x2x32xf32>
    tpu.vector_store %arg16[%c7, %c0_49, %c0_50], %90 {strides = array<i32>} : memref<8x2x32xf32, #tpu.memory_space<vmem>>, vector<1x2x32xf32>,
    %c2 = arith.constant 2 : index
    %c0_51 = arith.constant 0 : index
    %91 = vector.load %arg21[%c2, %c0_51] : memref<16x128xf32, #tpu.memory_space<vmem>>, vector<2x128xf32>
    %c0_52 = arith.constant 0 : index
    %c0_53 = arith.constant 0 : index
    %92 = vector.load %arg5[%c0_52, %c0_53] : memref<32x128xf32, #tpu.memory_space<vmem>>, vector<32x128xf32>
    %cst_54 = arith.constant dense<0.000000e+00> : vector<2x128xf32>
    %93 = tpu.matmul %52, %92, %cst_54 {dimension_numbers = #tpu.dot_dimension_numbers<[1], [0], [0], [1], [0, 0, 1, 1], [], []>} : vector<2x32xf32>, vector<32x128xf32>, vector<2x128xf32> -> vector<2x128xf32>
    %94 = arith.addf %91, %93 : vector<2x128xf32>
    %95 = vector.extract_strided_slice %94 {offsets = [0, 0], sizes = [2, 32], strides = [1, 1]} : vector<2x128xf32> to vector<2x32xf32>
    %cst_55 = arith.constant 0.000000e+00 : f32
    %96 = vector.broadcast %cst_55 : f32 to vector<2x32xf32>
    %97 = arith.subf %96, %95 : vector<2x32xf32>
    %98 = math.exp %97 : vector<2x32xf32>
    %cst_56 = arith.constant 1.000000e+00 : f32
    %99 = vector.broadcast %cst_56 : f32 to vector<2x32xf32>
    %100 = arith.addf %99, %98 : vector<2x32xf32>
    %101 = tpu.reciprocal %100 {approx = true} : vector<2x32xf32> -> vector<2x32xf32>
    %102 = vector.extract_strided_slice %94 {offsets = [0, 32], sizes = [2, 32], strides = [1, 1]} : vector<2x128xf32> to vector<2x32xf32>
    %cst_57 = arith.constant 0.000000e+00 : f32
    %103 = vector.broadcast %cst_57 : f32 to vector<2x32xf32>
    %104 = arith.subf %103, %102 : vector<2x32xf32>
    %105 = math.exp %104 : vector<2x32xf32>
    %cst_58 = arith.constant 1.000000e+00 : f32
    %106 = vector.broadcast %cst_58 : f32 to vector<2x32xf32>
    %107 = arith.addf %106, %105 : vector<2x32xf32>
    %108 = tpu.reciprocal %107 {approx = true} : vector<2x32xf32> -> vector<2x32xf32>
    %109 = vector.extract_strided_slice %94 {offsets = [0, 64], sizes = [2, 32], strides = [1, 1]} : vector<2x128xf32> to vector<2x32xf32>
    %110 = math.tanh %109 : vector<2x32xf32>
    %111 = vector.extract_strided_slice %94 {offsets = [0, 96], sizes = [2, 32], strides = [1, 1]} : vector<2x128xf32> to vector<2x32xf32>
    %cst_59 = arith.constant 0.000000e+00 : f32
    %112 = vector.broadcast %cst_59 : f32 to vector<2x32xf32>
    %113 = arith.subf %112, %111 : vector<2x32xf32>
    %114 = math.exp %113 : vector<2x32xf32>
    %cst_60 = arith.constant 1.000000e+00 : f32
    %115 = vector.broadcast %cst_60 : f32 to vector<2x32xf32>
    %116 = arith.addf %115, %114 : vector<2x32xf32>
    %117 = tpu.reciprocal %116 {approx = true} : vector<2x32xf32> -> vector<2x32xf32>
    %118 = arith.mulf %108, %50 : vector<2x32xf32>
    %119 = arith.mulf %101, %110 : vector<2x32xf32>
    %120 = arith.addf %118, %119 : vector<2x32xf32>
    %121 = math.tanh %120 : vector<2x32xf32>
    %122 = arith.mulf %117, %121 : vector<2x32xf32>
    %c1 = arith.constant 1 : index
    %c0_61 = arith.constant 0 : index
    %c0_62 = arith.constant 0 : index
    %123 = vector.load %arg13[%c1, %c0_61, %c0_62] : memref<8x2x32xf32, #tpu.memory_space<vmem>>, vector<1x2x32xf32>
    %124 = vector.shape_cast %123 : vector<1x2x32xf32> to vector<2x32xf32>
    %125 = vector.shape_cast %122 : vector<2x32xf32> to vector<1x2x32xf32>
    tpu.vector_store %arg13[%c1, %c0_61, %c0_62], %125 {strides = array<i32>} : memref<8x2x32xf32, #tpu.memory_space<vmem>>, vector<1x2x32xf32>,
    %c12 = arith.constant 12 : index
    %c0_63 = arith.constant 0 : index
    %126 = vector.load %arg24[%c12, %c0_63] : memref<16x128xf32, #tpu.memory_space<vmem>>, vector<2x128xf32>
    %c0_64 = arith.constant 0 : index
    %c0_65 = arith.constant 0 : index
    %127 = vector.load %arg11[%c0_64, %c0_65] : memref<32x128xf32, #tpu.memory_space<vmem>>, vector<32x128xf32>
    %cst_66 = arith.constant dense<0.000000e+00> : vector<2x128xf32>
    %128 = tpu.matmul %87, %127, %cst_66 {dimension_numbers = #tpu.dot_dimension_numbers<[1], [0], [0], [1], [0, 0, 1, 1], [], []>} : vector<2x32xf32>, vector<32x128xf32>, vector<2x128xf32> -> vector<2x128xf32>
    %129 = arith.addf %126, %128 : vector<2x128xf32>
    %130 = vector.extract_strided_slice %129 {offsets = [0, 0], sizes = [2, 32], strides = [1, 1]} : vector<2x128xf32> to vector<2x32xf32>
    %cst_67 = arith.constant 0.000000e+00 : f32
    %131 = vector.broadcast %cst_67 : f32 to vector<2x32xf32>
    %132 = arith.subf %131, %130 : vector<2x32xf32>
    %133 = math.exp %132 : vector<2x32xf32>
    %cst_68 = arith.constant 1.000000e+00 : f32
    %134 = vector.broadcast %cst_68 : f32 to vector<2x32xf32>
    %135 = arith.addf %134, %133 : vector<2x32xf32>
    %136 = tpu.reciprocal %135 {approx = true} : vector<2x32xf32> -> vector<2x32xf32>
    %137 = vector.extract_strided_slice %129 {offsets = [0, 32], sizes = [2, 32], strides = [1, 1]} : vector<2x128xf32> to vector<2x32xf32>
    %cst_69 = arith.constant 0.000000e+00 : f32
    %138 = vector.broadcast %cst_69 : f32 to vector<2x32xf32>
    %139 = arith.subf %138, %137 : vector<2x32xf32>
    %140 = math.exp %139 : vector<2x32xf32>
    %cst_70 = arith.constant 1.000000e+00 : f32
    %141 = vector.broadcast %cst_70 : f32 to vector<2x32xf32>
    %142 = arith.addf %141, %140 : vector<2x32xf32>
    %143 = tpu.reciprocal %142 {approx = true} : vector<2x32xf32> -> vector<2x32xf32>
    %144 = vector.extract_strided_slice %129 {offsets = [0, 64], sizes = [2, 32], strides = [1, 1]} : vector<2x128xf32> to vector<2x32xf32>
    %145 = math.tanh %144 : vector<2x32xf32>
    %146 = vector.extract_strided_slice %129 {offsets = [0, 96], sizes = [2, 32], strides = [1, 1]} : vector<2x128xf32> to vector<2x32xf32>
    %cst_71 = arith.constant 0.000000e+00 : f32
    %147 = vector.broadcast %cst_71 : f32 to vector<2x32xf32>
    %148 = arith.subf %147, %146 : vector<2x32xf32>
    %149 = math.exp %148 : vector<2x32xf32>
    %cst_72 = arith.constant 1.000000e+00 : f32
    %150 = vector.broadcast %cst_72 : f32 to vector<2x32xf32>
    %151 = arith.addf %150, %149 : vector<2x32xf32>
    %152 = tpu.reciprocal %151 {approx = true} : vector<2x32xf32> -> vector<2x32xf32>
    %153 = arith.mulf %143, %85 : vector<2x32xf32>
    %154 = arith.mulf %136, %145 : vector<2x32xf32>
    %155 = arith.addf %153, %154 : vector<2x32xf32>
    %156 = math.tanh %155 : vector<2x32xf32>
    %157 = arith.mulf %152, %156 : vector<2x32xf32>
    %c6 = arith.constant 6 : index
    %c0_73 = arith.constant 0 : index
    %c0_74 = arith.constant 0 : index
    %158 = vector.load %arg16[%c6, %c0_73, %c0_74] : memref<8x2x32xf32, #tpu.memory_space<vmem>>, vector<1x2x32xf32>
    %159 = vector.shape_cast %158 : vector<1x2x32xf32> to vector<2x32xf32>
    %160 = vector.shape_cast %157 : vector<2x32xf32> to vector<1x2x32xf32>
    tpu.vector_store %arg16[%c6, %c0_73, %c0_74], %160 {strides = array<i32>} : memref<8x2x32xf32, #tpu.memory_space<vmem>>, vector<1x2x32xf32>,
    %c4 = arith.constant 4 : index
    %c0_75 = arith.constant 0 : index
    %161 = vector.load %arg21[%c4, %c0_75] : memref<16x128xf32, #tpu.memory_space<vmem>>, vector<2x128xf32>
    %c0_76 = arith.constant 0 : index
    %c0_77 = arith.constant 0 : index
    %162 = vector.load %arg5[%c0_76, %c0_77] : memref<32x128xf32, #tpu.memory_space<vmem>>, vector<32x128xf32>
    %cst_78 = arith.constant dense<0.000000e+00> : vector<2x128xf32>
    %163 = tpu.matmul %122, %162, %cst_78 {dimension_numbers = #tpu.dot_dimension_numbers<[1], [0], [0], [1], [0, 0, 1, 1], [], []>} : vector<2x32xf32>, vector<32x128xf32>, vector<2x128xf32> -> vector<2x128xf32>
    %164 = arith.addf %161, %163 : vector<2x128xf32>
    %165 = vector.extract_strided_slice %164 {offsets = [0, 0], sizes = [2, 32], strides = [1, 1]} : vector<2x128xf32> to vector<2x32xf32>
    %cst_79 = arith.constant 0.000000e+00 : f32
    %166 = vector.broadcast %cst_79 : f32 to vector<2x32xf32>
    %167 = arith.subf %166, %165 : vector<2x32xf32>
    %168 = math.exp %167 : vector<2x32xf32>
    %cst_80 = arith.constant 1.000000e+00 : f32
    %169 = vector.broadcast %cst_80 : f32 to vector<2x32xf32>
    %170 = arith.addf %169, %168 : vector<2x32xf32>
    %171 = tpu.reciprocal %170 {approx = true} : vector<2x32xf32> -> vector<2x32xf32>
    %172 = vector.extract_strided_slice %164 {offsets = [0, 32], sizes = [2, 32], strides = [1, 1]} : vector<2x128xf32> to vector<2x32xf32>
    %cst_81 = arith.constant 0.000000e+00 : f32
    %173 = vector.broadcast %cst_81 : f32 to vector<2x32xf32>
    %174 = arith.subf %173, %172 : vector<2x32xf32>
    %175 = math.exp %174 : vector<2x32xf32>
    %cst_82 = arith.constant 1.000000e+00 : f32
    %176 = vector.broadcast %cst_82 : f32 to vector<2x32xf32>
    %177 = arith.addf %176, %175 : vector<2x32xf32>
    %178 = tpu.reciprocal %177 {approx = true} : vector<2x32xf32> -> vector<2x32xf32>
    %179 = vector.extract_strided_slice %164 {offsets = [0, 64], sizes = [2, 32], strides = [1, 1]} : vector<2x128xf32> to vector<2x32xf32>
    %180 = math.tanh %179 : vector<2x32xf32>
    %181 = vector.extract_strided_slice %164 {offsets = [0, 96], sizes = [2, 32], strides = [1, 1]} : vector<2x128xf32> to vector<2x32xf32>
    %cst_83 = arith.constant 0.000000e+00 : f32
    %182 = vector.broadcast %cst_83 : f32 to vector<2x32xf32>
    %183 = arith.subf %182, %181 : vector<2x32xf32>
    %184 = math.exp %183 : vector<2x32xf32>
    %cst_84 = arith.constant 1.000000e+00 : f32
    %185 = vector.broadcast %cst_84 : f32 to vector<2x32xf32>
    %186 = arith.addf %185, %184 : vector<2x32xf32>
    %187 = tpu.reciprocal %186 {approx = true} : vector<2x32xf32> -> vector<2x32xf32>
    %188 = arith.mulf %178, %120 : vector<2x32xf32>
    %189 = arith.mulf %171, %180 : vector<2x32xf32>
    %190 = arith.addf %188, %189 : vector<2x32xf32>
    %191 = math.tanh %190 : vector<2x32xf32>
    %192 = arith.mulf %187, %191 : vector<2x32xf32>
    %c2_85 = arith.constant 2 : index
    %c0_86 = arith.constant 0 : index
    %c0_87 = arith.constant 0 : index
    %193 = vector.load %arg13[%c2_85, %c0_86, %c0_87] : memref<8x2x32xf32, #tpu.memory_space<vmem>>, vector<1x2x32xf32>
    %194 = vector.shape_cast %193 : vector<1x2x32xf32> to vector<2x32xf32>
    %195 = vector.shape_cast %192 : vector<2x32xf32> to vector<1x2x32xf32>
    tpu.vector_store %arg13[%c2_85, %c0_86, %c0_87], %195 {strides = array<i32>} : memref<8x2x32xf32, #tpu.memory_space<vmem>>, vector<1x2x32xf32>,
    %c10 = arith.constant 10 : index
    %c0_88 = arith.constant 0 : index
    %196 = vector.load %arg24[%c10, %c0_88] : memref<16x128xf32, #tpu.memory_space<vmem>>, vector<2x128xf32>
    %c0_89 = arith.constant 0 : index
    %c0_90 = arith.constant 0 : index
    %197 = vector.load %arg11[%c0_89, %c0_90] : memref<32x128xf32, #tpu.memory_space<vmem>>, vector<32x128xf32>
    %cst_91 = arith.constant dense<0.000000e+00> : vector<2x128xf32>
    %198 = tpu.matmul %157, %197, %cst_91 {dimension_numbers = #tpu.dot_dimension_numbers<[1], [0], [0], [1], [0, 0, 1, 1], [], []>} : vector<2x32xf32>, vector<32x128xf32>, vector<2x128xf32> -> vector<2x128xf32>
    %199 = arith.addf %196, %198 : vector<2x128xf32>
    %200 = vector.extract_strided_slice %199 {offsets = [0, 0], sizes = [2, 32], strides = [1, 1]} : vector<2x128xf32> to vector<2x32xf32>
    %cst_92 = arith.constant 0.000000e+00 : f32
    %201 = vector.broadcast %cst_92 : f32 to vector<2x32xf32>
    %202 = arith.subf %201, %200 : vector<2x32xf32>
    %203 = math.exp %202 : vector<2x32xf32>
    %cst_93 = arith.constant 1.000000e+00 : f32
    %204 = vector.broadcast %cst_93 : f32 to vector<2x32xf32>
    %205 = arith.addf %204, %203 : vector<2x32xf32>
    %206 = tpu.reciprocal %205 {approx = true} : vector<2x32xf32> -> vector<2x32xf32>
    %207 = vector.extract_strided_slice %199 {offsets = [0, 32], sizes = [2, 32], strides = [1, 1]} : vector<2x128xf32> to vector<2x32xf32>
    %cst_94 = arith.constant 0.000000e+00 : f32
    %208 = vector.broadcast %cst_94 : f32 to vector<2x32xf32>
    %209 = arith.subf %208, %207 : vector<2x32xf32>
    %210 = math.exp %209 : vector<2x32xf32>
    %cst_95 = arith.constant 1.000000e+00 : f32
    %211 = vector.broadcast %cst_95 : f32 to vector<2x32xf32>
    %212 = arith.addf %211, %210 : vector<2x32xf32>
    %213 = tpu.reciprocal %212 {approx = true} : vector<2x32xf32> -> vector<2x32xf32>
    %214 = vector.extract_strided_slice %199 {offsets = [0, 64], sizes = [2, 32], strides = [1, 1]} : vector<2x128xf32> to vector<2x32xf32>
    %215 = math.tanh %214 : vector<2x32xf32>
    %216 = vector.extract_strided_slice %199 {offsets = [0, 96], sizes = [2, 32], strides = [1, 1]} : vector<2x128xf32> to vector<2x32xf32>
    %cst_96 = arith.constant 0.000000e+00 : f32
    %217 = vector.broadcast %cst_96 : f32 to vector<2x32xf32>
    %218 = arith.subf %217, %216 : vector<2x32xf32>
    %219 = math.exp %218 : vector<2x32xf32>
    %cst_97 = arith.constant 1.000000e+00 : f32
    %220 = vector.broadcast %cst_97 : f32 to vector<2x32xf32>
    %221 = arith.addf %220, %219 : vector<2x32xf32>
    %222 = tpu.reciprocal %221 {approx = true} : vector<2x32xf32> -> vector<2x32xf32>
    %223 = arith.mulf %213, %155 : vector<2x32xf32>
    %224 = arith.mulf %206, %215 : vector<2x32xf32>
    %225 = arith.addf %223, %224 : vector<2x32xf32>
    %226 = math.tanh %225 : vector<2x32xf32>
    %227 = arith.mulf %222, %226 : vector<2x32xf32>
    %c5 = arith.constant 5 : index
    %c0_98 = arith.constant 0 : index
    %c0_99 = arith.constant 0 : index
    %228 = vector.load %arg16[%c5, %c0_98, %c0_99] : memref<8x2x32xf32, #tpu.memory_space<vmem>>, vector<1x2x32xf32>
    %229 = vector.shape_cast %228 : vector<1x2x32xf32> to vector<2x32xf32>
    %230 = vector.shape_cast %227 : vector<2x32xf32> to vector<1x2x32xf32>
    tpu.vector_store %arg16[%c5, %c0_98, %c0_99], %230 {strides = array<i32>} : memref<8x2x32xf32, #tpu.memory_space<vmem>>, vector<1x2x32xf32>,
    %c6_100 = arith.constant 6 : index
    %c0_101 = arith.constant 0 : index
    %231 = vector.load %arg21[%c6_100, %c0_101] : memref<16x128xf32, #tpu.memory_space<vmem>>, vector<2x128xf32>
    %c0_102 = arith.constant 0 : index
    %c0_103 = arith.constant 0 : index
    %232 = vector.load %arg5[%c0_102, %c0_103] : memref<32x128xf32, #tpu.memory_space<vmem>>, vector<32x128xf32>
    %cst_104 = arith.constant dense<0.000000e+00> : vector<2x128xf32>
    %233 = tpu.matmul %192, %232, %cst_104 {dimension_numbers = #tpu.dot_dimension_numbers<[1], [0], [0], [1], [0, 0, 1, 1], [], []>} : vector<2x32xf32>, vector<32x128xf32>, vector<2x128xf32> -> vector<2x128xf32>
    %234 = arith.addf %231, %233 : vector<2x128xf32>
    %235 = vector.extract_strided_slice %234 {offsets = [0, 0], sizes = [2, 32], strides = [1, 1]} : vector<2x128xf32> to vector<2x32xf32>
    %cst_105 = arith.constant 0.000000e+00 : f32
    %236 = vector.broadcast %cst_105 : f32 to vector<2x32xf32>
    %237 = arith.subf %236, %235 : vector<2x32xf32>
    %238 = math.exp %237 : vector<2x32xf32>
    %cst_106 = arith.constant 1.000000e+00 : f32
    %239 = vector.broadcast %cst_106 : f32 to vector<2x32xf32>
    %240 = arith.addf %239, %238 : vector<2x32xf32>
    %241 = tpu.reciprocal %240 {approx = true} : vector<2x32xf32> -> vector<2x32xf32>
    %242 = vector.extract_strided_slice %234 {offsets = [0, 32], sizes = [2, 32], strides = [1, 1]} : vector<2x128xf32> to vector<2x32xf32>
    %cst_107 = arith.constant 0.000000e+00 : f32
    %243 = vector.broadcast %cst_107 : f32 to vector<2x32xf32>
    %244 = arith.subf %243, %242 : vector<2x32xf32>
    %245 = math.exp %244 : vector<2x32xf32>
    %cst_108 = arith.constant 1.000000e+00 : f32
    %246 = vector.broadcast %cst_108 : f32 to vector<2x32xf32>
    %247 = arith.addf %246, %245 : vector<2x32xf32>
    %248 = tpu.reciprocal %247 {approx = true} : vector<2x32xf32> -> vector<2x32xf32>
    %249 = vector.extract_strided_slice %234 {offsets = [0, 64], sizes = [2, 32], strides = [1, 1]} : vector<2x128xf32> to vector<2x32xf32>
    %250 = math.tanh %249 : vector<2x32xf32>
    %251 = vector.extract_strided_slice %234 {offsets = [0, 96], sizes = [2, 32], strides = [1, 1]} : vector<2x128xf32> to vector<2x32xf32>
    %cst_109 = arith.constant 0.000000e+00 : f32
    %252 = vector.broadcast %cst_109 : f32 to vector<2x32xf32>
    %253 = arith.subf %252, %251 : vector<2x32xf32>
    %254 = math.exp %253 : vector<2x32xf32>
    %cst_110 = arith.constant 1.000000e+00 : f32
    %255 = vector.broadcast %cst_110 : f32 to vector<2x32xf32>
    %256 = arith.addf %255, %254 : vector<2x32xf32>
    %257 = tpu.reciprocal %256 {approx = true} : vector<2x32xf32> -> vector<2x32xf32>
    %258 = arith.mulf %248, %190 : vector<2x32xf32>
    %259 = arith.mulf %241, %250 : vector<2x32xf32>
    %260 = arith.addf %258, %259 : vector<2x32xf32>
    %261 = math.tanh %260 : vector<2x32xf32>
    %262 = arith.mulf %257, %261 : vector<2x32xf32>
    %c3 = arith.constant 3 : index
    %c0_111 = arith.constant 0 : index
    %c0_112 = arith.constant 0 : index
    %263 = vector.load %arg13[%c3, %c0_111, %c0_112] : memref<8x2x32xf32, #tpu.memory_space<vmem>>, vector<1x2x32xf32>
    %264 = vector.shape_cast %263 : vector<1x2x32xf32> to vector<2x32xf32>
    %265 = vector.shape_cast %262 : vector<2x32xf32> to vector<1x2x32xf32>
    tpu.vector_store %arg13[%c3, %c0_111, %c0_112], %265 {strides = array<i32>} : memref<8x2x32xf32, #tpu.memory_space<vmem>>, vector<1x2x32xf32>,
    %c8 = arith.constant 8 : index
    %c0_113 = arith.constant 0 : index
    %266 = vector.load %arg24[%c8, %c0_113] : memref<16x128xf32, #tpu.memory_space<vmem>>, vector<2x128xf32>
    %c0_114 = arith.constant 0 : index
    %c0_115 = arith.constant 0 : index
    %267 = vector.load %arg11[%c0_114, %c0_115] : memref<32x128xf32, #tpu.memory_space<vmem>>, vector<32x128xf32>
    %cst_116 = arith.constant dense<0.000000e+00> : vector<2x128xf32>
    %268 = tpu.matmul %227, %267, %cst_116 {dimension_numbers = #tpu.dot_dimension_numbers<[1], [0], [0], [1], [0, 0, 1, 1], [], []>} : vector<2x32xf32>, vector<32x128xf32>, vector<2x128xf32> -> vector<2x128xf32>
    %269 = arith.addf %266, %268 : vector<2x128xf32>
    %270 = vector.extract_strided_slice %269 {offsets = [0, 0], sizes = [2, 32], strides = [1, 1]} : vector<2x128xf32> to vector<2x32xf32>
    %cst_117 = arith.constant 0.000000e+00 : f32
    %271 = vector.broadcast %cst_117 : f32 to vector<2x32xf32>
    %272 = arith.subf %271, %270 : vector<2x32xf32>
    %273 = math.exp %272 : vector<2x32xf32>
    %cst_118 = arith.constant 1.000000e+00 : f32
    %274 = vector.broadcast %cst_118 : f32 to vector<2x32xf32>
    %275 = arith.addf %274, %273 : vector<2x32xf32>
    %276 = tpu.reciprocal %275 {approx = true} : vector<2x32xf32> -> vector<2x32xf32>
    %277 = vector.extract_strided_slice %269 {offsets = [0, 32], sizes = [2, 32], strides = [1, 1]} : vector<2x128xf32> to vector<2x32xf32>
    %cst_119 = arith.constant 0.000000e+00 : f32
    %278 = vector.broadcast %cst_119 : f32 to vector<2x32xf32>
    %279 = arith.subf %278, %277 : vector<2x32xf32>
    %280 = math.exp %279 : vector<2x32xf32>
    %cst_120 = arith.constant 1.000000e+00 : f32
    %281 = vector.broadcast %cst_120 : f32 to vector<2x32xf32>
    %282 = arith.addf %281, %280 : vector<2x32xf32>
    %283 = tpu.reciprocal %282 {approx = true} : vector<2x32xf32> -> vector<2x32xf32>
    %284 = vector.extract_strided_slice %269 {offsets = [0, 64], sizes = [2, 32], strides = [1, 1]} : vector<2x128xf32> to vector<2x32xf32>
    %285 = math.tanh %284 : vector<2x32xf32>
    %286 = vector.extract_strided_slice %269 {offsets = [0, 96], sizes = [2, 32], strides = [1, 1]} : vector<2x128xf32> to vector<2x32xf32>
    %cst_121 = arith.constant 0.000000e+00 : f32
    %287 = vector.broadcast %cst_121 : f32 to vector<2x32xf32>
    %288 = arith.subf %287, %286 : vector<2x32xf32>
    %289 = math.exp %288 : vector<2x32xf32>
    %cst_122 = arith.constant 1.000000e+00 : f32
    %290 = vector.broadcast %cst_122 : f32 to vector<2x32xf32>
    %291 = arith.addf %290, %289 : vector<2x32xf32>
    %292 = tpu.reciprocal %291 {approx = true} : vector<2x32xf32> -> vector<2x32xf32>
    %293 = arith.mulf %283, %225 : vector<2x32xf32>
    %294 = arith.mulf %276, %285 : vector<2x32xf32>
    %295 = arith.addf %293, %294 : vector<2x32xf32>
    %296 = math.tanh %295 : vector<2x32xf32>
    %297 = arith.mulf %292, %296 : vector<2x32xf32>
    %c4_123 = arith.constant 4 : index
    %c0_124 = arith.constant 0 : index
    %c0_125 = arith.constant 0 : index
    %298 = vector.load %arg16[%c4_123, %c0_124, %c0_125] : memref<8x2x32xf32, #tpu.memory_space<vmem>>, vector<1x2x32xf32>
    %299 = vector.shape_cast %298 : vector<1x2x32xf32> to vector<2x32xf32>
    %300 = vector.shape_cast %297 : vector<2x32xf32> to vector<1x2x32xf32>
    tpu.vector_store %arg16[%c4_123, %c0_124, %c0_125], %300 {strides = array<i32>} : memref<8x2x32xf32, #tpu.memory_space<vmem>>, vector<1x2x32xf32>,
    %c8_126 = arith.constant 8 : index
    %c0_127 = arith.constant 0 : index
    %301 = vector.load %arg21[%c8_126, %c0_127] : memref<16x128xf32, #tpu.memory_space<vmem>>, vector<2x128xf32>
    %c0_128 = arith.constant 0 : index
    %c0_129 = arith.constant 0 : index
    %302 = vector.load %arg5[%c0_128, %c0_129] : memref<32x128xf32, #tpu.memory_space<vmem>>, vector<32x128xf32>
    %cst_130 = arith.constant dense<0.000000e+00> : vector<2x128xf32>
    %303 = tpu.matmul %262, %302, %cst_130 {dimension_numbers = #tpu.dot_dimension_numbers<[1], [0], [0], [1], [0, 0, 1, 1], [], []>} : vector<2x32xf32>, vector<32x128xf32>, vector<2x128xf32> -> vector<2x128xf32>
    %304 = arith.addf %301, %303 : vector<2x128xf32>
    %305 = vector.extract_strided_slice %304 {offsets = [0, 0], sizes = [2, 32], strides = [1, 1]} : vector<2x128xf32> to vector<2x32xf32>
    %cst_131 = arith.constant 0.000000e+00 : f32
    %306 = vector.broadcast %cst_131 : f32 to vector<2x32xf32>
    %307 = arith.subf %306, %305 : vector<2x32xf32>
    %308 = math.exp %307 : vector<2x32xf32>
    %cst_132 = arith.constant 1.000000e+00 : f32
    %309 = vector.broadcast %cst_132 : f32 to vector<2x32xf32>
    %310 = arith.addf %309, %308 : vector<2x32xf32>
    %311 = tpu.reciprocal %310 {approx = true} : vector<2x32xf32> -> vector<2x32xf32>
    %312 = vector.extract_strided_slice %304 {offsets = [0, 32], sizes = [2, 32], strides = [1, 1]} : vector<2x128xf32> to vector<2x32xf32>
    %cst_133 = arith.constant 0.000000e+00 : f32
    %313 = vector.broadcast %cst_133 : f32 to vector<2x32xf32>
    %314 = arith.subf %313, %312 : vector<2x32xf32>
    %315 = math.exp %314 : vector<2x32xf32>
    %cst_134 = arith.constant 1.000000e+00 : f32
    %316 = vector.broadcast %cst_134 : f32 to vector<2x32xf32>
    %317 = arith.addf %316, %315 : vector<2x32xf32>
    %318 = tpu.reciprocal %317 {approx = true} : vector<2x32xf32> -> vector<2x32xf32>
    %319 = vector.extract_strided_slice %304 {offsets = [0, 64], sizes = [2, 32], strides = [1, 1]} : vector<2x128xf32> to vector<2x32xf32>
    %320 = math.tanh %319 : vector<2x32xf32>
    %321 = vector.extract_strided_slice %304 {offsets = [0, 96], sizes = [2, 32], strides = [1, 1]} : vector<2x128xf32> to vector<2x32xf32>
    %cst_135 = arith.constant 0.000000e+00 : f32
    %322 = vector.broadcast %cst_135 : f32 to vector<2x32xf32>
    %323 = arith.subf %322, %321 : vector<2x32xf32>
    %324 = math.exp %323 : vector<2x32xf32>
    %cst_136 = arith.constant 1.000000e+00 : f32
    %325 = vector.broadcast %cst_136 : f32 to vector<2x32xf32>
    %326 = arith.addf %325, %324 : vector<2x32xf32>
    %327 = tpu.reciprocal %326 {approx = true} : vector<2x32xf32> -> vector<2x32xf32>
    %328 = arith.mulf %318, %260 : vector<2x32xf32>
    %329 = arith.mulf %311, %320 : vector<2x32xf32>
    %330 = arith.addf %328, %329 : vector<2x32xf32>
    %331 = math.tanh %330 : vector<2x32xf32>
    %332 = arith.mulf %327, %331 : vector<2x32xf32>
    %c4_137 = arith.constant 4 : index
    %c0_138 = arith.constant 0 : index
    %c0_139 = arith.constant 0 : index
    %333 = vector.load %arg13[%c4_137, %c0_138, %c0_139] : memref<8x2x32xf32, #tpu.memory_space<vmem>>, vector<1x2x32xf32>
    %334 = vector.shape_cast %333 : vector<1x2x32xf32> to vector<2x32xf32>
    %335 = vector.shape_cast %332 : vector<2x32xf32> to vector<1x2x32xf32>
    tpu.vector_store %arg13[%c4_137, %c0_138, %c0_139], %335 {strides = array<i32>} : memref<8x2x32xf32, #tpu.memory_space<vmem>>, vector<1x2x32xf32>,
    %c6_140 = arith.constant 6 : index
    %c0_141 = arith.constant 0 : index
    %336 = vector.load %arg24[%c6_140, %c0_141] : memref<16x128xf32, #tpu.memory_space<vmem>>, vector<2x128xf32>
    %c0_142 = arith.constant 0 : index
    %c0_143 = arith.constant 0 : index
    %337 = vector.load %arg11[%c0_142, %c0_143] : memref<32x128xf32, #tpu.memory_space<vmem>>, vector<32x128xf32>
    %cst_144 = arith.constant dense<0.000000e+00> : vector<2x128xf32>
    %338 = tpu.matmul %297, %337, %cst_144 {dimension_numbers = #tpu.dot_dimension_numbers<[1], [0], [0], [1], [0, 0, 1, 1], [], []>} : vector<2x32xf32>, vector<32x128xf32>, vector<2x128xf32> -> vector<2x128xf32>
    %339 = arith.addf %336, %338 : vector<2x128xf32>
    %340 = vector.extract_strided_slice %339 {offsets = [0, 0], sizes = [2, 32], strides = [1, 1]} : vector<2x128xf32> to vector<2x32xf32>
    %cst_145 = arith.constant 0.000000e+00 : f32
    %341 = vector.broadcast %cst_145 : f32 to vector<2x32xf32>
    %342 = arith.subf %341, %340 : vector<2x32xf32>
    %343 = math.exp %342 : vector<2x32xf32>
    %cst_146 = arith.constant 1.000000e+00 : f32
    %344 = vector.broadcast %cst_146 : f32 to vector<2x32xf32>
    %345 = arith.addf %344, %343 : vector<2x32xf32>
    %346 = tpu.reciprocal %345 {approx = true} : vector<2x32xf32> -> vector<2x32xf32>
    %347 = vector.extract_strided_slice %339 {offsets = [0, 32], sizes = [2, 32], strides = [1, 1]} : vector<2x128xf32> to vector<2x32xf32>
    %cst_147 = arith.constant 0.000000e+00 : f32
    %348 = vector.broadcast %cst_147 : f32 to vector<2x32xf32>
    %349 = arith.subf %348, %347 : vector<2x32xf32>
    %350 = math.exp %349 : vector<2x32xf32>
    %cst_148 = arith.constant 1.000000e+00 : f32
    %351 = vector.broadcast %cst_148 : f32 to vector<2x32xf32>
    %352 = arith.addf %351, %350 : vector<2x32xf32>
    %353 = tpu.reciprocal %352 {approx = true} : vector<2x32xf32> -> vector<2x32xf32>
    %354 = vector.extract_strided_slice %339 {offsets = [0, 64], sizes = [2, 32], strides = [1, 1]} : vector<2x128xf32> to vector<2x32xf32>
    %355 = math.tanh %354 : vector<2x32xf32>
    %356 = vector.extract_strided_slice %339 {offsets = [0, 96], sizes = [2, 32], strides = [1, 1]} : vector<2x128xf32> to vector<2x32xf32>
    %cst_149 = arith.constant 0.000000e+00 : f32
    %357 = vector.broadcast %cst_149 : f32 to vector<2x32xf32>
    %358 = arith.subf %357, %356 : vector<2x32xf32>
    %359 = math.exp %358 : vector<2x32xf32>
    %cst_150 = arith.constant 1.000000e+00 : f32
    %360 = vector.broadcast %cst_150 : f32 to vector<2x32xf32>
    %361 = arith.addf %360, %359 : vector<2x32xf32>
    %362 = tpu.reciprocal %361 {approx = true} : vector<2x32xf32> -> vector<2x32xf32>
    %363 = arith.mulf %353, %295 : vector<2x32xf32>
    %364 = arith.mulf %346, %355 : vector<2x32xf32>
    %365 = arith.addf %363, %364 : vector<2x32xf32>
    %366 = math.tanh %365 : vector<2x32xf32>
    %367 = arith.mulf %362, %366 : vector<2x32xf32>
    %c3_151 = arith.constant 3 : index
    %c0_152 = arith.constant 0 : index
    %c0_153 = arith.constant 0 : index
    %368 = vector.load %arg16[%c3_151, %c0_152, %c0_153] : memref<8x2x32xf32, #tpu.memory_space<vmem>>, vector<1x2x32xf32>
    %369 = vector.shape_cast %368 : vector<1x2x32xf32> to vector<2x32xf32>
    %370 = vector.shape_cast %367 : vector<2x32xf32> to vector<1x2x32xf32>
    tpu.vector_store %arg16[%c3_151, %c0_152, %c0_153], %370 {strides = array<i32>} : memref<8x2x32xf32, #tpu.memory_space<vmem>>, vector<1x2x32xf32>,
    %c10_154 = arith.constant 10 : index
    %c0_155 = arith.constant 0 : index
    %371 = vector.load %arg21[%c10_154, %c0_155] : memref<16x128xf32, #tpu.memory_space<vmem>>, vector<2x128xf32>
    %c0_156 = arith.constant 0 : index
    %c0_157 = arith.constant 0 : index
    %372 = vector.load %arg5[%c0_156, %c0_157] : memref<32x128xf32, #tpu.memory_space<vmem>>, vector<32x128xf32>
    %cst_158 = arith.constant dense<0.000000e+00> : vector<2x128xf32>
    %373 = tpu.matmul %332, %372, %cst_158 {dimension_numbers = #tpu.dot_dimension_numbers<[1], [0], [0], [1], [0, 0, 1, 1], [], []>} : vector<2x32xf32>, vector<32x128xf32>, vector<2x128xf32> -> vector<2x128xf32>
    %374 = arith.addf %371, %373 : vector<2x128xf32>
    %375 = vector.extract_strided_slice %374 {offsets = [0, 0], sizes = [2, 32], strides = [1, 1]} : vector<2x128xf32> to vector<2x32xf32>
    %cst_159 = arith.constant 0.000000e+00 : f32
    %376 = vector.broadcast %cst_159 : f32 to vector<2x32xf32>
    %377 = arith.subf %376, %375 : vector<2x32xf32>
    %378 = math.exp %377 : vector<2x32xf32>
    %cst_160 = arith.constant 1.000000e+00 : f32
    %379 = vector.broadcast %cst_160 : f32 to vector<2x32xf32>
    %380 = arith.addf %379, %378 : vector<2x32xf32>
    %381 = tpu.reciprocal %380 {approx = true} : vector<2x32xf32> -> vector<2x32xf32>
    %382 = vector.extract_strided_slice %374 {offsets = [0, 32], sizes = [2, 32], strides = [1, 1]} : vector<2x128xf32> to vector<2x32xf32>
    %cst_161 = arith.constant 0.000000e+00 : f32
    %383 = vector.broadcast %cst_161 : f32 to vector<2x32xf32>
    %384 = arith.subf %383, %382 : vector<2x32xf32>
    %385 = math.exp %384 : vector<2x32xf32>
    %cst_162 = arith.constant 1.000000e+00 : f32
    %386 = vector.broadcast %cst_162 : f32 to vector<2x32xf32>
    %387 = arith.addf %386, %385 : vector<2x32xf32>
    %388 = tpu.reciprocal %387 {approx = true} : vector<2x32xf32> -> vector<2x32xf32>
    %389 = vector.extract_strided_slice %374 {offsets = [0, 64], sizes = [2, 32], strides = [1, 1]} : vector<2x128xf32> to vector<2x32xf32>
    %390 = math.tanh %389 : vector<2x32xf32>
    %391 = vector.extract_strided_slice %374 {offsets = [0, 96], sizes = [2, 32], strides = [1, 1]} : vector<2x128xf32> to vector<2x32xf32>
    %cst_163 = arith.constant 0.000000e+00 : f32
    %392 = vector.broadcast %cst_163 : f32 to vector<2x32xf32>
    %393 = arith.subf %392, %391 : vector<2x32xf32>
    %394 = math.exp %393 : vector<2x32xf32>
    %cst_164 = arith.constant 1.000000e+00 : f32
    %395 = vector.broadcast %cst_164 : f32 to vector<2x32xf32>
    %396 = arith.addf %395, %394 : vector<2x32xf32>
    %397 = tpu.reciprocal %396 {approx = true} : vector<2x32xf32> -> vector<2x32xf32>
    %398 = arith.mulf %388, %330 : vector<2x32xf32>
    %399 = arith.mulf %381, %390 : vector<2x32xf32>
    %400 = arith.addf %398, %399 : vector<2x32xf32>
    %401 = math.tanh %400 : vector<2x32xf32>
    %402 = arith.mulf %397, %401 : vector<2x32xf32>
    %c5_165 = arith.constant 5 : index
    %c0_166 = arith.constant 0 : index
    %c0_167 = arith.constant 0 : index
    %403 = vector.load %arg13[%c5_165, %c0_166, %c0_167] : memref<8x2x32xf32, #tpu.memory_space<vmem>>, vector<1x2x32xf32>
    %404 = vector.shape_cast %403 : vector<1x2x32xf32> to vector<2x32xf32>
    %405 = vector.shape_cast %402 : vector<2x32xf32> to vector<1x2x32xf32>
    tpu.vector_store %arg13[%c5_165, %c0_166, %c0_167], %405 {strides = array<i32>} : memref<8x2x32xf32, #tpu.memory_space<vmem>>, vector<1x2x32xf32>,
    %c4_168 = arith.constant 4 : index
    %c0_169 = arith.constant 0 : index
    %406 = vector.load %arg24[%c4_168, %c0_169] : memref<16x128xf32, #tpu.memory_space<vmem>>, vector<2x128xf32>
    %c0_170 = arith.constant 0 : index
    %c0_171 = arith.constant 0 : index
    %407 = vector.load %arg11[%c0_170, %c0_171] : memref<32x128xf32, #tpu.memory_space<vmem>>, vector<32x128xf32>
    %cst_172 = arith.constant dense<0.000000e+00> : vector<2x128xf32>
    %408 = tpu.matmul %367, %407, %cst_172 {dimension_numbers = #tpu.dot_dimension_numbers<[1], [0], [0], [1], [0, 0, 1, 1], [], []>} : vector<2x32xf32>, vector<32x128xf32>, vector<2x128xf32> -> vector<2x128xf32>
    %409 = arith.addf %406, %408 : vector<2x128xf32>
    %410 = vector.extract_strided_slice %409 {offsets = [0, 0], sizes = [2, 32], strides = [1, 1]} : vector<2x128xf32> to vector<2x32xf32>
    %cst_173 = arith.constant 0.000000e+00 : f32
    %411 = vector.broadcast %cst_173 : f32 to vector<2x32xf32>
    %412 = arith.subf %411, %410 : vector<2x32xf32>
    %413 = math.exp %412 : vector<2x32xf32>
    %cst_174 = arith.constant 1.000000e+00 : f32
    %414 = vector.broadcast %cst_174 : f32 to vector<2x32xf32>
    %415 = arith.addf %414, %413 : vector<2x32xf32>
    %416 = tpu.reciprocal %415 {approx = true} : vector<2x32xf32> -> vector<2x32xf32>
    %417 = vector.extract_strided_slice %409 {offsets = [0, 32], sizes = [2, 32], strides = [1, 1]} : vector<2x128xf32> to vector<2x32xf32>
    %cst_175 = arith.constant 0.000000e+00 : f32
    %418 = vector.broadcast %cst_175 : f32 to vector<2x32xf32>
    %419 = arith.subf %418, %417 : vector<2x32xf32>
    %420 = math.exp %419 : vector<2x32xf32>
    %cst_176 = arith.constant 1.000000e+00 : f32
    %421 = vector.broadcast %cst_176 : f32 to vector<2x32xf32>
    %422 = arith.addf %421, %420 : vector<2x32xf32>
    %423 = tpu.reciprocal %422 {approx = true} : vector<2x32xf32> -> vector<2x32xf32>
    %424 = vector.extract_strided_slice %409 {offsets = [0, 64], sizes = [2, 32], strides = [1, 1]} : vector<2x128xf32> to vector<2x32xf32>
    %425 = math.tanh %424 : vector<2x32xf32>
    %426 = vector.extract_strided_slice %409 {offsets = [0, 96], sizes = [2, 32], strides = [1, 1]} : vector<2x128xf32> to vector<2x32xf32>
    %cst_177 = arith.constant 0.000000e+00 : f32
    %427 = vector.broadcast %cst_177 : f32 to vector<2x32xf32>
    %428 = arith.subf %427, %426 : vector<2x32xf32>
    %429 = math.exp %428 : vector<2x32xf32>
    %cst_178 = arith.constant 1.000000e+00 : f32
    %430 = vector.broadcast %cst_178 : f32 to vector<2x32xf32>
    %431 = arith.addf %430, %429 : vector<2x32xf32>
    %432 = tpu.reciprocal %431 {approx = true} : vector<2x32xf32> -> vector<2x32xf32>
    %433 = arith.mulf %423, %365 : vector<2x32xf32>
    %434 = arith.mulf %416, %425 : vector<2x32xf32>
    %435 = arith.addf %433, %434 : vector<2x32xf32>
    %436 = math.tanh %435 : vector<2x32xf32>
    %437 = arith.mulf %432, %436 : vector<2x32xf32>
    %c2_179 = arith.constant 2 : index
    %c0_180 = arith.constant 0 : index
    %c0_181 = arith.constant 0 : index
    %438 = vector.load %arg16[%c2_179, %c0_180, %c0_181] : memref<8x2x32xf32, #tpu.memory_space<vmem>>, vector<1x2x32xf32>
    %439 = vector.shape_cast %438 : vector<1x2x32xf32> to vector<2x32xf32>
    %440 = vector.shape_cast %437 : vector<2x32xf32> to vector<1x2x32xf32>
    tpu.vector_store %arg16[%c2_179, %c0_180, %c0_181], %440 {strides = array<i32>} : memref<8x2x32xf32, #tpu.memory_space<vmem>>, vector<1x2x32xf32>,
    %c12_182 = arith.constant 12 : index
    %c0_183 = arith.constant 0 : index
    %441 = vector.load %arg21[%c12_182, %c0_183] : memref<16x128xf32, #tpu.memory_space<vmem>>, vector<2x128xf32>
    %c0_184 = arith.constant 0 : index
    %c0_185 = arith.constant 0 : index
    %442 = vector.load %arg5[%c0_184, %c0_185] : memref<32x128xf32, #tpu.memory_space<vmem>>, vector<32x128xf32>
    %cst_186 = arith.constant dense<0.000000e+00> : vector<2x128xf32>
    %443 = tpu.matmul %402, %442, %cst_186 {dimension_numbers = #tpu.dot_dimension_numbers<[1], [0], [0], [1], [0, 0, 1, 1], [], []>} : vector<2x32xf32>, vector<32x128xf32>, vector<2x128xf32> -> vector<2x128xf32>
    %444 = arith.addf %441, %443 : vector<2x128xf32>
    %445 = vector.extract_strided_slice %444 {offsets = [0, 0], sizes = [2, 32], strides = [1, 1]} : vector<2x128xf32> to vector<2x32xf32>
    %cst_187 = arith.constant 0.000000e+00 : f32
    %446 = vector.broadcast %cst_187 : f32 to vector<2x32xf32>
    %447 = arith.subf %446, %445 : vector<2x32xf32>
    %448 = math.exp %447 : vector<2x32xf32>
    %cst_188 = arith.constant 1.000000e+00 : f32
    %449 = vector.broadcast %cst_188 : f32 to vector<2x32xf32>
    %450 = arith.addf %449, %448 : vector<2x32xf32>
    %451 = tpu.reciprocal %450 {approx = true} : vector<2x32xf32> -> vector<2x32xf32>
    %452 = vector.extract_strided_slice %444 {offsets = [0, 32], sizes = [2, 32], strides = [1, 1]} : vector<2x128xf32> to vector<2x32xf32>
    %cst_189 = arith.constant 0.000000e+00 : f32
    %453 = vector.broadcast %cst_189 : f32 to vector<2x32xf32>
    %454 = arith.subf %453, %452 : vector<2x32xf32>
    %455 = math.exp %454 : vector<2x32xf32>
    %cst_190 = arith.constant 1.000000e+00 : f32
    %456 = vector.broadcast %cst_190 : f32 to vector<2x32xf32>
    %457 = arith.addf %456, %455 : vector<2x32xf32>
    %458 = tpu.reciprocal %457 {approx = true} : vector<2x32xf32> -> vector<2x32xf32>
    %459 = vector.extract_strided_slice %444 {offsets = [0, 64], sizes = [2, 32], strides = [1, 1]} : vector<2x128xf32> to vector<2x32xf32>
    %460 = math.tanh %459 : vector<2x32xf32>
    %461 = vector.extract_strided_slice %444 {offsets = [0, 96], sizes = [2, 32], strides = [1, 1]} : vector<2x128xf32> to vector<2x32xf32>
    %cst_191 = arith.constant 0.000000e+00 : f32
    %462 = vector.broadcast %cst_191 : f32 to vector<2x32xf32>
    %463 = arith.subf %462, %461 : vector<2x32xf32>
    %464 = math.exp %463 : vector<2x32xf32>
    %cst_192 = arith.constant 1.000000e+00 : f32
    %465 = vector.broadcast %cst_192 : f32 to vector<2x32xf32>
    %466 = arith.addf %465, %464 : vector<2x32xf32>
    %467 = tpu.reciprocal %466 {approx = true} : vector<2x32xf32> -> vector<2x32xf32>
    %468 = arith.mulf %458, %400 : vector<2x32xf32>
    %469 = arith.mulf %451, %460 : vector<2x32xf32>
    %470 = arith.addf %468, %469 : vector<2x32xf32>
    %471 = math.tanh %470 : vector<2x32xf32>
    %472 = arith.mulf %467, %471 : vector<2x32xf32>
    %c6_193 = arith.constant 6 : index
    %c0_194 = arith.constant 0 : index
    %c0_195 = arith.constant 0 : index
    %473 = vector.load %arg13[%c6_193, %c0_194, %c0_195] : memref<8x2x32xf32, #tpu.memory_space<vmem>>, vector<1x2x32xf32>
    %474 = vector.shape_cast %473 : vector<1x2x32xf32> to vector<2x32xf32>
    %475 = vector.shape_cast %472 : vector<2x32xf32> to vector<1x2x32xf32>
    tpu.vector_store %arg13[%c6_193, %c0_194, %c0_195], %475 {strides = array<i32>} : memref<8x2x32xf32, #tpu.memory_space<vmem>>, vector<1x2x32xf32>,
    %c2_196 = arith.constant 2 : index
    %c0_197 = arith.constant 0 : index
    %476 = vector.load %arg24[%c2_196, %c0_197] : memref<16x128xf32, #tpu.memory_space<vmem>>, vector<2x128xf32>
    %c0_198 = arith.constant 0 : index
    %c0_199 = arith.constant 0 : index
    %477 = vector.load %arg11[%c0_198, %c0_199] : memref<32x128xf32, #tpu.memory_space<vmem>>, vector<32x128xf32>
    %cst_200 = arith.constant dense<0.000000e+00> : vector<2x128xf32>
    %478 = tpu.matmul %437, %477, %cst_200 {dimension_numbers = #tpu.dot_dimension_numbers<[1], [0], [0], [1], [0, 0, 1, 1], [], []>} : vector<2x32xf32>, vector<32x128xf32>, vector<2x128xf32> -> vector<2x128xf32>
    %479 = arith.addf %476, %478 : vector<2x128xf32>
    %480 = vector.extract_strided_slice %479 {offsets = [0, 0], sizes = [2, 32], strides = [1, 1]} : vector<2x128xf32> to vector<2x32xf32>
    %cst_201 = arith.constant 0.000000e+00 : f32
    %481 = vector.broadcast %cst_201 : f32 to vector<2x32xf32>
    %482 = arith.subf %481, %480 : vector<2x32xf32>
    %483 = math.exp %482 : vector<2x32xf32>
    %cst_202 = arith.constant 1.000000e+00 : f32
    %484 = vector.broadcast %cst_202 : f32 to vector<2x32xf32>
    %485 = arith.addf %484, %483 : vector<2x32xf32>
    %486 = tpu.reciprocal %485 {approx = true} : vector<2x32xf32> -> vector<2x32xf32>
    %487 = vector.extract_strided_slice %479 {offsets = [0, 32], sizes = [2, 32], strides = [1, 1]} : vector<2x128xf32> to vector<2x32xf32>
    %cst_203 = arith.constant 0.000000e+00 : f32
    %488 = vector.broadcast %cst_203 : f32 to vector<2x32xf32>
    %489 = arith.subf %488, %487 : vector<2x32xf32>
    %490 = math.exp %489 : vector<2x32xf32>
    %cst_204 = arith.constant 1.000000e+00 : f32
    %491 = vector.broadcast %cst_204 : f32 to vector<2x32xf32>
    %492 = arith.addf %491, %490 : vector<2x32xf32>
    %493 = tpu.reciprocal %492 {approx = true} : vector<2x32xf32> -> vector<2x32xf32>
    %494 = vector.extract_strided_slice %479 {offsets = [0, 64], sizes = [2, 32], strides = [1, 1]} : vector<2x128xf32> to vector<2x32xf32>
    %495 = math.tanh %494 : vector<2x32xf32>
    %496 = vector.extract_strided_slice %479 {offsets = [0, 96], sizes = [2, 32], strides = [1, 1]} : vector<2x128xf32> to vector<2x32xf32>
    %cst_205 = arith.constant 0.000000e+00 : f32
    %497 = vector.broadcast %cst_205 : f32 to vector<2x32xf32>
    %498 = arith.subf %497, %496 : vector<2x32xf32>
    %499 = math.exp %498 : vector<2x32xf32>
    %cst_206 = arith.constant 1.000000e+00 : f32
    %500 = vector.broadcast %cst_206 : f32 to vector<2x32xf32>
    %501 = arith.addf %500, %499 : vector<2x32xf32>
    %502 = tpu.reciprocal %501 {approx = true} : vector<2x32xf32> -> vector<2x32xf32>
    %503 = arith.mulf %493, %435 : vector<2x32xf32>
    %504 = arith.mulf %486, %495 : vector<2x32xf32>
    %505 = arith.addf %503, %504 : vector<2x32xf32>
    %506 = math.tanh %505 : vector<2x32xf32>
    %507 = arith.mulf %502, %506 : vector<2x32xf32>
    %c1_207 = arith.constant 1 : index
    %c0_208 = arith.constant 0 : index
    %c0_209 = arith.constant 0 : index
    %508 = vector.load %arg16[%c1_207, %c0_208, %c0_209] : memref<8x2x32xf32, #tpu.memory_space<vmem>>, vector<1x2x32xf32>
    %509 = vector.shape_cast %508 : vector<1x2x32xf32> to vector<2x32xf32>
    %510 = vector.shape_cast %507 : vector<2x32xf32> to vector<1x2x32xf32>
    tpu.vector_store %arg16[%c1_207, %c0_208, %c0_209], %510 {strides = array<i32>} : memref<8x2x32xf32, #tpu.memory_space<vmem>>, vector<1x2x32xf32>,
    %c14_210 = arith.constant 14 : index
    %c0_211 = arith.constant 0 : index
    %511 = vector.load %arg21[%c14_210, %c0_211] : memref<16x128xf32, #tpu.memory_space<vmem>>, vector<2x128xf32>
    %c0_212 = arith.constant 0 : index
    %c0_213 = arith.constant 0 : index
    %512 = vector.load %arg5[%c0_212, %c0_213] : memref<32x128xf32, #tpu.memory_space<vmem>>, vector<32x128xf32>
    %cst_214 = arith.constant dense<0.000000e+00> : vector<2x128xf32>
    %513 = tpu.matmul %472, %512, %cst_214 {dimension_numbers = #tpu.dot_dimension_numbers<[1], [0], [0], [1], [0, 0, 1, 1], [], []>} : vector<2x32xf32>, vector<32x128xf32>, vector<2x128xf32> -> vector<2x128xf32>
    %514 = arith.addf %511, %513 : vector<2x128xf32>
    %515 = vector.extract_strided_slice %514 {offsets = [0, 0], sizes = [2, 32], strides = [1, 1]} : vector<2x128xf32> to vector<2x32xf32>
    %cst_215 = arith.constant 0.000000e+00 : f32
    %516 = vector.broadcast %cst_215 : f32 to vector<2x32xf32>
    %517 = arith.subf %516, %515 : vector<2x32xf32>
    %518 = math.exp %517 : vector<2x32xf32>
    %cst_216 = arith.constant 1.000000e+00 : f32
    %519 = vector.broadcast %cst_216 : f32 to vector<2x32xf32>
    %520 = arith.addf %519, %518 : vector<2x32xf32>
    %521 = tpu.reciprocal %520 {approx = true} : vector<2x32xf32> -> vector<2x32xf32>
    %522 = vector.extract_strided_slice %514 {offsets = [0, 32], sizes = [2, 32], strides = [1, 1]} : vector<2x128xf32> to vector<2x32xf32>
    %cst_217 = arith.constant 0.000000e+00 : f32
    %523 = vector.broadcast %cst_217 : f32 to vector<2x32xf32>
    %524 = arith.subf %523, %522 : vector<2x32xf32>
    %525 = math.exp %524 : vector<2x32xf32>
    %cst_218 = arith.constant 1.000000e+00 : f32
    %526 = vector.broadcast %cst_218 : f32 to vector<2x32xf32>
    %527 = arith.addf %526, %525 : vector<2x32xf32>
    %528 = tpu.reciprocal %527 {approx = true} : vector<2x32xf32> -> vector<2x32xf32>
    %529 = vector.extract_strided_slice %514 {offsets = [0, 64], sizes = [2, 32], strides = [1, 1]} : vector<2x128xf32> to vector<2x32xf32>
    %530 = math.tanh %529 : vector<2x32xf32>
    %531 = vector.extract_strided_slice %514 {offsets = [0, 96], sizes = [2, 32], strides = [1, 1]} : vector<2x128xf32> to vector<2x32xf32>
    %cst_219 = arith.constant 0.000000e+00 : f32
    %532 = vector.broadcast %cst_219 : f32 to vector<2x32xf32>
    %533 = arith.subf %532, %531 : vector<2x32xf32>
    %534 = math.exp %533 : vector<2x32xf32>
    %cst_220 = arith.constant 1.000000e+00 : f32
    %535 = vector.broadcast %cst_220 : f32 to vector<2x32xf32>
    %536 = arith.addf %535, %534 : vector<2x32xf32>
    %537 = tpu.reciprocal %536 {approx = true} : vector<2x32xf32> -> vector<2x32xf32>
    %538 = arith.mulf %528, %470 : vector<2x32xf32>
    %539 = arith.mulf %521, %530 : vector<2x32xf32>
    %540 = arith.addf %538, %539 : vector<2x32xf32>
    %541 = math.tanh %540 : vector<2x32xf32>
    %542 = arith.mulf %537, %541 : vector<2x32xf32>
    %c7_221 = arith.constant 7 : index
    %c0_222 = arith.constant 0 : index
    %c0_223 = arith.constant 0 : index
    %543 = vector.load %arg13[%c7_221, %c0_222, %c0_223] : memref<8x2x32xf32, #tpu.memory_space<vmem>>, vector<1x2x32xf32>
    %544 = vector.shape_cast %543 : vector<1x2x32xf32> to vector<2x32xf32>
    %545 = vector.shape_cast %542 : vector<2x32xf32> to vector<1x2x32xf32>
    tpu.vector_store %arg13[%c7_221, %c0_222, %c0_223], %545 {strides = array<i32>} : memref<8x2x32xf32, #tpu.memory_space<vmem>>, vector<1x2x32xf32>,
    %c0_224 = arith.constant 0 : index
    %c0_225 = arith.constant 0 : index
    %546 = vector.load %arg24[%c0_224, %c0_225] : memref<16x128xf32, #tpu.memory_space<vmem>>, vector<2x128xf32>
    %c0_226 = arith.constant 0 : index
    %c0_227 = arith.constant 0 : index
    %547 = vector.load %arg11[%c0_226, %c0_227] : memref<32x128xf32, #tpu.memory_space<vmem>>, vector<32x128xf32>
    %cst_228 = arith.constant dense<0.000000e+00> : vector<2x128xf32>
    %548 = tpu.matmul %507, %547, %cst_228 {dimension_numbers = #tpu.dot_dimension_numbers<[1], [0], [0], [1], [0, 0, 1, 1], [], []>} : vector<2x32xf32>, vector<32x128xf32>, vector<2x128xf32> -> vector<2x128xf32>
    %549 = arith.addf %546, %548 : vector<2x128xf32>
    %550 = vector.extract_strided_slice %549 {offsets = [0, 0], sizes = [2, 32], strides = [1, 1]} : vector<2x128xf32> to vector<2x32xf32>
    %cst_229 = arith.constant 0.000000e+00 : f32
    %551 = vector.broadcast %cst_229 : f32 to vector<2x32xf32>
    %552 = arith.subf %551, %550 : vector<2x32xf32>
    %553 = math.exp %552 : vector<2x32xf32>
    %cst_230 = arith.constant 1.000000e+00 : f32
    %554 = vector.broadcast %cst_230 : f32 to vector<2x32xf32>
    %555 = arith.addf %554, %553 : vector<2x32xf32>
    %556 = tpu.reciprocal %555 {approx = true} : vector<2x32xf32> -> vector<2x32xf32>
    %557 = vector.extract_strided_slice %549 {offsets = [0, 32], sizes = [2, 32], strides = [1, 1]} : vector<2x128xf32> to vector<2x32xf32>
    %cst_231 = arith.constant 0.000000e+00 : f32
    %558 = vector.broadcast %cst_231 : f32 to vector<2x32xf32>
    %559 = arith.subf %558, %557 : vector<2x32xf32>
    %560 = math.exp %559 : vector<2x32xf32>
    %cst_232 = arith.constant 1.000000e+00 : f32
    %561 = vector.broadcast %cst_232 : f32 to vector<2x32xf32>
    %562 = arith.addf %561, %560 : vector<2x32xf32>
    %563 = tpu.reciprocal %562 {approx = true} : vector<2x32xf32> -> vector<2x32xf32>
    %564 = vector.extract_strided_slice %549 {offsets = [0, 64], sizes = [2, 32], strides = [1, 1]} : vector<2x128xf32> to vector<2x32xf32>
    %565 = math.tanh %564 : vector<2x32xf32>
    %566 = vector.extract_strided_slice %549 {offsets = [0, 96], sizes = [2, 32], strides = [1, 1]} : vector<2x128xf32> to vector<2x32xf32>
    %cst_233 = arith.constant 0.000000e+00 : f32
    %567 = vector.broadcast %cst_233 : f32 to vector<2x32xf32>
    %568 = arith.subf %567, %566 : vector<2x32xf32>
    %569 = math.exp %568 : vector<2x32xf32>
    %cst_234 = arith.constant 1.000000e+00 : f32
    %570 = vector.broadcast %cst_234 : f32 to vector<2x32xf32>
    %571 = arith.addf %570, %569 : vector<2x32xf32>
    %572 = tpu.reciprocal %571 {approx = true} : vector<2x32xf32> -> vector<2x32xf32>
    %573 = arith.mulf %563, %505 : vector<2x32xf32>
    %574 = arith.mulf %556, %565 : vector<2x32xf32>
    %575 = arith.addf %573, %574 : vector<2x32xf32>
    %576 = math.tanh %575 : vector<2x32xf32>
    %577 = arith.mulf %572, %576 : vector<2x32xf32>
    %c0_235 = arith.constant 0 : index
    %c0_236 = arith.constant 0 : index
    %c0_237 = arith.constant 0 : index
    %578 = vector.load %arg16[%c0_235, %c0_236, %c0_237] : memref<8x2x32xf32, #tpu.memory_space<vmem>>, vector<1x2x32xf32>
    %579 = vector.shape_cast %578 : vector<1x2x32xf32> to vector<2x32xf32>
    %580 = vector.shape_cast %577 : vector<2x32xf32> to vector<1x2x32xf32>
    tpu.vector_store %arg16[%c0_235, %c0_236, %c0_237], %580 {strides = array<i32>} : memref<8x2x32xf32, #tpu.memory_space<vmem>>, vector<1x2x32xf32>,
    %c0_238 = arith.constant 0 : index
    %c0_239 = arith.constant 0 : index
    %581 = vector.load %arg19[%c0_238, %c0_239] : memref<2x32xf32, #tpu.memory_space<vmem>>, vector<2x32xf32>
    tpu.vector_store %arg19[%c0_238, %c0_239], %542 {strides = array<i32>} : memref<2x32xf32, #tpu.memory_space<vmem>>, vector<2x32xf32>,
    %c0_240 = arith.constant 0 : index
    %c0_241 = arith.constant 0 : index
    %582 = vector.load %arg20[%c0_240, %c0_241] : memref<2x32xf32, #tpu.memory_space<vmem>>, vector<2x32xf32>
    tpu.vector_store %arg20[%c0_240, %c0_241], %540 {strides = array<i32>} : memref<2x32xf32, #tpu.memory_space<vmem>>, vector<2x32xf32>,
    %c0_242 = arith.constant 0 : index
    %c0_243 = arith.constant 0 : index
    %583 = vector.load %arg14[%c0_242, %c0_243] : memref<2x32xf32, #tpu.memory_space<vmem>>, vector<2x32xf32>
    tpu.vector_store %arg14[%c0_242, %c0_243], %542 {strides = array<i32>} : memref<2x32xf32, #tpu.memory_space<vmem>>, vector<2x32xf32>,
    %c0_244 = arith.constant 0 : index
    %c0_245 = arith.constant 0 : index
    %584 = vector.load %arg15[%c0_244, %c0_245] : memref<2x32xf32, #tpu.memory_space<vmem>>, vector<2x32xf32>
    tpu.vector_store %arg15[%c0_244, %c0_245], %540 {strides = array<i32>} : memref<2x32xf32, #tpu.memory_space<vmem>>, vector<2x32xf32>,
    %c0_246 = arith.constant 0 : index
    %c0_247 = arith.constant 0 : index
    %585 = vector.load %arg22[%c0_246, %c0_247] : memref<2x32xf32, #tpu.memory_space<vmem>>, vector<2x32xf32>
    tpu.vector_store %arg22[%c0_246, %c0_247], %577 {strides = array<i32>} : memref<2x32xf32, #tpu.memory_space<vmem>>, vector<2x32xf32>,
    %c0_248 = arith.constant 0 : index
    %c0_249 = arith.constant 0 : index
    %586 = vector.load %arg23[%c0_248, %c0_249] : memref<2x32xf32, #tpu.memory_space<vmem>>, vector<2x32xf32>
    tpu.vector_store %arg23[%c0_248, %c0_249], %575 {strides = array<i32>} : memref<2x32xf32, #tpu.memory_space<vmem>>, vector<2x32xf32>,
    %c0_250 = arith.constant 0 : index
    %c0_251 = arith.constant 0 : index
    %587 = vector.load %arg17[%c0_250, %c0_251] : memref<2x32xf32, #tpu.memory_space<vmem>>, vector<2x32xf32>
    tpu.vector_store %arg17[%c0_250, %c0_251], %577 {strides = array<i32>} : memref<2x32xf32, #tpu.memory_space<vmem>>, vector<2x32xf32>,
    %c0_252 = arith.constant 0 : index
    %c0_253 = arith.constant 0 : index
    %588 = vector.load %arg18[%c0_252, %c0_253] : memref<2x32xf32, #tpu.memory_space<vmem>>, vector<2x32xf32>
    tpu.vector_store %arg18[%c0_252, %c0_253], %575 {strides = array<i32>} : memref<2x32xf32, #tpu.memory_space<vmem>>, vector<2x32xf32>,
    return
  }
  func.func @transform_0(%arg0: i32) -> (i32, i32) {
    %c0_i32 = arith.constant 0 : i32
    %c0_i32_0 = arith.constant 0 : i32
    return %arg0, %c0_i32 : i32, i32
  }
  func.func @transform_1(%arg0: i32) -> (i32, i32) {
    %c0_i32 = arith.constant 0 : i32
    %c0_i32_0 = arith.constant 0 : i32
    %c0_i32_1 = arith.constant 0 : i32
    return %c0_i32, %c0_i32_0 : i32, i32
  }
  func.func @transform_2(%arg0: i32) -> (i32, i32) {
    %c0_i32 = arith.constant 0 : i32
    %c0_i32_0 = arith.constant 0 : i32
    %c0_i32_1 = arith.constant 0 : i32
    return %c0_i32, %c0_i32_0 : i32, i32
  }
  func.func @transform_3(%arg0: i32) -> (i32, i32) {
    %c0_i32 = arith.constant 0 : i32
    %c0_i32_0 = arith.constant 0 : i32
    %c0_i32_1 = arith.constant 0 : i32
    return %c0_i32, %c0_i32_0 : i32, i32
  }
  func.func @transform_4(%arg0: i32) -> (i32, i32) {
    %c0_i32 = arith.constant 0 : i32
    %c0_i32_0 = arith.constant 0 : i32
    %c0_i32_1 = arith.constant 0 : i32
    return %c0_i32, %c0_i32_0 : i32, i32
  }
  func.func @transform_5(%arg0: i32) -> (i32, i32) {
    %c0_i32 = arith.constant 0 : i32
    %c0_i32_0 = arith.constant 0 : i32
    %c0_i32_1 = arith.constant 0 : i32
    return %c0_i32, %c0_i32_0 : i32, i32
  }
  func.func @transform_6(%arg0: i32) -> (i32, i32) {
    %c0_i32 = arith.constant 0 : i32
    %0 = arith.subi %c0_i32, %arg0 : i32
    %c0_i32_0 = arith.constant 0 : i32
    %c0_i32_1 = arith.constant 0 : i32
    return %0, %c0_i32_0 : i32, i32
  }
  func.func @transform_7(%arg0: i32) -> (i32, i32) {
    %c0_i32 = arith.constant 0 : i32
    %c0_i32_0 = arith.constant 0 : i32
    %c0_i32_1 = arith.constant 0 : i32
    return %c0_i32, %c0_i32_0 : i32, i32
  }
  func.func @transform_8(%arg0: i32) -> (i32, i32) {
    %c0_i32 = arith.constant 0 : i32
    %c0_i32_0 = arith.constant 0 : i32
    %c0_i32_1 = arith.constant 0 : i32
    return %c0_i32, %c0_i32_0 : i32, i32
  }
  func.func @transform_9(%arg0: i32) -> (i32, i32) {
    %c0_i32 = arith.constant 0 : i32
    %c0_i32_0 = arith.constant 0 : i32
    %c0_i32_1 = arith.constant 0 : i32
    return %c0_i32, %c0_i32_0 : i32, i32
  }
  func.func @transform_10(%arg0: i32) -> (i32, i32) {
    %c0_i32 = arith.constant 0 : i32
    %c0_i32_0 = arith.constant 0 : i32
    %c0_i32_1 = arith.constant 0 : i32
    return %c0_i32, %c0_i32_0 : i32, i32
  }
  func.func @transform_11(%arg0: i32) -> (i32, i32) {
    %c0_i32 = arith.constant 0 : i32
    %c0_i32_0 = arith.constant 0 : i32
    %c0_i32_1 = arith.constant 0 : i32
    return %c0_i32, %c0_i32_0 : i32, i32
  }
  func.func @transform_12(%arg0: i32) -> (i32, i32, i32) {
    %c0_i32 = arith.constant 0 : i32
    %c0_i32_0 = arith.constant 0 : i32
    %c0_i32_1 = arith.constant 0 : i32
    return %arg0, %c0_i32, %c0_i32_0 : i32, i32, i32
  }
  func.func @transform_13(%arg0: i32) -> (i32, i32) {
    %c0_i32 = arith.constant 0 : i32
    %c0_i32_0 = arith.constant 0 : i32
    %c0_i32_1 = arith.constant 0 : i32
    return %c0_i32, %c0_i32_0 : i32, i32
  }
  func.func @transform_14(%arg0: i32) -> (i32, i32) {
    %c0_i32 = arith.constant 0 : i32
    %c0_i32_0 = arith.constant 0 : i32
    %c0_i32_1 = arith.constant 0 : i32
    return %c0_i32, %c0_i32_0 : i32, i32
  }
  func.func @transform_15(%arg0: i32) -> (i32, i32, i32) {
    %c0_i32 = arith.constant 0 : i32
    %0 = arith.subi %c0_i32, %arg0 : i32
    %c0_i32_0 = arith.constant 0 : i32
    %c0_i32_1 = arith.constant 0 : i32
    %c0_i32_2 = arith.constant 0 : i32
    return %0, %c0_i32_0, %c0_i32_1 : i32, i32, i32
  }
  func.func @transform_16(%arg0: i32) -> (i32, i32) {
    %c0_i32 = arith.constant 0 : i32
    %c0_i32_0 = arith.constant 0 : i32
    %c0_i32_1 = arith.constant 0 : i32
    return %c0_i32, %c0_i32_0 : i32, i32
  }
  func.func @transform_17(%arg0: i32) -> (i32, i32) {
    %c0_i32 = arith.constant 0 : i32
    %c0_i32_0 = arith.constant 0 : i32
    %c0_i32_1 = arith.constant 0 : i32
    return %c0_i32, %c0_i32_0 : i32, i32
  }
}

</mosaic_0001>

<llo_original>
// kernel: tpu_custom_call.1
$region0: #{tpu_custom_call.1}
  #allocation0 [shape = 'u32[]', space=smem, size = 0x4, offset = 0x4, fixed_abs, tag = 'smem constant byte address 0x4 - core index']
  #allocation1 [shape = 'u32[144,128]{1,0:T(1,128)}', space=vmem, size = 0x12000, scoped, tag = 'internal scratch']
  #allocation2 [shape = 'f32[2,32]{1,0:T(2,128)}', space=vmem, size = 0x400, scoped, tag = 'scratch operand']
  #allocation3 [shape = 'f32[2,32]{1,0:T(2,128)}', space=vmem, size = 0x400, scoped, tag = 'scratch operand']
  #allocation4 [shape = 'f32[16,128]{1,0:T(8,128)}', space=vmem, size = 0x2000, scoped, tag = 'scratch operand']
  #allocation5 [shape = 'f32[2,32]{1,0:T(2,128)}', space=vmem, size = 0x400, scoped, tag = 'scratch operand']
  #allocation6 [shape = 'f32[2,32]{1,0:T(2,128)}', space=vmem, size = 0x400, scoped, tag = 'scratch operand']
  #allocation7 [shape = 'f32[16,128]{1,0:T(8,128)}', space=vmem, size = 0x2000, scoped, tag = 'scratch operand']
  %s0 = inlined_call_operand.hbm [shape: f32[16,16], index: 0, kind: input, shape index: {}]
  %s1 = inlined_call_operand.hbm [shape: f32[2,32], index: 1, kind: input, shape index: {}]
  %s2 = inlined_call_operand.hbm [shape: f32[2,32], index: 2, kind: input, shape index: {}]
  %s3 = inlined_call_operand.hbm [shape: f32[16,128], index: 3, kind: input, shape index: {}]
  %s4 = inlined_call_operand.hbm [shape: f32[32,128], index: 4, kind: input, shape index: {}]
  %s5 = inlined_call_operand.hbm [shape: f32[1,128], index: 5, kind: input, shape index: {}]
  %s6 = inlined_call_operand.hbm [shape: f32[16,16], index: 6, kind: input, shape index: {}]
  %s7 = inlined_call_operand.hbm [shape: f32[2,32], index: 7, kind: input, shape index: {}]
  %s8 = inlined_call_operand.hbm [shape: f32[2,32], index: 8, kind: input, shape index: {}]
  %s9 = inlined_call_operand.vmem [shape: f32[16,128], index: 9, kind: input, shape index: {}]
  %s10 = inlined_call_operand.hbm [shape: f32[32,128], index: 10, kind: input, shape index: {}]
  %s11 = inlined_call_operand.vmem [shape: f32[1,128], index: 11, kind: input, shape index: {}]
  %s12 = inlined_call_operand.hbm [shape: f32[8,2,32], index: 12, kind: output, shape index: {0}]
  %s13 = inlined_call_operand.hbm [shape: f32[2,32], index: 13, kind: output, shape index: {1}]
  %s14 = inlined_call_operand.hbm [shape: f32[2,32], index: 14, kind: output, shape index: {2}]
  %s15 = inlined_call_operand.hbm [shape: f32[8,2,32], index: 15, kind: output, shape index: {3}]
  %s16 = inlined_call_operand.hbm [shape: f32[2,32], index: 16, kind: output, shape index: {4}]
  %s17 = inlined_call_operand.hbm [shape: f32[2,32], index: 17, kind: output, shape index: {5}]
  %18 = xla_tuple %s12, %s13, %s14, %s15, %s16, %s17
  %s19 = sld [smem:[#allocation0]]
  $region142: #{tpu_custom_call.1} parent=0
    _
  %s21 = ssub.s32 1, %s19
  %s22 = scalar_select 0, %s21, %s19
  $region1: #{tpu_custom_call.1} parent=0
    #allocation8 [shape = 'u8[8192]{0}', space=vmem, size = 0x2000, scoped, tag = 'input window, operand 0, single buffered']
    #allocation9 [shape = 's32[1]{0}', space=sflag, size = 0x4, scoped, tag = 'scoped memory for tpu_custom_call.1']
    #allocation10 [shape = 's32[1]{0}', space=sflag, size = 0x4, scoped, tag = 'scoped memory for tpu_custom_call.1']
    #allocation11 [shape = 'u8[1024]{0}', space=vmem, size = 0x400, scoped, tag = 'input window, operand 1, single buffered']
    #allocation12 [shape = 's32[1]{0}', space=sflag, size = 0x4, scoped, tag = 'scoped memory for tpu_custom_call.1']
    #allocation13 [shape = 'u8[1024]{0}', space=vmem, size = 0x400, scoped, tag = 'input window, operand 2, single buffered']
    #allocation14 [shape = 'u8[8192]{0}', space=vmem, size = 0x2000, scoped, tag = 'input window, operand 3, single buffered']
    #allocation15 [shape = 's32[1]{0}', space=sflag, size = 0x4, scoped, tag = 'scoped memory for tpu_custom_call.1']
    #allocation16 [shape = 'u8[16384]{0}', space=vmem, size = 0x4000, scoped, tag = 'input window, operand 4, single buffered']
    #allocation17 [shape = 'u8[512]{0}', space=vmem, size = 0x400, scoped, tag = 'input window, operand 5, single buffered']
    #allocation18 [shape = 's32[1]{0}', space=sflag, size = 0x4, scoped, tag = 'scoped memory for tpu_custom_call.1']
    #allocation19 [shape = 'u8[8192]{0}', space=vmem, size = 0x2000, scoped, tag = 'input window, operand 6, single buffered']
    #allocation20 [shape = 'u8[1024]{0}', space=vmem, size = 0x400, scoped, tag = 'input window, operand 7, single buffered']
    #allocation21 [shape = 's32[1]{0}', space=sflag, size = 0x4, scoped, tag = 'scoped memory for tpu_custom_call.1']
    #allocation22 [shape = 'u8[1024]{0}', space=vmem, size = 0x400, scoped, tag = 'input window, operand 8, single buffered']
    #allocation23 [shape = 'u8[16384]{0}', space=vmem, size = 0x4000, scoped, tag = 'input window, operand 10, single buffered']
    #allocation24 [shape = 's32[1]{0}', space=sflag, size = 0x4, scoped, tag = 'scoped memory for tpu_custom_call.1']
    #allocation25 [shape = 'u8[8192]{0}', space=vmem, size = 0x2000, scoped, tag = 'output window, operand 0, single buffered']
    #allocation26 [shape = 'u8[1024]{0}', space=vmem, size = 0x400, scoped, tag = 'output window, operand 1, single buffered']
    #allocation27 [shape = 's32[1]{0}', space=sflag, size = 0x4, scoped, tag = 'scoped memory for tpu_custom_call.1']
    #allocation28 [shape = 'u8[1024]{0}', space=vmem, size = 0x400, scoped, tag = 'output window, operand 2, single buffered']
    #allocation29 [shape = 'u8[8192]{0}', space=vmem, size = 0x2000, scoped, tag = 'output window, operand 3, single buffered']
    #allocation30 [shape = 's32[1]{0}', space=sflag, size = 0x4, scoped, tag = 'scoped memory for tpu_custom_call.1']
    #allocation31 [shape = 'u8[1024]{0}', space=vmem, size = 0x400, scoped, tag = 'output window, operand 4, single buffered']
    #allocation32 [shape = 'u8[1024]{0}', space=vmem, size = 0x400, scoped, tag = 'output window, operand 5, single buffered']
    #allocation33 [shape = 's32[1]{0}', space=sflag, size = 0x4, scoped, tag = 'scoped memory for tpu_custom_call.1']
    %23 = vsyncpa [#allocation9], 0
    %24 = vsyncpa [#allocation12], 0
    %25 = vsyncpa [#allocation15], 0
    %26 = vsyncpa [#allocation18], 0
    %27 = vsyncpa [#allocation21], 0
    %28 = vsyncpa [#allocation24], 0
    %29 = vsyncpa [#allocation10], 0
    %30 = vsyncpa [#allocation27], 0
    %31 = vsyncpa [#allocation30], 0
    %32 = vsyncpa [#allocation33], 0
    // Predicated region
    $region2: #{tpu_custom_call.1} parent=1 // pred_check
      _
    $region3: #{tpu_custom_call.1} parent=1 // pred_check_branch
      %34 = sbr.rel (0) target = $region5
    $region4: #{tpu_custom_call.1} parent=1 // pred_region
      %s36 = ssub.s32 256, 256
      %37 = vsyncadd [#allocation9], %s36
      %s38 = sshll.u32 [#allocation8], 4
      %s39 = int_to_ptr.vmem [resolvable:$true] %s38
      %44 = dma.hbm_to_vmem [thread:$0]  %s0, 256, %s39, [#allocation9], 128, 128, 8
    $region5: #{tpu_custom_call.1} parent=1 // pred_fallthru
      _
    // Predicated region
    $region6: #{tpu_custom_call.1} parent=1 // pred_check
      _
    $region7: #{tpu_custom_call.1} parent=1 // pred_check_branch
      %46 = sbr.rel (0) target = $region9
    $region8: #{tpu_custom_call.1} parent=1 // pred_region
      %s48 = ssub.s32 32, 32
      %49 = vsyncadd [#allocation12], %s48
      %s51 = sshll.u32 [#allocation11], 4
      %s52 = int_to_ptr.vmem [resolvable:$true] %s51
      %54 = dma.hbm_to_vmem [thread:$0]  %s1, 32, %s52, [#allocation12]
    $region9: #{tpu_custom_call.1} parent=1 // pred_fallthru
      _
    // Predicated region
    $region10: #{tpu_custom_call.1} parent=1 // pred_check
      _
    $region11: #{tpu_custom_call.1} parent=1 // pred_check_branch
      %56 = sbr.rel (0) target = $region13
    $region12: #{tpu_custom_call.1} parent=1 // pred_region
      %s58 = ssub.s32 32, 32
      %59 = vsyncadd [#allocation12], %s58
      %s61 = sshll.u32 [#allocation13], 4
      %s62 = int_to_ptr.vmem [resolvable:$true] %s61
      %64 = dma.hbm_to_vmem [thread:$0]  %s2, 32, %s62, [#allocation12]
    $region13: #{tpu_custom_call.1} parent=1 // pred_fallthru
      _
    // Predicated region
    $region14: #{tpu_custom_call.1} parent=1 // pred_check
      _
    $region15: #{tpu_custom_call.1} parent=1 // pred_check_branch
      %66 = sbr.rel (0) target = $region17
    $region16: #{tpu_custom_call.1} parent=1 // pred_region
      %s68 = ssub.s32 256, 256
      %69 = vsyncadd [#allocation15], %s68
      %s70 = sshll.u32 [#allocation14], 4
      %s71 = int_to_ptr.vmem [resolvable:$true] %s70
      %76 = dma.hbm_to_vmem [thread:$0]  %s3, 256, %s71, [#allocation15], 128, 128, 8
    $region17: #{tpu_custom_call.1} parent=1 // pred_fallthru
      _
    // Predicated region
    $region18: #{tpu_custom_call.1} parent=1 // pred_check
      _
    $region19: #{tpu_custom_call.1} parent=1 // pred_check_branch
      %78 = sbr.rel (0) target = $region21
    $region20: #{tpu_custom_call.1} parent=1 // pred_region
      %s80 = ssub.s32 512, 512
      %81 = vsyncadd [#allocation15], %s80
      %s82 = sshll.u32 [#allocation16], 4
      %s83 = int_to_ptr.vmem [resolvable:$true] %s82
      %88 = dma.hbm_to_vmem [thread:$0]  %s4, 512, %s83, [#allocation15], 128, 128, 8
    $region21: #{tpu_custom_call.1} parent=1 // pred_fallthru
      _
    // Predicated region
    $region22: #{tpu_custom_call.1} parent=1 // pred_check
      _
    $region23: #{tpu_custom_call.1} parent=1 // pred_check_branch
      %90 = sbr.rel (0) target = $region25
    $region24: #{tpu_custom_call.1} parent=1 // pred_region
      %s92 = ssub.s32 16, 16
      %93 = vsyncadd [#allocation18], %s92
      %s95 = sshll.u32 [#allocation17], 4
      %s96 = int_to_ptr.vmem [resolvable:$true] %s95
      %98 = dma.hbm_to_vmem [thread:$0]  %s5, 16, %s96, [#allocation18]
    $region25: #{tpu_custom_call.1} parent=1 // pred_fallthru
      _
    // Predicated region
    $region26: #{tpu_custom_call.1} parent=1 // pred_check
      _
    $region27: #{tpu_custom_call.1} parent=1 // pred_check_branch
      %100 = sbr.rel (0) target = $region29
    $region28: #{tpu_custom_call.1} parent=1 // pred_region
      %s101 = ssub.s32 0, 0
      %s102 = smul.u32 2, %s101
      %s104 = ssub.s32 256, 256
      %105 = vsyncadd [#allocation18], %s104
      %s106 = smul.addr %s102, 128
      %s107 = scalar_lea.hbm %s6, %s106
      %s108 = sshll.u32 [#allocation19], 4
      %s109 = int_to_ptr.vmem [resolvable:$true] %s108
      %114 = dma.hbm_to_vmem [thread:$0]  %s107, 256, %s109, [#allocation18], 128, 128, 8
    $region29: #{tpu_custom_call.1} parent=1 // pred_fallthru
      _
    // Predicated region
    $region30: #{tpu_custom_call.1} parent=1 // pred_check
      _
    $region31: #{tpu_custom_call.1} parent=1 // pred_check_branch
      %116 = sbr.rel (0) target = $region33
    $region32: #{tpu_custom_call.1} parent=1 // pred_region
      %s118 = ssub.s32 32, 32
      %119 = vsyncadd [#allocation21], %s118
      %s121 = sshll.u32 [#allocation20], 4
      %s122 = int_to_ptr.vmem [resolvable:$true] %s121
      %124 = dma.hbm_to_vmem [thread:$0]  %s7, 32, %s122, [#allocation21]
    $region33: #{tpu_custom_call.1} parent=1 // pred_fallthru
      _
    // Predicated region
    $region34: #{tpu_custom_call.1} parent=1 // pred_check
      _
    $region35: #{tpu_custom_call.1} parent=1 // pred_check_branch
      %126 = sbr.rel (0) target = $region37
    $region36: #{tpu_custom_call.1} parent=1 // pred_region
      %s128 = ssub.s32 32, 32
      %129 = vsyncadd [#allocation21], %s128
      %s131 = sshll.u32 [#allocation22], 4
      %s132 = int_to_ptr.vmem [resolvable:$true] %s131
      %134 = dma.hbm_to_vmem [thread:$0]  %s8, 32, %s132, [#allocation21]
    $region37: #{tpu_custom_call.1} parent=1 // pred_fallthru
      _
    // Predicated region
    $region38: #{tpu_custom_call.1} parent=1 // pred_check
      _
    $region39: #{tpu_custom_call.1} parent=1 // pred_check_branch
      %136 = sbr.rel (0) target = $region41
    $region40: #{tpu_custom_call.1} parent=1 // pred_region
      _
    $region41: #{tpu_custom_call.1} parent=1 // pred_fallthru
      _
    // Predicated region
    $region42: #{tpu_custom_call.1} parent=1 // pred_check
      _
    $region43: #{tpu_custom_call.1} parent=1 // pred_check_branch
      %138 = sbr.rel (0) target = $region45
    $region44: #{tpu_custom_call.1} parent=1 // pred_region
      %s140 = ssub.s32 512, 512
      %141 = vsyncadd [#allocation24], %s140
      %s142 = sshll.u32 [#allocation23], 4
      %s143 = int_to_ptr.vmem [resolvable:$true] %s142
      %148 = dma.hbm_to_vmem [thread:$0]  %s10, 512, %s143, [#allocation24], 128, 128, 8
    $region45: #{tpu_custom_call.1} parent=1 // pred_fallthru
      _
    // Predicated region
    $region46: #{tpu_custom_call.1} parent=1 // pred_check
      _
    $region47: #{tpu_custom_call.1} parent=1 // pred_check_branch
      %150 = sbr.rel (0) target = $region49
    $region48: #{tpu_custom_call.1} parent=1 // pred_region
      _
    $region49: #{tpu_custom_call.1} parent=1 // pred_fallthru
      _
    // Predicated region
    $region50: #{tpu_custom_call.1} parent=1 // pred_check
      _
    $region51: #{tpu_custom_call.1} parent=1 // pred_check_branch
      %152 = sbr.rel (0) target = $region53
    $region52: #{tpu_custom_call.1} parent=1 // pred_region
      %153 = dma.done [#allocation9], 256
    $region53: #{tpu_custom_call.1} parent=1 // pred_fallthru
      _
    // Predicated region
    $region54: #{tpu_custom_call.1} parent=1 // pred_check
      _
    $region55: #{tpu_custom_call.1} parent=1 // pred_check_branch
      %155 = sbr.rel (0) target = $region57
    $region56: #{tpu_custom_call.1} parent=1 // pred_region
      %156 = dma.done [#allocation12], 32
    $region57: #{tpu_custom_call.1} parent=1 // pred_fallthru
      _
    // Predicated region
    $region58: #{tpu_custom_call.1} parent=1 // pred_check
      _
    $region59: #{tpu_custom_call.1} parent=1 // pred_check_branch
      %158 = sbr.rel (0) target = $region61
    $region60: #{tpu_custom_call.1} parent=1 // pred_region
      %159 = dma.done [#allocation12], 32
    $region61: #{tpu_custom_call.1} parent=1 // pred_fallthru
      _
    // Predicated region
    $region62: #{tpu_custom_call.1} parent=1 // pred_check
      _
    $region63: #{tpu_custom_call.1} parent=1 // pred_check_branch
      %161 = sbr.rel (0) target = $region65
    $region64: #{tpu_custom_call.1} parent=1 // pred_region
      %162 = dma.done [#allocation15], 256
    $region65: #{tpu_custom_call.1} parent=1 // pred_fallthru
      _
    // Predicated region
    $region66: #{tpu_custom_call.1} parent=1 // pred_check
      _
    $region67: #{tpu_custom_call.1} parent=1 // pred_check_branch
      %164 = sbr.rel (0) target = $region69
    $region68: #{tpu_custom_call.1} parent=1 // pred_region
      %165 = dma.done [#allocation15], 512
    $region69: #{tpu_custom_call.1} parent=1 // pred_fallthru
      _
    // Predicated region
    $region70: #{tpu_custom_call.1} parent=1 // pred_check
      _
    $region71: #{tpu_custom_call.1} parent=1 // pred_check_branch
      %167 = sbr.rel (0) target = $region73
    $region72: #{tpu_custom_call.1} parent=1 // pred_region
      %168 = dma.done [#allocation18], 16
    $region73: #{tpu_custom_call.1} parent=1 // pred_fallthru
      _
    // Predicated region
    $region74: #{tpu_custom_call.1} parent=1 // pred_check
      _
    $region75: #{tpu_custom_call.1} parent=1 // pred_check_branch
      %170 = sbr.rel (0) target = $region77
    $region76: #{tpu_custom_call.1} parent=1 // pred_region
      %171 = dma.done [#allocation18], 256
    $region77: #{tpu_custom_call.1} parent=1 // pred_fallthru
      _
    // Predicated region
    $region78: #{tpu_custom_call.1} parent=1 // pred_check
      _
    $region79: #{tpu_custom_call.1} parent=1 // pred_check_branch
      %173 = sbr.rel (0) target = $region81
    $region80: #{tpu_custom_call.1} parent=1 // pred_region
      %174 = dma.done [#allocation21], 32
    $region81: #{tpu_custom_call.1} parent=1 // pred_fallthru
      _
    // Predicated region
    $region82: #{tpu_custom_call.1} parent=1 // pred_check
      _
    $region83: #{tpu_custom_call.1} parent=1 // pred_check_branch
      %176 = sbr.rel (0) target = $region85
    $region84: #{tpu_custom_call.1} parent=1 // pred_region
      %177 = dma.done [#allocation21], 32
    $region85: #{tpu_custom_call.1} parent=1 // pred_fallthru
      _
    // Predicated region
    $region86: #{tpu_custom_call.1} parent=1 // pred_check
      _
    $region87: #{tpu_custom_call.1} parent=1 // pred_check_branch
      %179 = sbr.rel (0) target = $region89
    $region88: #{tpu_custom_call.1} parent=1 // pred_region
      %180 = dma.done [#allocation24], 512
    $region89: #{tpu_custom_call.1} parent=1 // pred_fallthru
      _
    %s181 = ssub.s32 0, 0
    %s182 = smul.u32 2, %s181
    %s183 = ssub.s32 0, 0
    %s184 = smul.u32 8, %s183
    %p185 = scmp.eq.s32.totalorder 0, 0
    // Predicated region
    $region90: #{tpu_custom_call.1} parent=1 // pred_check
      %p186 = pneg %p185
    $region91: #{tpu_custom_call.1} parent=1 // pred_check_branch
      %188 = sbr.rel (%p186) target = $region93
    $region92: #{tpu_custom_call.1} parent=1 // pred_region
      %v189 = vld [vmem:[#allocation11] sm:$0x3]
      %vm190 = vcmask 254976
      %191 = vst.msk [vmem:[#allocation2] sm:$0x3] %vm190, %v189
      %v192 = vld [vmem:[#allocation13] sm:$0x3]
      %193 = vst.msk [vmem:[#allocation3] sm:$0x3] %vm190, %v192
      %v194 = vld [vmem:[#allocation20] sm:$0x3]
      %195 = vst.msk [vmem:[#allocation5] sm:$0x3] %vm190, %v194
      %v196 = vld [vmem:[#allocation22] sm:$0x3]
      %197 = vst.msk [vmem:[#allocation6] sm:$0x3] %vm190, %v196
    $region93: #{tpu_custom_call.1} parent=1 // pred_fallthru
      _
    %v198 = vld [vmem:[#allocation8] sm:$0xff]
    %v199 = vld [vmem:[#allocation8 + $0x8] sm:$0xff]
    %v200 = vld [vmem:[#allocation14] sm:$0xff]
    %v201 = vld [vmem:[#allocation14 + $0x8] sm:$0xff]
    %v202 = vld [vmem:[#allocation17] sm:$0x1]
    %v204 = vlaneseq
    %v205 = vshrl.u32 %v204, 7
    %v206 = vsub.s32 0, %v205
    %v207 = vrot.slane %v202, %v206
    %vm209 = vcmask 130048
    %v211 = vsel %vm209, %v198, 0
    %v214 = vsel %vm209, %v199, 0
    %216 = vmatprep.subr.mxu0 0.0
    %217 = vmatpush1.msra.mxu0 0.0
    %218 = vmatprep.subr.mxu0 0.0
    %219 = vmatpush1.msra.mxu0 0.0
    %220 = vmatprep.subr.mxu0 0.0
    %221 = vmatpush1.msra.mxu0 0.0
    %222 = vmatprep.subr.mxu0 0.0
    %223 = vmatpush1.msra.mxu0 0.0
    %224 = vmatprep.subr.mxu0 0.0
    %225 = vmatpush1.msra.mxu0 0.0
    %226 = vmatprep.subr.mxu0 0.0
    %227 = vmatpush1.msra.mxu0 0.0
    %228 = vmatprep.subr.mxu0 0.0
    %229 = vmatpush1.msra.mxu0 0.0
    %230 = vmatprep.subr.mxu0 0.0
    %231 = vmatpush1.msra.mxu0 0.0
    %232 = vmatprep.subr.mxu0 0.0
    %233 = vmatpush1.msra.mxu0 0.0
    %234 = vmatprep.subr.mxu0 0.0
    %235 = vmatpush1.msra.mxu0 0.0
    %236 = vmatprep.subr.mxu0 0.0
    %237 = vmatpush1.msra.mxu0 0.0
    %238 = vmatprep.subr.mxu0 0.0
    %239 = vmatpush1.msra.mxu0 0.0
    %240 = vmatprep.subr.mxu0 0.0
    %241 = vmatpush1.msra.mxu0 0.0
    %242 = vmatprep.subr.mxu0 0.0
    %243 = vmatpush1.msra.mxu0 0.0
    %244 = vmatprep.subr.mxu0 0.0
    %245 = vmatpush1.msra.mxu0 %v201
    %246 = vmatprep.subr.mxu0 0.0
    %247 = vmatpush1.msra.mxu0 %v200
    %248 = vmatprep.subr.mxu0 0.0
    %249 = vmatpush2.msra.mxu0 0.0
    %250 = vmatprep.subr.mxu0 0.0
    %251 = vmatpush2.msra.mxu0 0.0
    %252 = vmatprep.subr.mxu0 0.0
    %253 = vmatpush2.msra.mxu0 0.0
    %254 = vmatprep.subr.mxu0 0.0
    %255 = vmatpush2.msra.mxu0 0.0
    %256 = vmatprep.subr.mxu0 0.0
    %257 = vmatpush2.msra.mxu0 0.0
    %258 = vmatprep.subr.mxu0 0.0
    %259 = vmatpush2.msra.mxu0 0.0
    %260 = vmatprep.subr.mxu0 0.0
    %261 = vmatpush2.msra.mxu0 0.0
    %262 = vmatprep.subr.mxu0 0.0
    %263 = vmatpush2.msra.mxu0 0.0
    %264 = vmatprep.subr.mxu0 0.0
    %265 = vmatpush2.msra.mxu0 0.0
    %266 = vmatprep.subr.mxu0 0.0
    %267 = vmatpush2.msra.mxu0 0.0
    %268 = vmatprep.subr.mxu0 0.0
    %269 = vmatpush2.msra.mxu0 0.0
    %270 = vmatprep.subr.mxu0 0.0
    %271 = vmatpush2.msra.mxu0 0.0
    %272 = vmatprep.subr.mxu0 0.0
    %273 = vmatpush2.msra.mxu0 0.0
    %274 = vmatprep.subr.mxu0 0.0
    %275 = vmatpush2.msra.mxu0 0.0
    %276 = vmatprep.subr.mxu0 0.0
    %277 = vmatpush2.msra.mxu0 0.0
    %278 = vmatprep.subr.mxu0 0.0
    %279 = vmatpush2.msra.mxu0 0.0
    %280 = vmatprep.mubr.f32.mxu0 0.0
    %281 = vmatmul.mubr.f32.gmra.mxu0 %v211
    %v282 = vpop.f32.mrf.mxu0
    %v283 = vadd.f32 %v207, %v282
    %v284 = vpop.f32.mrf.mxu0
    %285 = vmatprep.mubr.f32.mxu0 0.0
    %286 = vmatmul.mubr.f32.gmra.mxu0 %v214
    %v287 = vpop.f32.mrf.mxu0
    %v288 = vadd.f32 %v207, %v287
    %v289 = vpop.f32.mrf.mxu0
    %290 = vdwg.mxu0
    %291 = vst [vmem:[#allocation4] sm:$0xff] %v283
    %292 = vst [vmem:[#allocation4 + $0x8] sm:$0xff] %v288
    %v293 = vld [vmem:[#allocation19] sm:$0xff]
    %v294 = vld [vmem:[#allocation19 + $0x8] sm:$0xff]
    %v295 = vld [vmem:[%s9] sm:$0xff]
    %v296 = vld [vmem:[%s9 + $0x8] sm:$0xff]
    %v297 = vld [vmem:[%s11] sm:$0x1]
    %v299 = vlaneseq
    %v300 = vshrl.u32 %v299, 7
    %v301 = vsub.s32 0, %v300
    %v302 = vrot.slane %v297, %v301
    %v305 = vsel %vm209, %v293, 0
    %v308 = vsel %vm209, %v294, 0
    %310 = vmatprep.subr.mxu0 0.0
    %311 = vmatpush1.msra.mxu0 0.0
    %312 = vmatprep.subr.mxu0 0.0
    %313 = vmatpush1.msra.mxu0 0.0
    %314 = vmatprep.subr.mxu0 0.0
    %315 = vmatpush1.msra.mxu0 0.0
    %316 = vmatprep.subr.mxu0 0.0
    %317 = vmatpush1.msra.mxu0 0.0
    %318 = vmatprep.subr.mxu0 0.0
    %319 = vmatpush1.msra.mxu0 0.0
    %320 = vmatprep.subr.mxu0 0.0
    %321 = vmatpush1.msra.mxu0 0.0
    %322 = vmatprep.subr.mxu0 0.0
    %323 = vmatpush1.msra.mxu0 0.0
    %324 = vmatprep.subr.mxu0 0.0
    %325 = vmatpush1.msra.mxu0 0.0
    %326 = vmatprep.subr.mxu0 0.0
    %327 = vmatpush1.msra.mxu0 0.0
    %328 = vmatprep.subr.mxu0 0.0
    %329 = vmatpush1.msra.mxu0 0.0
    %330 = vmatprep.subr.mxu0 0.0
    %331 = vmatpush1.msra.mxu0 0.0
    %332 = vmatprep.subr.mxu0 0.0
    %333 = vmatpush1.msra.mxu0 0.0
    %334 = vmatprep.subr.mxu0 0.0
    %335 = vmatpush1.msra.mxu0 0.0
    %336 = vmatprep.subr.mxu0 0.0
    %337 = vmatpush1.msra.mxu0 0.0
    %338 = vmatprep.subr.mxu0 0.0
    %339 = vmatpush1.msra.mxu0 %v296
    %340 = vmatprep.subr.mxu0 0.0
    %341 = vmatpush1.msra.mxu0 %v295
    %342 = vmatprep.subr.mxu0 0.0
    %343 = vmatpush2.msra.mxu0 0.0
    %344 = vmatprep.subr.mxu0 0.0
    %345 = vmatpush2.msra.mxu0 0.0
    %346 = vmatprep.subr.mxu0 0.0
    %347 = vmatpush2.msra.mxu0 0.0
    %348 = vmatprep.subr.mxu0 0.0
    %349 = vmatpush2.msra.mxu0 0.0
    %350 = vmatprep.subr.mxu0 0.0
    %351 = vmatpush2.msra.mxu0 0.0
    %352 = vmatprep.subr.mxu0 0.0
    %353 = vmatpush2.msra.mxu0 0.0
    %354 = vmatprep.subr.mxu0 0.0
    %355 = vmatpush2.msra.mxu0 0.0
    %356 = vmatprep.subr.mxu0 0.0
    %357 = vmatpush2.msra.mxu0 0.0
    %358 = vmatprep.subr.mxu0 0.0
    %359 = vmatpush2.msra.mxu0 0.0
    %360 = vmatprep.subr.mxu0 0.0
    %361 = vmatpush2.msra.mxu0 0.0
    %362 = vmatprep.subr.mxu0 0.0
    %363 = vmatpush2.msra.mxu0 0.0
    %364 = vmatprep.subr.mxu0 0.0
    %365 = vmatpush2.msra.mxu0 0.0
    %366 = vmatprep.subr.mxu0 0.0
    %367 = vmatpush2.msra.mxu0 0.0
    %368 = vmatprep.subr.mxu0 0.0
    %369 = vmatpush2.msra.mxu0 0.0
    %370 = vmatprep.subr.mxu0 0.0
    %371 = vmatpush2.msra.mxu0 0.0
    %372 = vmatprep.subr.mxu0 0.0
    %373 = vmatpush2.msra.mxu0 0.0
    %374 = vmatprep.mubr.f32.mxu0 0.0
    %375 = vmatmul.mubr.f32.gmra.mxu0 %v305
    %v376 = vpop.f32.mrf.mxu0
    %v377 = vadd.f32 %v302, %v376
    %v378 = vpop.f32.mrf.mxu0
    %379 = vmatprep.mubr.f32.mxu0 0.0
    %380 = vmatmul.mubr.f32.gmra.mxu0 %v308
    %v381 = vpop.f32.mrf.mxu0
    %v382 = vadd.f32 %v302, %v381
    %v383 = vpop.f32.mrf.mxu0
    %384 = vdwg.mxu0
    %385 = vst [vmem:[#allocation7] sm:$0xff] %v377
    %386 = vst [vmem:[#allocation7 + $0x8] sm:$0xff] %v382
    %v387 = vld [vmem:[#allocation2] sm:$0x3]
    %v388 = vld [vmem:[#allocation5] sm:$0x3]
    %v389 = vld [vmem:[#allocation3] sm:$0x3]
    %v390 = vld [vmem:[#allocation6] sm:$0x3]
    %v391 = vld [vmem:[#allocation4] sm:$0x3]
    %v392 = vld [vmem:[#allocation16] sm:$0xff]
    %v393 = vld [vmem:[#allocation16 + $0x8] sm:$0xff]
    %v394 = vld [vmem:[#allocation16 + $0x10] sm:$0xff]
    %v395 = vld [vmem:[#allocation16 + $0x18] sm:$0xff]
    %vm396 = vcmask 261120
    %v398 = vsel %vm396, %v387, 0
    %400 = vmatprep.subr.mxu0 0.0
    %401 = vmatpush1.msra.mxu0 0.0
    %402 = vmatprep.subr.mxu0 0.0
    %403 = vmatpush1.msra.mxu0 0.0
    %404 = vmatprep.subr.mxu0 0.0
    %405 = vmatpush1.msra.mxu0 0.0
    %406 = vmatprep.subr.mxu0 0.0
    %407 = vmatpush1.msra.mxu0 0.0
    %408 = vmatprep.subr.mxu0 0.0
    %409 = vmatpush1.msra.mxu0 0.0
    %410 = vmatprep.subr.mxu0 0.0
    %411 = vmatpush1.msra.mxu0 0.0
    %412 = vmatprep.subr.mxu0 0.0
    %413 = vmatpush1.msra.mxu0 0.0
    %414 = vmatprep.subr.mxu0 0.0
    %415 = vmatpush1.msra.mxu0 0.0
    %416 = vmatprep.subr.mxu0 0.0
    %417 = vmatpush1.msra.mxu0 0.0
    %418 = vmatprep.subr.mxu0 0.0
    %419 = vmatpush1.msra.mxu0 0.0
    %420 = vmatprep.subr.mxu0 0.0
    %421 = vmatpush1.msra.mxu0 0.0
    %422 = vmatprep.subr.mxu0 0.0
    %423 = vmatpush1.msra.mxu0 0.0
    %424 = vmatprep.subr.mxu0 0.0
    %425 = vmatpush1.msra.mxu0 %v395
    %426 = vmatprep.subr.mxu0 0.0
    %427 = vmatpush1.msra.mxu0 %v394
    %428 = vmatprep.subr.mxu0 0.0
    %429 = vmatpush1.msra.mxu0 %v393
    %430 = vmatprep.subr.mxu0 0.0
    %431 = vmatpush1.msra.mxu0 %v392
    %432 = vmatprep.subr.mxu0 0.0
    %433 = vmatpush2.msra.mxu0 0.0
    %434 = vmatprep.subr.mxu0 0.0
    %435 = vmatpush2.msra.mxu0 0.0
    %436 = vmatprep.subr.mxu0 0.0
    %437 = vmatpush2.msra.mxu0 0.0
    %438 = vmatprep.subr.mxu0 0.0
    %439 = vmatpush2.msra.mxu0 0.0
    %440 = vmatprep.subr.mxu0 0.0
    %441 = vmatpush2.msra.mxu0 0.0
    %442 = vmatprep.subr.mxu0 0.0
    %443 = vmatpush2.msra.mxu0 0.0
    %444 = vmatprep.subr.mxu0 0.0
    %445 = vmatpush2.msra.mxu0 0.0
    %446 = vmatprep.subr.mxu0 0.0
    %447 = vmatpush2.msra.mxu0 0.0
    %448 = vmatprep.subr.mxu0 0.0
    %449 = vmatpush2.msra.mxu0 0.0
    %450 = vmatprep.subr.mxu0 0.0
    %451 = vmatpush2.msra.mxu0 0.0
    %452 = vmatprep.subr.mxu0 0.0
    %453 = vmatpush2.msra.mxu0 0.0
    %454 = vmatprep.subr.mxu0 0.0
    %455 = vmatpush2.msra.mxu0 0.0
    %456 = vmatprep.subr.mxu0 0.0
    %457 = vmatpush2.msra.mxu0 0.0
    %458 = vmatprep.subr.mxu0 0.0
    %459 = vmatpush2.msra.mxu0 0.0
    %460 = vmatprep.subr.mxu0 0.0
    %461 = vmatpush2.msra.mxu0 0.0
    %462 = vmatprep.subr.mxu0 0.0
    %463 = vmatpush2.msra.mxu0 0.0
    %464 = vmatprep.mubr.f32.mxu0 0.0
    %465 = vmatmul.mubr.f32.gmra.mxu0 %v398
    %v466 = vpop.f32.mrf.mxu0
    %v467 = vadd.f32 0.0, %v466
    %v468 = vpop.f32.mrf.mxu0
    %469 = vdwg.mxu0
    %v470 = vadd.f32 %v391, %v467
    %v471 = vsub.f32 0.0, %v470
    %v472 = vmul.f32 %v471, 1.442695
    %v473 = vpow.pop %v472
    %v474 = vadd.f32 %v473, 1.0
    %v475 = vrcp.pop %v474
    %v476 = vtanh.pop %v470
    %478 = vrot.lane.b32.xlu0 %v389, 32
    %v479 = vpop.permute.xlu0 %478
    %v481 = vmul.f32 %v475, %v479
    %483 = vrot.lane.b32.xlu0 %v476, 64
    %v484 = vpop.permute.xlu0 %483
    %v486 = vmul.f32 %v475, %v484
    %488 = vrot.lane.b32.xlu0 %v486, 32
    %v489 = vpop.permute.xlu0 %488
    %v491 = vadd.f32 %v481, %v489
    %v492 = vtanh.pop %v491
    %494 = vrot.lane.b32.xlu0 %v492, 64
    %v495 = vpop.permute.xlu0 %494
    %v497 = vmul.f32 %v475, %v495
    %499 = vrot.lane.b32.xlu0 %v497, 32
    %v500 = vpop.permute.xlu0 %499
    %vm502 = vcmask 254976
    %503 = vst.msk [vmem:[#allocation25] sm:$0x3] %vm502, %v500
    %v504 = vld [vmem:[#allocation7 + $0xe] sm:$0x3]
    %v505 = vld [vmem:[#allocation23] sm:$0xff]
    %v506 = vld [vmem:[#allocation23 + $0x8] sm:$0xff]
    %v507 = vld [vmem:[#allocation23 + $0x10] sm:$0xff]
    %v508 = vld [vmem:[#allocation23 + $0x18] sm:$0xff]
    %v510 = vsel %vm396, %v388, 0
    %512 = vmatprep.subr.mxu0 0.0
    %513 = vmatpush1.msra.mxu0 0.0
    %514 = vmatprep.subr.mxu0 0.0
    %515 = vmatpush1.msra.mxu0 0.0
    %516 = vmatprep.subr.mxu0 0.0
    %517 = vmatpush1.msra.mxu0 0.0
    %518 = vmatprep.subr.mxu0 0.0
    %519 = vmatpush1.msra.mxu0 0.0
    %520 = vmatprep.subr.mxu0 0.0
    %521 = vmatpush1.msra.mxu0 0.0
    %522 = vmatprep.subr.mxu0 0.0
    %523 = vmatpush1.msra.mxu0 0.0
    %524 = vmatprep.subr.mxu0 0.0
    %525 = vmatpush1.msra.mxu0 0.0
    %526 = vmatprep.subr.mxu0 0.0
    %527 = vmatpush1.msra.mxu0 0.0
    %528 = vmatprep.subr.mxu0 0.0
    %529 = vmatpush1.msra.mxu0 0.0
    %530 = vmatprep.subr.mxu0 0.0
    %531 = vmatpush1.msra.mxu0 0.0
    %532 = vmatprep.subr.mxu0 0.0
    %533 = vmatpush1.msra.mxu0 0.0
    %534 = vmatprep.subr.mxu0 0.0
    %535 = vmatpush1.msra.mxu0 0.0
    %536 = vmatprep.subr.mxu0 0.0
    %537 = vmatpush1.msra.mxu0 %v508
    %538 = vmatprep.subr.mxu0 0.0
    %539 = vmatpush1.msra.mxu0 %v507
    %540 = vmatprep.subr.mxu0 0.0
    %541 = vmatpush1.msra.mxu0 %v506
    %542 = vmatprep.subr.mxu0 0.0
    %543 = vmatpush1.msra.mxu0 %v505
    %544 = vmatprep.subr.mxu0 0.0
    %545 = vmatpush2.msra.mxu0 0.0
    %546 = vmatprep.subr.mxu0 0.0
    %547 = vmatpush2.msra.mxu0 0.0
    %548 = vmatprep.subr.mxu0 0.0
    %549 = vmatpush2.msra.mxu0 0.0
    %550 = vmatprep.subr.mxu0 0.0
    %551 = vmatpush2.msra.mxu0 0.0
    %552 = vmatprep.subr.mxu0 0.0
    %553 = vmatpush2.msra.mxu0 0.0
    %554 = vmatprep.subr.mxu0 0.0
    %555 = vmatpush2.msra.mxu0 0.0
    %556 = vmatprep.subr.mxu0 0.0
    %557 = vmatpush2.msra.mxu0 0.0
    %558 = vmatprep.subr.mxu0 0.0
    %559 = vmatpush2.msra.mxu0 0.0
    %560 = vmatprep.subr.mxu0 0.0
    %561 = vmatpush2.msra.mxu0 0.0
    %562 = vmatprep.subr.mxu0 0.0
    %563 = vmatpush2.msra.mxu0 0.0
    %564 = vmatprep.subr.mxu0 0.0
    %565 = vmatpush2.msra.mxu0 0.0
    %566 = vmatprep.subr.mxu0 0.0
    %567 = vmatpush2.msra.mxu0 0.0
    %568 = vmatprep.subr.mxu0 0.0
    %569 = vmatpush2.msra.mxu0 0.0
    %570 = vmatprep.subr.mxu0 0.0
    %571 = vmatpush2.msra.mxu0 0.0
    %572 = vmatprep.subr.mxu0 0.0
    %573 = vmatpush2.msra.mxu0 0.0
    %574 = vmatprep.subr.mxu0 0.0
    %575 = vmatpush2.msra.mxu0 0.0
    %576 = vmatprep.mubr.f32.mxu0 0.0
    %577 = vmatmul.mubr.f32.gmra.mxu0 %v510
    %v578 = vpop.f32.mrf.mxu0
    %v579 = vadd.f32 0.0, %v578
    %v580 = vpop.f32.mrf.mxu0
    %581 = vdwg.mxu0
    %v582 = vadd.f32 %v504, %v579
    %v583 = vsub.f32 0.0, %v582
    %v584 = vmul.f32 %v583, 1.442695
    %v585 = vpow.pop %v584
    %v586 = vadd.f32 %v585, 1.0
    %v587 = vrcp.pop %v586
    %v588 = vtanh.pop %v582
    %590 = vrot.lane.b32.xlu0 %v390, 32
    %v591 = vpop.permute.xlu0 %590
    %v593 = vmul.f32 %v587, %v591
    %595 = vrot.lane.b32.xlu0 %v588, 64
    %v596 = vpop.permute.xlu0 %595
    %v598 = vmul.f32 %v587, %v596
    %600 = vrot.lane.b32.xlu0 %v598, 32
    %v601 = vpop.permute.xlu0 %600
    %v603 = vadd.f32 %v593, %v601
    %v604 = vtanh.pop %v603
    %606 = vrot.lane.b32.xlu0 %v604, 64
    %v607 = vpop.permute.xlu0 %606
    %v609 = vmul.f32 %v587, %v607
    %611 = vrot.lane.b32.xlu0 %v609, 32
    %v612 = vpop.permute.xlu0 %611
    %s614 = scalar_lea.vmem [#allocation29], 14
    %615 = vst.msk [vmem:[%s614] sm:$0x3] %vm502, %v612
    %v616 = vld [vmem:[#allocation4 + $0x2] sm:$0x3]
    %v617 = vld [vmem:[#allocation16] sm:$0xff]
    %v618 = vld [vmem:[#allocation16 + $0x8] sm:$0xff]
    %v619 = vld [vmem:[#allocation16 + $0x10] sm:$0xff]
    %v620 = vld [vmem:[#allocation16 + $0x18] sm:$0xff]
    %v621 = vsel %vm396, %v500, 0
    %623 = vmatprep.subr.mxu0 0.0
    %624 = vmatpush1.msra.mxu0 0.0
    %625 = vmatprep.subr.mxu0 0.0
    %626 = vmatpush1.msra.mxu0 0.0
    %627 = vmatprep.subr.mxu0 0.0
    %628 = vmatpush1.msra.mxu0 0.0
    %629 = vmatprep.subr.mxu0 0.0
    %630 = vmatpush1.msra.mxu0 0.0
    %631 = vmatprep.subr.mxu0 0.0
    %632 = vmatpush1.msra.mxu0 0.0
    %633 = vmatprep.subr.mxu0 0.0
    %634 = vmatpush1.msra.mxu0 0.0
    %635 = vmatprep.subr.mxu0 0.0
    %636 = vmatpush1.msra.mxu0 0.0
    %637 = vmatprep.subr.mxu0 0.0
    %638 = vmatpush1.msra.mxu0 0.0
    %639 = vmatprep.subr.mxu0 0.0
    %640 = vmatpush1.msra.mxu0 0.0
    %641 = vmatprep.subr.mxu0 0.0
    %642 = vmatpush1.msra.mxu0 0.0
    %643 = vmatprep.subr.mxu0 0.0
    %644 = vmatpush1.msra.mxu0 0.0
    %645 = vmatprep.subr.mxu0 0.0
    %646 = vmatpush1.msra.mxu0 0.0
    %647 = vmatprep.subr.mxu0 0.0
    %648 = vmatpush1.msra.mxu0 %v620
    %649 = vmatprep.subr.mxu0 0.0
    %650 = vmatpush1.msra.mxu0 %v619
    %651 = vmatprep.subr.mxu0 0.0
    %652 = vmatpush1.msra.mxu0 %v618
    %653 = vmatprep.subr.mxu0 0.0
    %654 = vmatpush1.msra.mxu0 %v617
    %655 = vmatprep.subr.mxu0 0.0
    %656 = vmatpush2.msra.mxu0 0.0
    %657 = vmatprep.subr.mxu0 0.0
    %658 = vmatpush2.msra.mxu0 0.0
    %659 = vmatprep.subr.mxu0 0.0
    %660 = vmatpush2.msra.mxu0 0.0
    %661 = vmatprep.subr.mxu0 0.0
    %662 = vmatpush2.msra.mxu0 0.0
    %663 = vmatprep.subr.mxu0 0.0
    %664 = vmatpush2.msra.mxu0 0.0
    %665 = vmatprep.subr.mxu0 0.0
    %666 = vmatpush2.msra.mxu0 0.0
    %667 = vmatprep.subr.mxu0 0.0
    %668 = vmatpush2.msra.mxu0 0.0
    %669 = vmatprep.subr.mxu0 0.0
    %670 = vmatpush2.msra.mxu0 0.0
    %671 = vmatprep.subr.mxu0 0.0
    %672 = vmatpush2.msra.mxu0 0.0
    %673 = vmatprep.subr.mxu0 0.0
    %674 = vmatpush2.msra.mxu0 0.0
    %675 = vmatprep.subr.mxu0 0.0
    %676 = vmatpush2.msra.mxu0 0.0
    %677 = vmatprep.subr.mxu0 0.0
    %678 = vmatpush2.msra.mxu0 0.0
    %679 = vmatprep.subr.mxu0 0.0
    %680 = vmatpush2.msra.mxu0 0.0
    %681 = vmatprep.subr.mxu0 0.0
    %682 = vmatpush2.msra.mxu0 0.0
    %683 = vmatprep.subr.mxu0 0.0
    %684 = vmatpush2.msra.mxu0 0.0
    %685 = vmatprep.subr.mxu0 0.0
    %686 = vmatpush2.msra.mxu0 0.0
    %687 = vmatprep.mubr.f32.mxu0 0.0
    %688 = vmatmul.mubr.f32.gmra.mxu0 %v621
    %v689 = vpop.f32.mrf.mxu0
    %v690 = vadd.f32 0.0, %v689
    %v691 = vpop.f32.mrf.mxu0
    %692 = vdwg.mxu0
    %v693 = vadd.f32 %v616, %v690
    %v694 = vsub.f32 0.0, %v693
    %v695 = vmul.f32 %v694, 1.442695
    %v696 = vpow.pop %v695
    %v697 = vadd.f32 %v696, 1.0
    %v698 = vrcp.pop %v697
    %v699 = vtanh.pop %v693
    %v700 = vmul.f32 %v698, %v491
    %702 = vrot.lane.b32.xlu0 %v699, 64
    %v703 = vpop.permute.xlu0 %702
    %v705 = vmul.f32 %v698, %v703
    %707 = vrot.lane.b32.xlu0 %v705, 32
    %v708 = vpop.permute.xlu0 %707
    %v710 = vadd.f32 %v700, %v708
    %v711 = vtanh.pop %v710
    %713 = vrot.lane.b32.xlu0 %v711, 64
    %v714 = vpop.permute.xlu0 %713
    %v716 = vmul.f32 %v698, %v714
    %718 = vrot.lane.b32.xlu0 %v716, 32
    %v719 = vpop.permute.xlu0 %718
    %s721 = scalar_lea.vmem [#allocation25], 2
    %722 = vst.msk [vmem:[%s721] sm:$0x3] %vm502, %v719
    %v723 = vld [vmem:[#allocation7 + $0xc] sm:$0x3]
    %v724 = vld [vmem:[#allocation23] sm:$0xff]
    %v725 = vld [vmem:[#allocation23 + $0x8] sm:$0xff]
    %v726 = vld [vmem:[#allocation23 + $0x10] sm:$0xff]
    %v727 = vld [vmem:[#allocation23 + $0x18] sm:$0xff]
    %v728 = vsel %vm396, %v612, 0
    %730 = vmatprep.subr.mxu0 0.0
    %731 = vmatpush1.msra.mxu0 0.0
    %732 = vmatprep.subr.mxu0 0.0
    %733 = vmatpush1.msra.mxu0 0.0
    %734 = vmatprep.subr.mxu0 0.0
    %735 = vmatpush1.msra.mxu0 0.0
    %736 = vmatprep.subr.mxu0 0.0
    %737 = vmatpush1.msra.mxu0 0.0
    %738 = vmatprep.subr.mxu0 0.0
    %739 = vmatpush1.msra.mxu0 0.0
    %740 = vmatprep.subr.mxu0 0.0
    %741 = vmatpush1.msra.mxu0 0.0
    %742 = vmatprep.subr.mxu0 0.0
    %743 = vmatpush1.msra.mxu0 0.0
    %744 = vmatprep.subr.mxu0 0.0
    %745 = vmatpush1.msra.mxu0 0.0
    %746 = vmatprep.subr.mxu0 0.0
    %747 = vmatpush1.msra.mxu0 0.0
    %748 = vmatprep.subr.mxu0 0.0
    %749 = vmatpush1.msra.mxu0 0.0
    %750 = vmatprep.subr.mxu0 0.0
    %751 = vmatpush1.msra.mxu0 0.0
    %752 = vmatprep.subr.mxu0 0.0
    %753 = vmatpush1.msra.mxu0 0.0
    %754 = vmatprep.subr.mxu0 0.0
    %755 = vmatpush1.msra.mxu0 %v727
    %756 = vmatprep.subr.mxu0 0.0
    %757 = vmatpush1.msra.mxu0 %v726
    %758 = vmatprep.subr.mxu0 0.0
    %759 = vmatpush1.msra.mxu0 %v725
    %760 = vmatprep.subr.mxu0 0.0
    %761 = vmatpush1.msra.mxu0 %v724
    %762 = vmatprep.subr.mxu0 0.0
    %763 = vmatpush2.msra.mxu0 0.0
    %764 = vmatprep.subr.mxu0 0.0
    %765 = vmatpush2.msra.mxu0 0.0
    %766 = vmatprep.subr.mxu0 0.0
    %767 = vmatpush2.msra.mxu0 0.0
    %768 = vmatprep.subr.mxu0 0.0
    %769 = vmatpush2.msra.mxu0 0.0
    %770 = vmatprep.subr.mxu0 0.0
    %771 = vmatpush2.msra.mxu0 0.0
    %772 = vmatprep.subr.mxu0 0.0
    %773 = vmatpush2.msra.mxu0 0.0
    %774 = vmatprep.subr.mxu0 0.0
    %775 = vmatpush2.msra.mxu0 0.0
    %776 = vmatprep.subr.mxu0 0.0
    %777 = vmatpush2.msra.mxu0 0.0
    %778 = vmatprep.subr.mxu0 0.0
    %779 = vmatpush2.msra.mxu0 0.0
    %780 = vmatprep.subr.mxu0 0.0
    %781 = vmatpush2.msra.mxu0 0.0
    %782 = vmatprep.subr.mxu0 0.0
    %783 = vmatpush2.msra.mxu0 0.0
    %784 = vmatprep.subr.mxu0 0.0
    %785 = vmatpush2.msra.mxu0 0.0
    %786 = vmatprep.subr.mxu0 0.0
    %787 = vmatpush2.msra.mxu0 0.0
    %788 = vmatprep.subr.mxu0 0.0
    %789 = vmatpush2.msra.mxu0 0.0
    %790 = vmatprep.subr.mxu0 0.0
    %791 = vmatpush2.msra.mxu0 0.0
    %792 = vmatprep.subr.mxu0 0.0
    %793 = vmatpush2.msra.mxu0 0.0
    %794 = vmatprep.mubr.f32.mxu0 0.0
    %795 = vmatmul.mubr.f32.gmra.mxu0 %v728
    %v796 = vpop.f32.mrf.mxu0
    %v797 = vadd.f32 0.0, %v796
    %v798 = vpop.f32.mrf.mxu0
    %799 = vdwg.mxu0
    %v800 = vadd.f32 %v723, %v797
    %v801 = vsub.f32 0.0, %v800
    %v802 = vmul.f32 %v801, 1.442695
    %v803 = vpow.pop %v802
    %v804 = vadd.f32 %v803, 1.0
    %v805 = vrcp.pop %v804
    %v806 = vtanh.pop %v800
    %v807 = vmul.f32 %v805, %v603
    %809 = vrot.lane.b32.xlu0 %v806, 64
    %v810 = vpop.permute.xlu0 %809
    %v812 = vmul.f32 %v805, %v810
    %814 = vrot.lane.b32.xlu0 %v812, 32
    %v815 = vpop.permute.xlu0 %814
    %v817 = vadd.f32 %v807, %v815
    %v818 = vtanh.pop %v817
    %820 = vrot.lane.b32.xlu0 %v818, 64
    %v821 = vpop.permute.xlu0 %820
    %v823 = vmul.f32 %v805, %v821
    %825 = vrot.lane.b32.xlu0 %v823, 32
    %v826 = vpop.permute.xlu0 %825
    %s828 = scalar_lea.vmem [#allocation29], 12
    %829 = vst.msk [vmem:[%s828] sm:$0x3] %vm502, %v826
    %v830 = vld [vmem:[#allocation4 + $0x4] sm:$0x3]
    %v831 = vld [vmem:[#allocation16] sm:$0xff]
    %v832 = vld [vmem:[#allocation16 + $0x8] sm:$0xff]
    %v833 = vld [vmem:[#allocation16 + $0x10] sm:$0xff]
    %v834 = vld [vmem:[#allocation16 + $0x18] sm:$0xff]
    %v835 = vsel %vm396, %v719, 0
    %837 = vmatprep.subr.mxu0 0.0
    %838 = vmatpush1.msra.mxu0 0.0
    %839 = vmatprep.subr.mxu0 0.0
    %840 = vmatpush1.msra.mxu0 0.0
    %841 = vmatprep.subr.mxu0 0.0
    %842 = vmatpush1.msra.mxu0 0.0
    %843 = vmatprep.subr.mxu0 0.0
    %844 = vmatpush1.msra.mxu0 0.0
    %845 = vmatprep.subr.mxu0 0.0
    %846 = vmatpush1.msra.mxu0 0.0
    %847 = vmatprep.subr.mxu0 0.0
    %848 = vmatpush1.msra.mxu0 0.0
    %849 = vmatprep.subr.mxu0 0.0
    %850 = vmatpush1.msra.mxu0 0.0
    %851 = vmatprep.subr.mxu0 0.0
    %852 = vmatpush1.msra.mxu0 0.0
    %853 = vmatprep.subr.mxu0 0.0
    %854 = vmatpush1.msra.mxu0 0.0
    %855 = vmatprep.subr.mxu0 0.0
    %856 = vmatpush1.msra.mxu0 0.0
    %857 = vmatprep.subr.mxu0 0.0
    %858 = vmatpush1.msra.mxu0 0.0
    %859 = vmatprep.subr.mxu0 0.0
    %860 = vmatpush1.msra.mxu0 0.0
    %861 = vmatprep.subr.mxu0 0.0
    %862 = vmatpush1.msra.mxu0 %v834
    %863 = vmatprep.subr.mxu0 0.0
    %864 = vmatpush1.msra.mxu0 %v833
    %865 = vmatprep.subr.mxu0 0.0
    %866 = vmatpush1.msra.mxu0 %v832
    %867 = vmatprep.subr.mxu0 0.0
    %868 = vmatpush1.msra.mxu0 %v831
    %869 = vmatprep.subr.mxu0 0.0
    %870 = vmatpush2.msra.mxu0 0.0
    %871 = vmatprep.subr.mxu0 0.0
    %872 = vmatpush2.msra.mxu0 0.0
    %873 = vmatprep.subr.mxu0 0.0
    %874 = vmatpush2.msra.mxu0 0.0
    %875 = vmatprep.subr.mxu0 0.0
    %876 = vmatpush2.msra.mxu0 0.0
    %877 = vmatprep.subr.mxu0 0.0
    %878 = vmatpush2.msra.mxu0 0.0
    %879 = vmatprep.subr.mxu0 0.0
    %880 = vmatpush2.msra.mxu0 0.0
    %881 = vmatprep.subr.mxu0 0.0
    %882 = vmatpush2.msra.mxu0 0.0
    %883 = vmatprep.subr.mxu0 0.0
    %884 = vmatpush2.msra.mxu0 0.0
    %885 = vmatprep.subr.mxu0 0.0
    %886 = vmatpush2.msra.mxu0 0.0
    %887 = vmatprep.subr.mxu0 0.0
    %888 = vmatpush2.msra.mxu0 0.0
    %889 = vmatprep.subr.mxu0 0.0
    %890 = vmatpush2.msra.mxu0 0.0
    %891 = vmatprep.subr.mxu0 0.0
    %892 = vmatpush2.msra.mxu0 0.0
    %893 = vmatprep.subr.mxu0 0.0
    %894 = vmatpush2.msra.mxu0 0.0
    %895 = vmatprep.subr.mxu0 0.0
    %896 = vmatpush2.msra.mxu0 0.0
    %897 = vmatprep.subr.mxu0 0.0
    %898 = vmatpush2.msra.mxu0 0.0
    %899 = vmatprep.subr.mxu0 0.0
    %900 = vmatpush2.msra.mxu0 0.0
    %901 = vmatprep.mubr.f32.mxu0 0.0
    %902 = vmatmul.mubr.f32.gmra.mxu0 %v835
    %v903 = vpop.f32.mrf.mxu0
    %v904 = vadd.f32 0.0, %v903
    %v905 = vpop.f32.mrf.mxu0
    %906 = vdwg.mxu0
    %v907 = vadd.f32 %v830, %v904
    %v908 = vsub.f32 0.0, %v907
    %v909 = vmul.f32 %v908, 1.442695
    %v910 = vpow.pop %v909
    %v911 = vadd.f32 %v910, 1.0
    %v912 = vrcp.pop %v911
    %v913 = vtanh.pop %v907
    %v914 = vmul.f32 %v912, %v710
    %916 = vrot.lane.b32.xlu0 %v913, 64
    %v917 = vpop.permute.xlu0 %916
    %v919 = vmul.f32 %v912, %v917
    %921 = vrot.lane.b32.xlu0 %v919, 32
    %v922 = vpop.permute.xlu0 %921
    %v924 = vadd.f32 %v914, %v922
    %v925 = vtanh.pop %v924
    %927 = vrot.lane.b32.xlu0 %v925, 64
    %v928 = vpop.permute.xlu0 %927
    %v930 = vmul.f32 %v912, %v928
    %932 = vrot.lane.b32.xlu0 %v930, 32
    %v933 = vpop.permute.xlu0 %932
    %s935 = scalar_lea.vmem [#allocation25], 4
    %936 = vst.msk [vmem:[%s935] sm:$0x3] %vm502, %v933
    %v937 = vld [vmem:[#allocation7 + $0xa] sm:$0x3]
    %v938 = vld [vmem:[#allocation23] sm:$0xff]
    %v939 = vld [vmem:[#allocation23 + $0x8] sm:$0xff]
    %v940 = vld [vmem:[#allocation23 + $0x10] sm:$0xff]
    %v941 = vld [vmem:[#allocation23 + $0x18] sm:$0xff]
    %v942 = vsel %vm396, %v826, 0
    %944 = vmatprep.subr.mxu0 0.0
    %945 = vmatpush1.msra.mxu0 0.0
    %946 = vmatprep.subr.mxu0 0.0
    %947 = vmatpush1.msra.mxu0 0.0
    %948 = vmatprep.subr.mxu0 0.0
    %949 = vmatpush1.msra.mxu0 0.0
    %950 = vmatprep.subr.mxu0 0.0
    %951 = vmatpush1.msra.mxu0 0.0
    %952 = vmatprep.subr.mxu0 0.0
    %953 = vmatpush1.msra.mxu0 0.0
    %954 = vmatprep.subr.mxu0 0.0
    %955 = vmatpush1.msra.mxu0 0.0
    %956 = vmatprep.subr.mxu0 0.0
    %957 = vmatpush1.msra.mxu0 0.0
    %958 = vmatprep.subr.mxu0 0.0
    %959 = vmatpush1.msra.mxu0 0.0
    %960 = vmatprep.subr.mxu0 0.0
    %961 = vmatpush1.msra.mxu0 0.0
    %962 = vmatprep.subr.mxu0 0.0
    %963 = vmatpush1.msra.mxu0 0.0
    %964 = vmatprep.subr.mxu0 0.0
    %965 = vmatpush1.msra.mxu0 0.0
    %966 = vmatprep.subr.mxu0 0.0
    %967 = vmatpush1.msra.mxu0 0.0
    %968 = vmatprep.subr.mxu0 0.0
    %969 = vmatpush1.msra.mxu0 %v941
    %970 = vmatprep.subr.mxu0 0.0
    %971 = vmatpush1.msra.mxu0 %v940
    %972 = vmatprep.subr.mxu0 0.0
    %973 = vmatpush1.msra.mxu0 %v939
    %974 = vmatprep.subr.mxu0 0.0
    %975 = vmatpush1.msra.mxu0 %v938
    %976 = vmatprep.subr.mxu0 0.0
    %977 = vmatpush2.msra.mxu0 0.0
    %978 = vmatprep.subr.mxu0 0.0
    %979 = vmatpush2.msra.mxu0 0.0
    %980 = vmatprep.subr.mxu0 0.0
    %981 = vmatpush2.msra.mxu0 0.0
    %982 = vmatprep.subr.mxu0 0.0
    %983 = vmatpush2.msra.mxu0 0.0
    %984 = vmatprep.subr.mxu0 0.0
    %985 = vmatpush2.msra.mxu0 0.0
    %986 = vmatprep.subr.mxu0 0.0
    %987 = vmatpush2.msra.mxu0 0.0
    %988 = vmatprep.subr.mxu0 0.0
    %989 = vmatpush2.msra.mxu0 0.0
    %990 = vmatprep.subr.mxu0 0.0
    %991 = vmatpush2.msra.mxu0 0.0
    %992 = vmatprep.subr.mxu0 0.0
    %993 = vmatpush2.msra.mxu0 0.0
    %994 = vmatprep.subr.mxu0 0.0
    %995 = vmatpush2.msra.mxu0 0.0
    %996 = vmatprep.subr.mxu0 0.0
    %997 = vmatpush2.msra.mxu0 0.0
    %998 = vmatprep.subr.mxu0 0.0
    %999 = vmatpush2.msra.mxu0 0.0
    %1000 = vmatprep.subr.mxu0 0.0
    %1001 = vmatpush2.msra.mxu0 0.0
    %1002 = vmatprep.subr.mxu0 0.0
    %1003 = vmatpush2.msra.mxu0 0.0
    %1004 = vmatprep.subr.mxu0 0.0
    %1005 = vmatpush2.msra.mxu0 0.0
    %1006 = vmatprep.subr.mxu0 0.0
    %1007 = vmatpush2.msra.mxu0 0.0
    %1008 = vmatprep.mubr.f32.mxu0 0.0
    %1009 = vmatmul.mubr.f32.gmra.mxu0 %v942
    %v1010 = vpop.f32.mrf.mxu0
    %v1011 = vadd.f32 0.0, %v1010
    %v1012 = vpop.f32.mrf.mxu0
    %1013 = vdwg.mxu0
    %v1014 = vadd.f32 %v937, %v1011
    %v1015 = vsub.f32 0.0, %v1014
    %v1016 = vmul.f32 %v1015, 1.442695
    %v1017 = vpow.pop %v1016
    %v1018 = vadd.f32 %v1017, 1.0
    %v1019 = vrcp.pop %v1018
    %v1020 = vtanh.pop %v1014
    %v1021 = vmul.f32 %v1019, %v817
    %1023 = vrot.lane.b32.xlu0 %v1020, 64
    %v1024 = vpop.permute.xlu0 %1023
    %v1026 = vmul.f32 %v1019, %v1024
    %1028 = vrot.lane.b32.xlu0 %v1026, 32
    %v1029 = vpop.permute.xlu0 %1028
    %v1031 = vadd.f32 %v1021, %v1029
    %v1032 = vtanh.pop %v1031
    %1034 = vrot.lane.b32.xlu0 %v1032, 64
    %v1035 = vpop.permute.xlu0 %1034
    %v1037 = vmul.f32 %v1019, %v1035
    %1039 = vrot.lane.b32.xlu0 %v1037, 32
    %v1040 = vpop.permute.xlu0 %1039
    %s1042 = scalar_lea.vmem [#allocation29], 10
    %1043 = vst.msk [vmem:[%s1042] sm:$0x3] %vm502, %v1040
    %v1044 = vld [vmem:[#allocation4 + $0x6] sm:$0x3]
    %v1045 = vld [vmem:[#allocation16] sm:$0xff]
    %v1046 = vld [vmem:[#allocation16 + $0x8] sm:$0xff]
    %v1047 = vld [vmem:[#allocation16 + $0x10] sm:$0xff]
    %v1048 = vld [vmem:[#allocation16 + $0x18] sm:$0xff]
    %v1049 = vsel %vm396, %v933, 0
    %1051 = vmatprep.subr.mxu0 0.0
    %1052 = vmatpush1.msra.mxu0 0.0
    %1053 = vmatprep.subr.mxu0 0.0
    %1054 = vmatpush1.msra.mxu0 0.0
    %1055 = vmatprep.subr.mxu0 0.0
    %1056 = vmatpush1.msra.mxu0 0.0
    %1057 = vmatprep.subr.mxu0 0.0
    %1058 = vmatpush1.msra.mxu0 0.0
    %1059 = vmatprep.subr.mxu0 0.0
    %1060 = vmatpush1.msra.mxu0 0.0
    %1061 = vmatprep.subr.mxu0 0.0
    %1062 = vmatpush1.msra.mxu0 0.0
    %1063 = vmatprep.subr.mxu0 0.0
    %1064 = vmatpush1.msra.mxu0 0.0
    %1065 = vmatprep.subr.mxu0 0.0
    %1066 = vmatpush1.msra.mxu0 0.0
    %1067 = vmatprep.subr.mxu0 0.0
    %1068 = vmatpush1.msra.mxu0 0.0
    %1069 = vmatprep.subr.mxu0 0.0
    %1070 = vmatpush1.msra.mxu0 0.0
    %1071 = vmatprep.subr.mxu0 0.0
    %1072 = vmatpush1.msra.mxu0 0.0
    %1073 = vmatprep.subr.mxu0 0.0
    %1074 = vmatpush1.msra.mxu0 0.0
    %1075 = vmatprep.subr.mxu0 0.0
    %1076 = vmatpush1.msra.mxu0 %v1048
    %1077 = vmatprep.subr.mxu0 0.0
    %1078 = vmatpush1.msra.mxu0 %v1047
    %1079 = vmatprep.subr.mxu0 0.0
    %1080 = vmatpush1.msra.mxu0 %v1046
    %1081 = vmatprep.subr.mxu0 0.0
    %1082 = vmatpush1.msra.mxu0 %v1045
    %1083 = vmatprep.subr.mxu0 0.0
    %1084 = vmatpush2.msra.mxu0 0.0
    %1085 = vmatprep.subr.mxu0 0.0
    %1086 = vmatpush2.msra.mxu0 0.0
    %1087 = vmatprep.subr.mxu0 0.0
    %1088 = vmatpush2.msra.mxu0 0.0
    %1089 = vmatprep.subr.mxu0 0.0
    %1090 = vmatpush2.msra.mxu0 0.0
    %1091 = vmatprep.subr.mxu0 0.0
    %1092 = vmatpush2.msra.mxu0 0.0
    %1093 = vmatprep.subr.mxu0 0.0
    %1094 = vmatpush2.msra.mxu0 0.0
    %1095 = vmatprep.subr.mxu0 0.0
    %1096 = vmatpush2.msra.mxu0 0.0
    %1097 = vmatprep.subr.mxu0 0.0
    %1098 = vmatpush2.msra.mxu0 0.0
    %1099 = vmatprep.subr.mxu0 0.0
    %1100 = vmatpush2.msra.mxu0 0.0
    %1101 = vmatprep.subr.mxu0 0.0
    %1102 = vmatpush2.msra.mxu0 0.0
    %1103 = vmatprep.subr.mxu0 0.0
    %1104 = vmatpush2.msra.mxu0 0.0
    %1105 = vmatprep.subr.mxu0 0.0
    %1106 = vmatpush2.msra.mxu0 0.0
    %1107 = vmatprep.subr.mxu0 0.0
    %1108 = vmatpush2.msra.mxu0 0.0
    %1109 = vmatprep.subr.mxu0 0.0
    %1110 = vmatpush2.msra.mxu0 0.0
    %1111 = vmatprep.subr.mxu0 0.0
    %1112 = vmatpush2.msra.mxu0 0.0
    %1113 = vmatprep.subr.mxu0 0.0
    %1114 = vmatpush2.msra.mxu0 0.0
    %1115 = vmatprep.mubr.f32.mxu0 0.0
    %1116 = vmatmul.mubr.f32.gmra.mxu0 %v1049
    %v1117 = vpop.f32.mrf.mxu0
    %v1118 = vadd.f32 0.0, %v1117
    %v1119 = vpop.f32.mrf.mxu0
    %1120 = vdwg.mxu0
    %v1121 = vadd.f32 %v1044, %v1118
    %v1122 = vsub.f32 0.0, %v1121
    %v1123 = vmul.f32 %v1122, 1.442695
    %v1124 = vpow.pop %v1123
    %v1125 = vadd.f32 %v1124, 1.0
    %v1126 = vrcp.pop %v1125
    %v1127 = vtanh.pop %v1121
    %v1128 = vmul.f32 %v1126, %v924
    %1130 = vrot.lane.b32.xlu0 %v1127, 64
    %v1131 = vpop.permute.xlu0 %1130
    %v1133 = vmul.f32 %v1126, %v1131
    %1135 = vrot.lane.b32.xlu0 %v1133, 32
    %v1136 = vpop.permute.xlu0 %1135
    %v1138 = vadd.f32 %v1128, %v1136
    %v1139 = vtanh.pop %v1138
    %1141 = vrot.lane.b32.xlu0 %v1139, 64
    %v1142 = vpop.permute.xlu0 %1141
    %v1144 = vmul.f32 %v1126, %v1142
    %1146 = vrot.lane.b32.xlu0 %v1144, 32
    %v1147 = vpop.permute.xlu0 %1146
    %s1149 = scalar_lea.vmem [#allocation25], 6
    %1150 = vst.msk [vmem:[%s1149] sm:$0x3] %vm502, %v1147
    %v1151 = vld [vmem:[#allocation7 + $0x8] sm:$0x3]
    %v1152 = vld [vmem:[#allocation23] sm:$0xff]
    %v1153 = vld [vmem:[#allocation23 + $0x8] sm:$0xff]
    %v1154 = vld [vmem:[#allocation23 + $0x10] sm:$0xff]
    %v1155 = vld [vmem:[#allocation23 + $0x18] sm:$0xff]
    %v1156 = vsel %vm396, %v1040, 0
    %1158 = vmatprep.subr.mxu0 0.0
    %1159 = vmatpush1.msra.mxu0 0.0
    %1160 = vmatprep.subr.mxu0 0.0
    %1161 = vmatpush1.msra.mxu0 0.0
    %1162 = vmatprep.subr.mxu0 0.0
    %1163 = vmatpush1.msra.mxu0 0.0
    %1164 = vmatprep.subr.mxu0 0.0
    %1165 = vmatpush1.msra.mxu0 0.0
    %1166 = vmatprep.subr.mxu0 0.0
    %1167 = vmatpush1.msra.mxu0 0.0
    %1168 = vmatprep.subr.mxu0 0.0
    %1169 = vmatpush1.msra.mxu0 0.0
    %1170 = vmatprep.subr.mxu0 0.0
    %1171 = vmatpush1.msra.mxu0 0.0
    %1172 = vmatprep.subr.mxu0 0.0
    %1173 = vmatpush1.msra.mxu0 0.0
    %1174 = vmatprep.subr.mxu0 0.0
    %1175 = vmatpush1.msra.mxu0 0.0
    %1176 = vmatprep.subr.mxu0 0.0
    %1177 = vmatpush1.msra.mxu0 0.0
    %1178 = vmatprep.subr.mxu0 0.0
    %1179 = vmatpush1.msra.mxu0 0.0
    %1180 = vmatprep.subr.mxu0 0.0
    %1181 = vmatpush1.msra.mxu0 0.0
    %1182 = vmatprep.subr.mxu0 0.0
    %1183 = vmatpush1.msra.mxu0 %v1155
    %1184 = vmatprep.subr.mxu0 0.0
    %1185 = vmatpush1.msra.mxu0 %v1154
    %1186 = vmatprep.subr.mxu0 0.0
    %1187 = vmatpush1.msra.mxu0 %v1153
    %1188 = vmatprep.subr.mxu0 0.0
    %1189 = vmatpush1.msra.mxu0 %v1152
    %1190 = vmatprep.subr.mxu0 0.0
    %1191 = vmatpush2.msra.mxu0 0.0
    %1192 = vmatprep.subr.mxu0 0.0
    %1193 = vmatpush2.msra.mxu0 0.0
    %1194 = vmatprep.subr.mxu0 0.0
    %1195 = vmatpush2.msra.mxu0 0.0
    %1196 = vmatprep.subr.mxu0 0.0
    %1197 = vmatpush2.msra.mxu0 0.0
    %1198 = vmatprep.subr.mxu0 0.0
    %1199 = vmatpush2.msra.mxu0 0.0
    %1200 = vmatprep.subr.mxu0 0.0
    %1201 = vmatpush2.msra.mxu0 0.0
    %1202 = vmatprep.subr.mxu0 0.0
    %1203 = vmatpush2.msra.mxu0 0.0
    %1204 = vmatprep.subr.mxu0 0.0
    %1205 = vmatpush2.msra.mxu0 0.0
    %1206 = vmatprep.subr.mxu0 0.0
    %1207 = vmatpush2.msra.mxu0 0.0
    %1208 = vmatprep.subr.mxu0 0.0
    %1209 = vmatpush2.msra.mxu0 0.0
    %1210 = vmatprep.subr.mxu0 0.0
    %1211 = vmatpush2.msra.mxu0 0.0
    %1212 = vmatprep.subr.mxu0 0.0
    %1213 = vmatpush2.msra.mxu0 0.0
    %1214 = vmatprep.subr.mxu0 0.0
    %1215 = vmatpush2.msra.mxu0 0.0
    %1216 = vmatprep.subr.mxu0 0.0
    %1217 = vmatpush2.msra.mxu0 0.0
    %1218 = vmatprep.subr.mxu0 0.0
    %1219 = vmatpush2.msra.mxu0 0.0
    %1220 = vmatprep.subr.mxu0 0.0
    %1221 = vmatpush2.msra.mxu0 0.0
    %1222 = vmatprep.mubr.f32.mxu0 0.0
    %1223 = vmatmul.mubr.f32.gmra.mxu0 %v1156
    %v1224 = vpop.f32.mrf.mxu0
    %v1225 = vadd.f32 0.0, %v1224
    %v1226 = vpop.f32.mrf.mxu0
    %1227 = vdwg.mxu0
    %v1228 = vadd.f32 %v1151, %v1225
    %v1229 = vsub.f32 0.0, %v1228
    %v1230 = vmul.f32 %v1229, 1.442695
    %v1231 = vpow.pop %v1230
    %v1232 = vadd.f32 %v1231, 1.0
    %v1233 = vrcp.pop %v1232
    %v1234 = vtanh.pop %v1228
    %v1235 = vmul.f32 %v1233, %v1031
    %1237 = vrot.lane.b32.xlu0 %v1234, 64
    %v1238 = vpop.permute.xlu0 %1237
    %v1240 = vmul.f32 %v1233, %v1238
    %1242 = vrot.lane.b32.xlu0 %v1240, 32
    %v1243 = vpop.permute.xlu0 %1242
    %v1245 = vadd.f32 %v1235, %v1243
    %v1246 = vtanh.pop %v1245
    %1248 = vrot.lane.b32.xlu0 %v1246, 64
    %v1249 = vpop.permute.xlu0 %1248
    %v1251 = vmul.f32 %v1233, %v1249
    %1253 = vrot.lane.b32.xlu0 %v1251, 32
    %v1254 = vpop.permute.xlu0 %1253
    %s1256 = scalar_lea.vmem [#allocation29], 8
    %1257 = vst.msk [vmem:[%s1256] sm:$0x3] %vm502, %v1254
    %v1258 = vld [vmem:[#allocation4 + $0x8] sm:$0x3]
    %v1259 = vld [vmem:[#allocation16] sm:$0xff]
    %v1260 = vld [vmem:[#allocation16 + $0x8] sm:$0xff]
    %v1261 = vld [vmem:[#allocation16 + $0x10] sm:$0xff]
    %v1262 = vld [vmem:[#allocation16 + $0x18] sm:$0xff]
    %v1263 = vsel %vm396, %v1147, 0
    %1265 = vmatprep.subr.mxu0 0.0
    %1266 = vmatpush1.msra.mxu0 0.0
    %1267 = vmatprep.subr.mxu0 0.0
    %1268 = vmatpush1.msra.mxu0 0.0
    %1269 = vmatprep.subr.mxu0 0.0
    %1270 = vmatpush1.msra.mxu0 0.0
    %1271 = vmatprep.subr.mxu0 0.0
    %1272 = vmatpush1.msra.mxu0 0.0
    %1273 = vmatprep.subr.mxu0 0.0
    %1274 = vmatpush1.msra.mxu0 0.0
    %1275 = vmatprep.subr.mxu0 0.0
    %1276 = vmatpush1.msra.mxu0 0.0
    %1277 = vmatprep.subr.mxu0 0.0
    %1278 = vmatpush1.msra.mxu0 0.0
    %1279 = vmatprep.subr.mxu0 0.0
    %1280 = vmatpush1.msra.mxu0 0.0
    %1281 = vmatprep.subr.mxu0 0.0
    %1282 = vmatpush1.msra.mxu0 0.0
    %1283 = vmatprep.subr.mxu0 0.0
    %1284 = vmatpush1.msra.mxu0 0.0
    %1285 = vmatprep.subr.mxu0 0.0
    %1286 = vmatpush1.msra.mxu0 0.0
    %1287 = vmatprep.subr.mxu0 0.0
    %1288 = vmatpush1.msra.mxu0 0.0
    %1289 = vmatprep.subr.mxu0 0.0
    %1290 = vmatpush1.msra.mxu0 %v1262
    %1291 = vmatprep.subr.mxu0 0.0
    %1292 = vmatpush1.msra.mxu0 %v1261
    %1293 = vmatprep.subr.mxu0 0.0
    %1294 = vmatpush1.msra.mxu0 %v1260
    %1295 = vmatprep.subr.mxu0 0.0
    %1296 = vmatpush1.msra.mxu0 %v1259
    %1297 = vmatprep.subr.mxu0 0.0
    %1298 = vmatpush2.msra.mxu0 0.0
    %1299 = vmatprep.subr.mxu0 0.0
    %1300 = vmatpush2.msra.mxu0 0.0
    %1301 = vmatprep.subr.mxu0 0.0
    %1302 = vmatpush2.msra.mxu0 0.0
    %1303 = vmatprep.subr.mxu0 0.0
    %1304 = vmatpush2.msra.mxu0 0.0
    %1305 = vmatprep.subr.mxu0 0.0
    %1306 = vmatpush2.msra.mxu0 0.0
    %1307 = vmatprep.subr.mxu0 0.0
    %1308 = vmatpush2.msra.mxu0 0.0
    %1309 = vmatprep.subr.mxu0 0.0
    %1310 = vmatpush2.msra.mxu0 0.0
    %1311 = vmatprep.subr.mxu0 0.0
    %1312 = vmatpush2.msra.mxu0 0.0
    %1313 = vmatprep.subr.mxu0 0.0
    %1314 = vmatpush2.msra.mxu0 0.0
    %1315 = vmatprep.subr.mxu0 0.0
    %1316 = vmatpush2.msra.mxu0 0.0
    %1317 = vmatprep.subr.mxu0 0.0
    %1318 = vmatpush2.msra.mxu0 0.0
    %1319 = vmatprep.subr.mxu0 0.0
    %1320 = vmatpush2.msra.mxu0 0.0
    %1321 = vmatprep.subr.mxu0 0.0
    %1322 = vmatpush2.msra.mxu0 0.0
    %1323 = vmatprep.subr.mxu0 0.0
    %1324 = vmatpush2.msra.mxu0 0.0
    %1325 = vmatprep.subr.mxu0 0.0
    %1326 = vmatpush2.msra.mxu0 0.0
    %1327 = vmatprep.subr.mxu0 0.0
    %1328 = vmatpush2.msra.mxu0 0.0
    %1329 = vmatprep.mubr.f32.mxu0 0.0
    %1330 = vmatmul.mubr.f32.gmra.mxu0 %v1263
    %v1331 = vpop.f32.mrf.mxu0
    %v1332 = vadd.f32 0.0, %v1331
    %v1333 = vpop.f32.mrf.mxu0
    %1334 = vdwg.mxu0
    %v1335 = vadd.f32 %v1258, %v1332
    %v1336 = vsub.f32 0.0, %v1335
    %v1337 = vmul.f32 %v1336, 1.442695
    %v1338 = vpow.pop %v1337
    %v1339 = vadd.f32 %v1338, 1.0
    %v1340 = vrcp.pop %v1339
    %v1341 = vtanh.pop %v1335
    %v1342 = vmul.f32 %v1340, %v1138
    %1344 = vrot.lane.b32.xlu0 %v1341, 64
    %v1345 = vpop.permute.xlu0 %1344
    %v1347 = vmul.f32 %v1340, %v1345
    %1349 = vrot.lane.b32.xlu0 %v1347, 32
    %v1350 = vpop.permute.xlu0 %1349
    %v1352 = vadd.f32 %v1342, %v1350
    %v1353 = vtanh.pop %v1352
    %1355 = vrot.lane.b32.xlu0 %v1353, 64
    %v1356 = vpop.permute.xlu0 %1355
    %v1358 = vmul.f32 %v1340, %v1356
    %1360 = vrot.lane.b32.xlu0 %v1358, 32
    %v1361 = vpop.permute.xlu0 %1360
    %s1363 = scalar_lea.vmem [#allocation25], 8
    %1364 = vst.msk [vmem:[%s1363] sm:$0x3] %vm502, %v1361
    %v1365 = vld [vmem:[#allocation7 + $0x6] sm:$0x3]
    %v1366 = vld [vmem:[#allocation23] sm:$0xff]
    %v1367 = vld [vmem:[#allocation23 + $0x8] sm:$0xff]
    %v1368 = vld [vmem:[#allocation23 + $0x10] sm:$0xff]
    %v1369 = vld [vmem:[#allocation23 + $0x18] sm:$0xff]
    %v1370 = vsel %vm396, %v1254, 0
    %1372 = vmatprep.subr.mxu0 0.0
    %1373 = vmatpush1.msra.mxu0 0.0
    %1374 = vmatprep.subr.mxu0 0.0
    %1375 = vmatpush1.msra.mxu0 0.0
    %1376 = vmatprep.subr.mxu0 0.0
    %1377 = vmatpush1.msra.mxu0 0.0
    %1378 = vmatprep.subr.mxu0 0.0
    %1379 = vmatpush1.msra.mxu0 0.0
    %1380 = vmatprep.subr.mxu0 0.0
    %1381 = vmatpush1.msra.mxu0 0.0
    %1382 = vmatprep.subr.mxu0 0.0
    %1383 = vmatpush1.msra.mxu0 0.0
    %1384 = vmatprep.subr.mxu0 0.0
    %1385 = vmatpush1.msra.mxu0 0.0
    %1386 = vmatprep.subr.mxu0 0.0
    %1387 = vmatpush1.msra.mxu0 0.0
    %1388 = vmatprep.subr.mxu0 0.0
    %1389 = vmatpush1.msra.mxu0 0.0
    %1390 = vmatprep.subr.mxu0 0.0
    %1391 = vmatpush1.msra.mxu0 0.0
    %1392 = vmatprep.subr.mxu0 0.0
    %1393 = vmatpush1.msra.mxu0 0.0
    %1394 = vmatprep.subr.mxu0 0.0
    %1395 = vmatpush1.msra.mxu0 0.0
    %1396 = vmatprep.subr.mxu0 0.0
    %1397 = vmatpush1.msra.mxu0 %v1369
    %1398 = vmatprep.subr.mxu0 0.0
    %1399 = vmatpush1.msra.mxu0 %v1368
    %1400 = vmatprep.subr.mxu0 0.0
    %1401 = vmatpush1.msra.mxu0 %v1367
    %1402 = vmatprep.subr.mxu0 0.0
    %1403 = vmatpush1.msra.mxu0 %v1366
    %1404 = vmatprep.subr.mxu0 0.0
    %1405 = vmatpush2.msra.mxu0 0.0
    %1406 = vmatprep.subr.mxu0 0.0
    %1407 = vmatpush2.msra.mxu0 0.0
    %1408 = vmatprep.subr.mxu0 0.0
    %1409 = vmatpush2.msra.mxu0 0.0
    %1410 = vmatprep.subr.mxu0 0.0
    %1411 = vmatpush2.msra.mxu0 0.0
    %1412 = vmatprep.subr.mxu0 0.0
    %1413 = vmatpush2.msra.mxu0 0.0
    %1414 = vmatprep.subr.mxu0 0.0
    %1415 = vmatpush2.msra.mxu0 0.0
    %1416 = vmatprep.subr.mxu0 0.0
    %1417 = vmatpush2.msra.mxu0 0.0
    %1418 = vmatprep.subr.mxu0 0.0
    %1419 = vmatpush2.msra.mxu0 0.0
    %1420 = vmatprep.subr.mxu0 0.0
    %1421 = vmatpush2.msra.mxu0 0.0
    %1422 = vmatprep.subr.mxu0 0.0
    %1423 = vmatpush2.msra.mxu0 0.0
    %1424 = vmatprep.subr.mxu0 0.0
    %1425 = vmatpush2.msra.mxu0 0.0
    %1426 = vmatprep.subr.mxu0 0.0
    %1427 = vmatpush2.msra.mxu0 0.0
    %1428 = vmatprep.subr.mxu0 0.0
    %1429 = vmatpush2.msra.mxu0 0.0
    %1430 = vmatprep.subr.mxu0 0.0
    %1431 = vmatpush2.msra.mxu0 0.0
    %1432 = vmatprep.subr.mxu0 0.0
    %1433 = vmatpush2.msra.mxu0 0.0
    %1434 = vmatprep.subr.mxu0 0.0
    %1435 = vmatpush2.msra.mxu0 0.0
    %1436 = vmatprep.mubr.f32.mxu0 0.0
    %1437 = vmatmul.mubr.f32.gmra.mxu0 %v1370
    %v1438 = vpop.f32.mrf.mxu0
    %v1439 = vadd.f32 0.0, %v1438
    %v1440 = vpop.f32.mrf.mxu0
    %1441 = vdwg.mxu0
    %v1442 = vadd.f32 %v1365, %v1439
    %v1443 = vsub.f32 0.0, %v1442
    %v1444 = vmul.f32 %v1443, 1.442695
    %v1445 = vpow.pop %v1444
    %v1446 = vadd.f32 %v1445, 1.0
    %v1447 = vrcp.pop %v1446
    %v1448 = vtanh.pop %v1442
    %v1449 = vmul.f32 %v1447, %v1245
    %1451 = vrot.lane.b32.xlu0 %v1448, 64
    %v1452 = vpop.permute.xlu0 %1451
    %v1454 = vmul.f32 %v1447, %v1452
    %1456 = vrot.lane.b32.xlu0 %v1454, 32
    %v1457 = vpop.permute.xlu0 %1456
    %v1459 = vadd.f32 %v1449, %v1457
    %v1460 = vtanh.pop %v1459
    %1462 = vrot.lane.b32.xlu0 %v1460, 64
    %v1463 = vpop.permute.xlu0 %1462
    %v1465 = vmul.f32 %v1447, %v1463
    %1467 = vrot.lane.b32.xlu0 %v1465, 32
    %v1468 = vpop.permute.xlu0 %1467
    %s1470 = scalar_lea.vmem [#allocation29], 6
    %1471 = vst.msk [vmem:[%s1470] sm:$0x3] %vm502, %v1468
    %v1472 = vld [vmem:[#allocation4 + $0xa] sm:$0x3]
    %v1473 = vld [vmem:[#allocation16] sm:$0xff]
    %v1474 = vld [vmem:[#allocation16 + $0x8] sm:$0xff]
    %v1475 = vld [vmem:[#allocation16 + $0x10] sm:$0xff]
    %v1476 = vld [vmem:[#allocation16 + $0x18] sm:$0xff]
    %v1477 = vsel %vm396, %v1361, 0
    %1479 = vmatprep.subr.mxu0 0.0
    %1480 = vmatpush1.msra.mxu0 0.0
    %1481 = vmatprep.subr.mxu0 0.0
    %1482 = vmatpush1.msra.mxu0 0.0
    %1483 = vmatprep.subr.mxu0 0.0
    %1484 = vmatpush1.msra.mxu0 0.0
    %1485 = vmatprep.subr.mxu0 0.0
    %1486 = vmatpush1.msra.mxu0 0.0
    %1487 = vmatprep.subr.mxu0 0.0
    %1488 = vmatpush1.msra.mxu0 0.0
    %1489 = vmatprep.subr.mxu0 0.0
    %1490 = vmatpush1.msra.mxu0 0.0
    %1491 = vmatprep.subr.mxu0 0.0
    %1492 = vmatpush1.msra.mxu0 0.0
    %1493 = vmatprep.subr.mxu0 0.0
    %1494 = vmatpush1.msra.mxu0 0.0
    %1495 = vmatprep.subr.mxu0 0.0
    %1496 = vmatpush1.msra.mxu0 0.0
    %1497 = vmatprep.subr.mxu0 0.0
    %1498 = vmatpush1.msra.mxu0 0.0
    %1499 = vmatprep.subr.mxu0 0.0
    %1500 = vmatpush1.msra.mxu0 0.0
    %1501 = vmatprep.subr.mxu0 0.0
    %1502 = vmatpush1.msra.mxu0 0.0
    %1503 = vmatprep.subr.mxu0 0.0
    %1504 = vmatpush1.msra.mxu0 %v1476
    %1505 = vmatprep.subr.mxu0 0.0
    %1506 = vmatpush1.msra.mxu0 %v1475
    %1507 = vmatprep.subr.mxu0 0.0
    %1508 = vmatpush1.msra.mxu0 %v1474
    %1509 = vmatprep.subr.mxu0 0.0
    %1510 = vmatpush1.msra.mxu0 %v1473
    %1511 = vmatprep.subr.mxu0 0.0
    %1512 = vmatpush2.msra.mxu0 0.0
    %1513 = vmatprep.subr.mxu0 0.0
    %1514 = vmatpush2.msra.mxu0 0.0
    %1515 = vmatprep.subr.mxu0 0.0
    %1516 = vmatpush2.msra.mxu0 0.0
    %1517 = vmatprep.subr.mxu0 0.0
    %1518 = vmatpush2.msra.mxu0 0.0
    %1519 = vmatprep.subr.mxu0 0.0
    %1520 = vmatpush2.msra.mxu0 0.0
    %1521 = vmatprep.subr.mxu0 0.0
    %1522 = vmatpush2.msra.mxu0 0.0
    %1523 = vmatprep.subr.mxu0 0.0
    %1524 = vmatpush2.msra.mxu0 0.0
    %1525 = vmatprep.subr.mxu0 0.0
    %1526 = vmatpush2.msra.mxu0 0.0
    %1527 = vmatprep.subr.mxu0 0.0
    %1528 = vmatpush2.msra.mxu0 0.0
    %1529 = vmatprep.subr.mxu0 0.0
    %1530 = vmatpush2.msra.mxu0 0.0
    %1531 = vmatprep.subr.mxu0 0.0
    %1532 = vmatpush2.msra.mxu0 0.0
    %1533 = vmatprep.subr.mxu0 0.0
    %1534 = vmatpush2.msra.mxu0 0.0
    %1535 = vmatprep.subr.mxu0 0.0
    %1536 = vmatpush2.msra.mxu0 0.0
    %1537 = vmatprep.subr.mxu0 0.0
    %1538 = vmatpush2.msra.mxu0 0.0
    %1539 = vmatprep.subr.mxu0 0.0
    %1540 = vmatpush2.msra.mxu0 0.0
    %1541 = vmatprep.subr.mxu0 0.0
    %1542 = vmatpush2.msra.mxu0 0.0
    %1543 = vmatprep.mubr.f32.mxu0 0.0
    %1544 = vmatmul.mubr.f32.gmra.mxu0 %v1477
    %v1545 = vpop.f32.mrf.mxu0
    %v1546 = vadd.f32 0.0, %v1545
    %v1547 = vpop.f32.mrf.mxu0
    %1548 = vdwg.mxu0
    %v1549 = vadd.f32 %v1472, %v1546
    %v1550 = vsub.f32 0.0, %v1549
    %v1551 = vmul.f32 %v1550, 1.442695
    %v1552 = vpow.pop %v1551
    %v1553 = vadd.f32 %v1552, 1.0
    %v1554 = vrcp.pop %v1553
    %v1555 = vtanh.pop %v1549
    %v1556 = vmul.f32 %v1554, %v1352
    %1558 = vrot.lane.b32.xlu0 %v1555, 64
    %v1559 = vpop.permute.xlu0 %1558
    %v1561 = vmul.f32 %v1554, %v1559
    %1563 = vrot.lane.b32.xlu0 %v1561, 32
    %v1564 = vpop.permute.xlu0 %1563
    %v1566 = vadd.f32 %v1556, %v1564
    %v1567 = vtanh.pop %v1566
    %1569 = vrot.lane.b32.xlu0 %v1567, 64
    %v1570 = vpop.permute.xlu0 %1569
    %v1572 = vmul.f32 %v1554, %v1570
    %1574 = vrot.lane.b32.xlu0 %v1572, 32
    %v1575 = vpop.permute.xlu0 %1574
    %s1577 = scalar_lea.vmem [#allocation25], 10
    %1578 = vst.msk [vmem:[%s1577] sm:$0x3] %vm502, %v1575
    %v1579 = vld [vmem:[#allocation7 + $0x4] sm:$0x3]
    %v1580 = vld [vmem:[#allocation23] sm:$0xff]
    %v1581 = vld [vmem:[#allocation23 + $0x8] sm:$0xff]
    %v1582 = vld [vmem:[#allocation23 + $0x10] sm:$0xff]
    %v1583 = vld [vmem:[#allocation23 + $0x18] sm:$0xff]
    %v1584 = vsel %vm396, %v1468, 0
    %1586 = vmatprep.subr.mxu0 0.0
    %1587 = vmatpush1.msra.mxu0 0.0
    %1588 = vmatprep.subr.mxu0 0.0
    %1589 = vmatpush1.msra.mxu0 0.0
    %1590 = vmatprep.subr.mxu0 0.0
    %1591 = vmatpush1.msra.mxu0 0.0
    %1592 = vmatprep.subr.mxu0 0.0
    %1593 = vmatpush1.msra.mxu0 0.0
    %1594 = vmatprep.subr.mxu0 0.0
    %1595 = vmatpush1.msra.mxu0 0.0
    %1596 = vmatprep.subr.mxu0 0.0
    %1597 = vmatpush1.msra.mxu0 0.0
    %1598 = vmatprep.subr.mxu0 0.0
    %1599 = vmatpush1.msra.mxu0 0.0
    %1600 = vmatprep.subr.mxu0 0.0
    %1601 = vmatpush1.msra.mxu0 0.0
    %1602 = vmatprep.subr.mxu0 0.0
    %1603 = vmatpush1.msra.mxu0 0.0
    %1604 = vmatprep.subr.mxu0 0.0
    %1605 = vmatpush1.msra.mxu0 0.0
    %1606 = vmatprep.subr.mxu0 0.0
    %1607 = vmatpush1.msra.mxu0 0.0
    %1608 = vmatprep.subr.mxu0 0.0
    %1609 = vmatpush1.msra.mxu0 0.0
    %1610 = vmatprep.subr.mxu0 0.0
    %1611 = vmatpush1.msra.mxu0 %v1583
    %1612 = vmatprep.subr.mxu0 0.0
    %1613 = vmatpush1.msra.mxu0 %v1582
    %1614 = vmatprep.subr.mxu0 0.0
    %1615 = vmatpush1.msra.mxu0 %v1581
    %1616 = vmatprep.subr.mxu0 0.0
    %1617 = vmatpush1.msra.mxu0 %v1580
    %1618 = vmatprep.subr.mxu0 0.0
    %1619 = vmatpush2.msra.mxu0 0.0
    %1620 = vmatprep.subr.mxu0 0.0
    %1621 = vmatpush2.msra.mxu0 0.0
    %1622 = vmatprep.subr.mxu0 0.0
    %1623 = vmatpush2.msra.mxu0 0.0
    %1624 = vmatprep.subr.mxu0 0.0
    %1625 = vmatpush2.msra.mxu0 0.0
    %1626 = vmatprep.subr.mxu0 0.0
    %1627 = vmatpush2.msra.mxu0 0.0
    %1628 = vmatprep.subr.mxu0 0.0
    %1629 = vmatpush2.msra.mxu0 0.0
    %1630 = vmatprep.subr.mxu0 0.0
    %1631 = vmatpush2.msra.mxu0 0.0
    %1632 = vmatprep.subr.mxu0 0.0
    %1633 = vmatpush2.msra.mxu0 0.0
    %1634 = vmatprep.subr.mxu0 0.0
    %1635 = vmatpush2.msra.mxu0 0.0
    %1636 = vmatprep.subr.mxu0 0.0
    %1637 = vmatpush2.msra.mxu0 0.0
    %1638 = vmatprep.subr.mxu0 0.0
    %1639 = vmatpush2.msra.mxu0 0.0
    %1640 = vmatprep.subr.mxu0 0.0
    %1641 = vmatpush2.msra.mxu0 0.0
    %1642 = vmatprep.subr.mxu0 0.0
    %1643 = vmatpush2.msra.mxu0 0.0
    %1644 = vmatprep.subr.mxu0 0.0
    %1645 = vmatpush2.msra.mxu0 0.0
    %1646 = vmatprep.subr.mxu0 0.0
    %1647 = vmatpush2.msra.mxu0 0.0
    %1648 = vmatprep.subr.mxu0 0.0
    %1649 = vmatpush2.msra.mxu0 0.0
    %1650 = vmatprep.mubr.f32.mxu0 0.0
    %1651 = vmatmul.mubr.f32.gmra.mxu0 %v1584
    %v1652 = vpop.f32.mrf.mxu0
    %v1653 = vadd.f32 0.0, %v1652
    %v1654 = vpop.f32.mrf.mxu0
    %1655 = vdwg.mxu0
    %v1656 = vadd.f32 %v1579, %v1653
    %v1657 = vsub.f32 0.0, %v1656
    %v1658 = vmul.f32 %v1657, 1.442695
    %v1659 = vpow.pop %v1658
    %v1660 = vadd.f32 %v1659, 1.0
    %v1661 = vrcp.pop %v1660
    %v1662 = vtanh.pop %v1656
    %v1663 = vmul.f32 %v1661, %v1459
    %1665 = vrot.lane.b32.xlu0 %v1662, 64
    %v1666 = vpop.permute.xlu0 %1665
    %v1668 = vmul.f32 %v1661, %v1666
    %1670 = vrot.lane.b32.xlu0 %v1668, 32
    %v1671 = vpop.permute.xlu0 %1670
    %v1673 = vadd.f32 %v1663, %v1671
    %v1674 = vtanh.pop %v1673
    %1676 = vrot.lane.b32.xlu0 %v1674, 64
    %v1677 = vpop.permute.xlu0 %1676
    %v1679 = vmul.f32 %v1661, %v1677
    %1681 = vrot.lane.b32.xlu0 %v1679, 32
    %v1682 = vpop.permute.xlu0 %1681
    %s1684 = scalar_lea.vmem [#allocation29], 4
    %1685 = vst.msk [vmem:[%s1684] sm:$0x3] %vm502, %v1682
    %v1686 = vld [vmem:[#allocation4 + $0xc] sm:$0x3]
    %v1687 = vld [vmem:[#allocation16] sm:$0xff]
    %v1688 = vld [vmem:[#allocation16 + $0x8] sm:$0xff]
    %v1689 = vld [vmem:[#allocation16 + $0x10] sm:$0xff]
    %v1690 = vld [vmem:[#allocation16 + $0x18] sm:$0xff]
    %v1691 = vsel %vm396, %v1575, 0
    %1693 = vmatprep.subr.mxu0 0.0
    %1694 = vmatpush1.msra.mxu0 0.0
    %1695 = vmatprep.subr.mxu0 0.0
    %1696 = vmatpush1.msra.mxu0 0.0
    %1697 = vmatprep.subr.mxu0 0.0
    %1698 = vmatpush1.msra.mxu0 0.0
    %1699 = vmatprep.subr.mxu0 0.0
    %1700 = vmatpush1.msra.mxu0 0.0
    %1701 = vmatprep.subr.mxu0 0.0
    %1702 = vmatpush1.msra.mxu0 0.0
    %1703 = vmatprep.subr.mxu0 0.0
    %1704 = vmatpush1.msra.mxu0 0.0
    %1705 = vmatprep.subr.mxu0 0.0
    %1706 = vmatpush1.msra.mxu0 0.0
    %1707 = vmatprep.subr.mxu0 0.0
    %1708 = vmatpush1.msra.mxu0 0.0
    %1709 = vmatprep.subr.mxu0 0.0
    %1710 = vmatpush1.msra.mxu0 0.0
    %1711 = vmatprep.subr.mxu0 0.0
    %1712 = vmatpush1.msra.mxu0 0.0
    %1713 = vmatprep.subr.mxu0 0.0
    %1714 = vmatpush1.msra.mxu0 0.0
    %1715 = vmatprep.subr.mxu0 0.0
    %1716 = vmatpush1.msra.mxu0 0.0
    %1717 = vmatprep.subr.mxu0 0.0
    %1718 = vmatpush1.msra.mxu0 %v1690
    %1719 = vmatprep.subr.mxu0 0.0
    %1720 = vmatpush1.msra.mxu0 %v1689
    %1721 = vmatprep.subr.mxu0 0.0
    %1722 = vmatpush1.msra.mxu0 %v1688
    %1723 = vmatprep.subr.mxu0 0.0
    %1724 = vmatpush1.msra.mxu0 %v1687
    %1725 = vmatprep.subr.mxu0 0.0
    %1726 = vmatpush2.msra.mxu0 0.0
    %1727 = vmatprep.subr.mxu0 0.0
    %1728 = vmatpush2.msra.mxu0 0.0
    %1729 = vmatprep.subr.mxu0 0.0
    %1730 = vmatpush2.msra.mxu0 0.0
    %1731 = vmatprep.subr.mxu0 0.0
    %1732 = vmatpush2.msra.mxu0 0.0
    %1733 = vmatprep.subr.mxu0 0.0
    %1734 = vmatpush2.msra.mxu0 0.0
    %1735 = vmatprep.subr.mxu0 0.0
    %1736 = vmatpush2.msra.mxu0 0.0
    %1737 = vmatprep.subr.mxu0 0.0
    %1738 = vmatpush2.msra.mxu0 0.0
    %1739 = vmatprep.subr.mxu0 0.0
    %1740 = vmatpush2.msra.mxu0 0.0
    %1741 = vmatprep.subr.mxu0 0.0
    %1742 = vmatpush2.msra.mxu0 0.0
    %1743 = vmatprep.subr.mxu0 0.0
    %1744 = vmatpush2.msra.mxu0 0.0
    %1745 = vmatprep.subr.mxu0 0.0
    %1746 = vmatpush2.msra.mxu0 0.0
    %1747 = vmatprep.subr.mxu0 0.0
    %1748 = vmatpush2.msra.mxu0 0.0
    %1749 = vmatprep.subr.mxu0 0.0
    %1750 = vmatpush2.msra.mxu0 0.0
    %1751 = vmatprep.subr.mxu0 0.0
    %1752 = vmatpush2.msra.mxu0 0.0
    %1753 = vmatprep.subr.mxu0 0.0
    %1754 = vmatpush2.msra.mxu0 0.0
    %1755 = vmatprep.subr.mxu0 0.0
    %1756 = vmatpush2.msra.mxu0 0.0
    %1757 = vmatprep.mubr.f32.mxu0 0.0
    %1758 = vmatmul.mubr.f32.gmra.mxu0 %v1691
    %v1759 = vpop.f32.mrf.mxu0
    %v1760 = vadd.f32 0.0, %v1759
    %v1761 = vpop.f32.mrf.mxu0
    %1762 = vdwg.mxu0
    %v1763 = vadd.f32 %v1686, %v1760
    %v1764 = vsub.f32 0.0, %v1763
    %v1765 = vmul.f32 %v1764, 1.442695
    %v1766 = vpow.pop %v1765
    %v1767 = vadd.f32 %v1766, 1.0
    %v1768 = vrcp.pop %v1767
    %v1769 = vtanh.pop %v1763
    %v1770 = vmul.f32 %v1768, %v1566
    %1772 = vrot.lane.b32.xlu0 %v1769, 64
    %v1773 = vpop.permute.xlu0 %1772
    %v1775 = vmul.f32 %v1768, %v1773
    %1777 = vrot.lane.b32.xlu0 %v1775, 32
    %v1778 = vpop.permute.xlu0 %1777
    %v1780 = vadd.f32 %v1770, %v1778
    %v1781 = vtanh.pop %v1780
    %1783 = vrot.lane.b32.xlu0 %v1781, 64
    %v1784 = vpop.permute.xlu0 %1783
    %v1786 = vmul.f32 %v1768, %v1784
    %1788 = vrot.lane.b32.xlu0 %v1786, 32
    %v1789 = vpop.permute.xlu0 %1788
    %s1791 = scalar_lea.vmem [#allocation25], 12
    %1792 = vst.msk [vmem:[%s1791] sm:$0x3] %vm502, %v1789
    %v1793 = vld [vmem:[#allocation7 + $0x2] sm:$0x3]
    %v1794 = vld [vmem:[#allocation23] sm:$0xff]
    %v1795 = vld [vmem:[#allocation23 + $0x8] sm:$0xff]
    %v1796 = vld [vmem:[#allocation23 + $0x10] sm:$0xff]
    %v1797 = vld [vmem:[#allocation23 + $0x18] sm:$0xff]
    %v1798 = vsel %vm396, %v1682, 0
    %1800 = vmatprep.subr.mxu0 0.0
    %1801 = vmatpush1.msra.mxu0 0.0
    %1802 = vmatprep.subr.mxu0 0.0
    %1803 = vmatpush1.msra.mxu0 0.0
    %1804 = vmatprep.subr.mxu0 0.0
    %1805 = vmatpush1.msra.mxu0 0.0
    %1806 = vmatprep.subr.mxu0 0.0
    %1807 = vmatpush1.msra.mxu0 0.0
    %1808 = vmatprep.subr.mxu0 0.0
    %1809 = vmatpush1.msra.mxu0 0.0
    %1810 = vmatprep.subr.mxu0 0.0
    %1811 = vmatpush1.msra.mxu0 0.0
    %1812 = vmatprep.subr.mxu0 0.0
    %1813 = vmatpush1.msra.mxu0 0.0
    %1814 = vmatprep.subr.mxu0 0.0
    %1815 = vmatpush1.msra.mxu0 0.0
    %1816 = vmatprep.subr.mxu0 0.0
    %1817 = vmatpush1.msra.mxu0 0.0
    %1818 = vmatprep.subr.mxu0 0.0
    %1819 = vmatpush1.msra.mxu0 0.0
    %1820 = vmatprep.subr.mxu0 0.0
    %1821 = vmatpush1.msra.mxu0 0.0
    %1822 = vmatprep.subr.mxu0 0.0
    %1823 = vmatpush1.msra.mxu0 0.0
    %1824 = vmatprep.subr.mxu0 0.0
    %1825 = vmatpush1.msra.mxu0 %v1797
    %1826 = vmatprep.subr.mxu0 0.0
    %1827 = vmatpush1.msra.mxu0 %v1796
    %1828 = vmatprep.subr.mxu0 0.0
    %1829 = vmatpush1.msra.mxu0 %v1795
    %1830 = vmatprep.subr.mxu0 0.0
    %1831 = vmatpush1.msra.mxu0 %v1794
    %1832 = vmatprep.subr.mxu0 0.0
    %1833 = vmatpush2.msra.mxu0 0.0
    %1834 = vmatprep.subr.mxu0 0.0
    %1835 = vmatpush2.msra.mxu0 0.0
    %1836 = vmatprep.subr.mxu0 0.0
    %1837 = vmatpush2.msra.mxu0 0.0
    %1838 = vmatprep.subr.mxu0 0.0
    %1839 = vmatpush2.msra.mxu0 0.0
    %1840 = vmatprep.subr.mxu0 0.0
    %1841 = vmatpush2.msra.mxu0 0.0
    %1842 = vmatprep.subr.mxu0 0.0
    %1843 = vmatpush2.msra.mxu0 0.0
    %1844 = vmatprep.subr.mxu0 0.0
    %1845 = vmatpush2.msra.mxu0 0.0
    %1846 = vmatprep.subr.mxu0 0.0
    %1847 = vmatpush2.msra.mxu0 0.0
    %1848 = vmatprep.subr.mxu0 0.0
    %1849 = vmatpush2.msra.mxu0 0.0
    %1850 = vmatprep.subr.mxu0 0.0
    %1851 = vmatpush2.msra.mxu0 0.0
    %1852 = vmatprep.subr.mxu0 0.0
    %1853 = vmatpush2.msra.mxu0 0.0
    %1854 = vmatprep.subr.mxu0 0.0
    %1855 = vmatpush2.msra.mxu0 0.0
    %1856 = vmatprep.subr.mxu0 0.0
    %1857 = vmatpush2.msra.mxu0 0.0
    %1858 = vmatprep.subr.mxu0 0.0
    %1859 = vmatpush2.msra.mxu0 0.0
    %1860 = vmatprep.subr.mxu0 0.0
    %1861 = vmatpush2.msra.mxu0 0.0
    %1862 = vmatprep.subr.mxu0 0.0
    %1863 = vmatpush2.msra.mxu0 0.0
    %1864 = vmatprep.mubr.f32.mxu0 0.0
    %1865 = vmatmul.mubr.f32.gmra.mxu0 %v1798
    %v1866 = vpop.f32.mrf.mxu0
    %v1867 = vadd.f32 0.0, %v1866
    %v1868 = vpop.f32.mrf.mxu0
    %1869 = vdwg.mxu0
    %v1870 = vadd.f32 %v1793, %v1867
    %v1871 = vsub.f32 0.0, %v1870
    %v1872 = vmul.f32 %v1871, 1.442695
    %v1873 = vpow.pop %v1872
    %v1874 = vadd.f32 %v1873, 1.0
    %v1875 = vrcp.pop %v1874
    %v1876 = vtanh.pop %v1870
    %v1877 = vmul.f32 %v1875, %v1673
    %1879 = vrot.lane.b32.xlu0 %v1876, 64
    %v1880 = vpop.permute.xlu0 %1879
    %v1882 = vmul.f32 %v1875, %v1880
    %1884 = vrot.lane.b32.xlu0 %v1882, 32
    %v1885 = vpop.permute.xlu0 %1884
    %v1887 = vadd.f32 %v1877, %v1885
    %v1888 = vtanh.pop %v1887
    %1890 = vrot.lane.b32.xlu0 %v1888, 64
    %v1891 = vpop.permute.xlu0 %1890
    %v1893 = vmul.f32 %v1875, %v1891
    %1895 = vrot.lane.b32.xlu0 %v1893, 32
    %v1896 = vpop.permute.xlu0 %1895
    %s1898 = scalar_lea.vmem [#allocation29], 2
    %1899 = vst.msk [vmem:[%s1898] sm:$0x3] %vm502, %v1896
    %v1900 = vld [vmem:[#allocation4 + $0xe] sm:$0x3]
    %v1901 = vld [vmem:[#allocation16] sm:$0xff]
    %v1902 = vld [vmem:[#allocation16 + $0x8] sm:$0xff]
    %v1903 = vld [vmem:[#allocation16 + $0x10] sm:$0xff]
    %v1904 = vld [vmem:[#allocation16 + $0x18] sm:$0xff]
    %v1905 = vsel %vm396, %v1789, 0
    %1907 = vmatprep.subr.mxu0 0.0
    %1908 = vmatpush1.msra.mxu0 0.0
    %1909 = vmatprep.subr.mxu0 0.0
    %1910 = vmatpush1.msra.mxu0 0.0
    %1911 = vmatprep.subr.mxu0 0.0
    %1912 = vmatpush1.msra.mxu0 0.0
    %1913 = vmatprep.subr.mxu0 0.0
    %1914 = vmatpush1.msra.mxu0 0.0
    %1915 = vmatprep.subr.mxu0 0.0
    %1916 = vmatpush1.msra.mxu0 0.0
    %1917 = vmatprep.subr.mxu0 0.0
    %1918 = vmatpush1.msra.mxu0 0.0
    %1919 = vmatprep.subr.mxu0 0.0
    %1920 = vmatpush1.msra.mxu0 0.0
    %1921 = vmatprep.subr.mxu0 0.0
    %1922 = vmatpush1.msra.mxu0 0.0
    %1923 = vmatprep.subr.mxu0 0.0
    %1924 = vmatpush1.msra.mxu0 0.0
    %1925 = vmatprep.subr.mxu0 0.0
    %1926 = vmatpush1.msra.mxu0 0.0
    %1927 = vmatprep.subr.mxu0 0.0
    %1928 = vmatpush1.msra.mxu0 0.0
    %1929 = vmatprep.subr.mxu0 0.0
    %1930 = vmatpush1.msra.mxu0 0.0
    %1931 = vmatprep.subr.mxu0 0.0
    %1932 = vmatpush1.msra.mxu0 %v1904
    %1933 = vmatprep.subr.mxu0 0.0
    %1934 = vmatpush1.msra.mxu0 %v1903
    %1935 = vmatprep.subr.mxu0 0.0
    %1936 = vmatpush1.msra.mxu0 %v1902
    %1937 = vmatprep.subr.mxu0 0.0
    %1938 = vmatpush1.msra.mxu0 %v1901
    %1939 = vmatprep.subr.mxu0 0.0
    %1940 = vmatpush2.msra.mxu0 0.0
    %1941 = vmatprep.subr.mxu0 0.0
    %1942 = vmatpush2.msra.mxu0 0.0
    %1943 = vmatprep.subr.mxu0 0.0
    %1944 = vmatpush2.msra.mxu0 0.0
    %1945 = vmatprep.subr.mxu0 0.0
    %1946 = vmatpush2.msra.mxu0 0.0
    %1947 = vmatprep.subr.mxu0 0.0
    %1948 = vmatpush2.msra.mxu0 0.0
    %1949 = vmatprep.subr.mxu0 0.0
    %1950 = vmatpush2.msra.mxu0 0.0
    %1951 = vmatprep.subr.mxu0 0.0
    %1952 = vmatpush2.msra.mxu0 0.0
    %1953 = vmatprep.subr.mxu0 0.0
    %1954 = vmatpush2.msra.mxu0 0.0
    %1955 = vmatprep.subr.mxu0 0.0
    %1956 = vmatpush2.msra.mxu0 0.0
    %1957 = vmatprep.subr.mxu0 0.0
    %1958 = vmatpush2.msra.mxu0 0.0
    %1959 = vmatprep.subr.mxu0 0.0
    %1960 = vmatpush2.msra.mxu0 0.0
    %1961 = vmatprep.subr.mxu0 0.0
    %1962 = vmatpush2.msra.mxu0 0.0
    %1963 = vmatprep.subr.mxu0 0.0
    %1964 = vmatpush2.msra.mxu0 0.0
    %1965 = vmatprep.subr.mxu0 0.0
    %1966 = vmatpush2.msra.mxu0 0.0
    %1967 = vmatprep.subr.mxu0 0.0
    %1968 = vmatpush2.msra.mxu0 0.0
    %1969 = vmatprep.subr.mxu0 0.0
    %1970 = vmatpush2.msra.mxu0 0.0
    %1971 = vmatprep.mubr.f32.mxu0 0.0
    %1972 = vmatmul.mubr.f32.gmra.mxu0 %v1905
    %v1973 = vpop.f32.mrf.mxu0
    %v1974 = vadd.f32 0.0, %v1973
    %v1975 = vpop.f32.mrf.mxu0
    %1976 = vdwg.mxu0
    %v1977 = vadd.f32 %v1900, %v1974
    %v1978 = vsub.f32 0.0, %v1977
    %v1979 = vmul.f32 %v1978, 1.442695
    %v1980 = vpow.pop %v1979
    %v1981 = vadd.f32 %v1980, 1.0
    %v1982 = vrcp.pop %v1981
    %v1983 = vtanh.pop %v1977
    %v1984 = vmul.f32 %v1982, %v1780
    %1986 = vrot.lane.b32.xlu0 %v1983, 64
    %v1987 = vpop.permute.xlu0 %1986
    %v1989 = vmul.f32 %v1982, %v1987
    %1991 = vrot.lane.b32.xlu0 %v1989, 32
    %v1992 = vpop.permute.xlu0 %1991
    %v1994 = vadd.f32 %v1984, %v1992
    %v1995 = vtanh.pop %v1994
    %1997 = vrot.lane.b32.xlu0 %v1995, 64
    %v1998 = vpop.permute.xlu0 %1997
    %v2000 = vmul.f32 %v1982, %v1998
    %2002 = vrot.lane.b32.xlu0 %v2000, 32
    %v2003 = vpop.permute.xlu0 %2002
    %s2005 = scalar_lea.vmem [#allocation25], 14
    %2006 = vst.msk [vmem:[%s2005] sm:$0x3] %vm502, %v2003
    %v2007 = vld [vmem:[#allocation7] sm:$0x3]
    %v2008 = vld [vmem:[#allocation23] sm:$0xff]
    %v2009 = vld [vmem:[#allocation23 + $0x8] sm:$0xff]
    %v2010 = vld [vmem:[#allocation23 + $0x10] sm:$0xff]
    %v2011 = vld [vmem:[#allocation23 + $0x18] sm:$0xff]
    %v2012 = vsel %vm396, %v1896, 0
    %2014 = vmatprep.subr.mxu0 0.0
    %2015 = vmatpush1.msra.mxu0 0.0
    %2016 = vmatprep.subr.mxu0 0.0
    %2017 = vmatpush1.msra.mxu0 0.0
    %2018 = vmatprep.subr.mxu0 0.0
    %2019 = vmatpush1.msra.mxu0 0.0
    %2020 = vmatprep.subr.mxu0 0.0
    %2021 = vmatpush1.msra.mxu0 0.0
    %2022 = vmatprep.subr.mxu0 0.0
    %2023 = vmatpush1.msra.mxu0 0.0
    %2024 = vmatprep.subr.mxu0 0.0
    %2025 = vmatpush1.msra.mxu0 0.0
    %2026 = vmatprep.subr.mxu0 0.0
    %2027 = vmatpush1.msra.mxu0 0.0
    %2028 = vmatprep.subr.mxu0 0.0
    %2029 = vmatpush1.msra.mxu0 0.0
    %2030 = vmatprep.subr.mxu0 0.0
    %2031 = vmatpush1.msra.mxu0 0.0
    %2032 = vmatprep.subr.mxu0 0.0
    %2033 = vmatpush1.msra.mxu0 0.0
    %2034 = vmatprep.subr.mxu0 0.0
    %2035 = vmatpush1.msra.mxu0 0.0
    %2036 = vmatprep.subr.mxu0 0.0
    %2037 = vmatpush1.msra.mxu0 0.0
    %2038 = vmatprep.subr.mxu0 0.0
    %2039 = vmatpush1.msra.mxu0 %v2011
    %2040 = vmatprep.subr.mxu0 0.0
    %2041 = vmatpush1.msra.mxu0 %v2010
    %2042 = vmatprep.subr.mxu0 0.0
    %2043 = vmatpush1.msra.mxu0 %v2009
    %2044 = vmatprep.subr.mxu0 0.0
    %2045 = vmatpush1.msra.mxu0 %v2008
    %2046 = vmatprep.subr.mxu0 0.0
    %2047 = vmatpush2.msra.mxu0 0.0
    %2048 = vmatprep.subr.mxu0 0.0
    %2049 = vmatpush2.msra.mxu0 0.0
    %2050 = vmatprep.subr.mxu0 0.0
    %2051 = vmatpush2.msra.mxu0 0.0
    %2052 = vmatprep.subr.mxu0 0.0
    %2053 = vmatpush2.msra.mxu0 0.0
    %2054 = vmatprep.subr.mxu0 0.0
    %2055 = vmatpush2.msra.mxu0 0.0
    %2056 = vmatprep.subr.mxu0 0.0
    %2057 = vmatpush2.msra.mxu0 0.0
    %2058 = vmatprep.subr.mxu0 0.0
    %2059 = vmatpush2.msra.mxu0 0.0
    %2060 = vmatprep.subr.mxu0 0.0
    %2061 = vmatpush2.msra.mxu0 0.0
    %2062 = vmatprep.subr.mxu0 0.0
    %2063 = vmatpush2.msra.mxu0 0.0
    %2064 = vmatprep.subr.mxu0 0.0
    %2065 = vmatpush2.msra.mxu0 0.0
    %2066 = vmatprep.subr.mxu0 0.0
    %2067 = vmatpush2.msra.mxu0 0.0
    %2068 = vmatprep.subr.mxu0 0.0
    %2069 = vmatpush2.msra.mxu0 0.0
    %2070 = vmatprep.subr.mxu0 0.0
    %2071 = vmatpush2.msra.mxu0 0.0
    %2072 = vmatprep.subr.mxu0 0.0
    %2073 = vmatpush2.msra.mxu0 0.0
    %2074 = vmatprep.subr.mxu0 0.0
    %2075 = vmatpush2.msra.mxu0 0.0
    %2076 = vmatprep.subr.mxu0 0.0
    %2077 = vmatpush2.msra.mxu0 0.0
    %2078 = vmatprep.mubr.f32.mxu0 0.0
    %2079 = vmatmul.mubr.f32.gmra.mxu0 %v2012
    %v2080 = vpop.f32.mrf.mxu0
    %v2081 = vadd.f32 0.0, %v2080
    %v2082 = vpop.f32.mrf.mxu0
    %2083 = vdwg.mxu0
    %v2084 = vadd.f32 %v2007, %v2081
    %v2085 = vsub.f32 0.0, %v2084
    %v2086 = vmul.f32 %v2085, 1.442695
    %v2087 = vpow.pop %v2086
    %v2088 = vadd.f32 %v2087, 1.0
    %v2089 = vrcp.pop %v2088
    %v2090 = vtanh.pop %v2084
    %v2091 = vmul.f32 %v2089, %v1887
    %2093 = vrot.lane.b32.xlu0 %v2090, 64
    %v2094 = vpop.permute.xlu0 %2093
    %v2096 = vmul.f32 %v2089, %v2094
    %2098 = vrot.lane.b32.xlu0 %v2096, 32
    %v2099 = vpop.permute.xlu0 %2098
    %v2101 = vadd.f32 %v2091, %v2099
    %v2102 = vtanh.pop %v2101
    %2104 = vrot.lane.b32.xlu0 %v2102, 64
    %v2105 = vpop.permute.xlu0 %2104
    %v2107 = vmul.f32 %v2089, %v2105
    %2109 = vrot.lane.b32.xlu0 %v2107, 32
    %v2110 = vpop.permute.xlu0 %2109
    %2112 = vst.msk [vmem:[#allocation29] sm:$0x3] %vm502, %v2110
    %2113 = vst.msk [vmem:[#allocation2] sm:$0x3] %vm502, %v2003
    %2115 = vrot.lane.b32.xlu0 %v1994, 96
    %v2116 = vpop.permute.xlu0 %2115
    %2118 = vst.msk [vmem:[#allocation3] sm:$0x3] %vm502, %v2116
    %2119 = vst.msk [vmem:[#allocation26] sm:$0x3] %vm502, %v2003
    %2120 = vst.msk [vmem:[#allocation28] sm:$0x3] %vm502, %v2116
    %2121 = vst.msk [vmem:[#allocation5] sm:$0x3] %vm502, %v2110
    %2123 = vrot.lane.b32.xlu0 %v2101, 96
    %v2124 = vpop.permute.xlu0 %2123
    %2126 = vst.msk [vmem:[#allocation6] sm:$0x3] %vm502, %v2124
    %2127 = vst.msk [vmem:[#allocation31] sm:$0x3] %vm502, %v2110
    %2128 = vst.msk [vmem:[#allocation32] sm:$0x3] %vm502, %v2124
    // Predicated region
    $region94: #{tpu_custom_call.1} parent=1 // pred_check
      _
    $region95: #{tpu_custom_call.1} parent=1 // pred_check_branch
      %2130 = sbr.rel (0) target = $region97
    $region96: #{tpu_custom_call.1} parent=1 // pred_region
      %s2132 = ssub.s32 256, 256
      %2133 = vsyncadd [#allocation10], %s2132
      %s2134 = sshll.u32 [#allocation25], 4
      %s2135 = int_to_ptr.vmem [resolvable:$true] %s2134
      %2140 = dma.vmem_to_hbm [thread:$0]  %s2135, 256, %s12, [#allocation10], 32, 32, 2
    $region97: #{tpu_custom_call.1} parent=1 // pred_fallthru
      _
    // Predicated region
    $region98: #{tpu_custom_call.1} parent=1 // pred_check
      _
    $region99: #{tpu_custom_call.1} parent=1 // pred_check_branch
      %2142 = sbr.rel (0) target = $region101
    $region100: #{tpu_custom_call.1} parent=1 // pred_region
      %s2144 = ssub.s32 32, 32
      %2145 = vsyncadd [#allocation27], %s2144
      %s2147 = sshll.u32 [#allocation26], 4
      %s2148 = int_to_ptr.vmem [resolvable:$true] %s2147
      %2150 = dma.vmem_to_hbm [thread:$0]  %s2148, 32, %s13, [#allocation27]
    $region101: #{tpu_custom_call.1} parent=1 // pred_fallthru
      _
    // Predicated region
    $region102: #{tpu_custom_call.1} parent=1 // pred_check
      _
    $region103: #{tpu_custom_call.1} parent=1 // pred_check_branch
      %2152 = sbr.rel (0) target = $region105
    $region104: #{tpu_custom_call.1} parent=1 // pred_region
      %s2154 = ssub.s32 32, 32
      %2155 = vsyncadd [#allocation27], %s2154
      %s2157 = sshll.u32 [#allocation28], 4
      %s2158 = int_to_ptr.vmem [resolvable:$true] %s2157
      %2160 = dma.vmem_to_hbm [thread:$0]  %s2158, 32, %s14, [#allocation27]
    $region105: #{tpu_custom_call.1} parent=1 // pred_fallthru
      _
    // Predicated region
    $region106: #{tpu_custom_call.1} parent=1 // pred_check
      _
    $region107: #{tpu_custom_call.1} parent=1 // pred_check_branch
      %2162 = sbr.rel (0) target = $region109
    $region108: #{tpu_custom_call.1} parent=1 // pred_region
      %s2163 = ssub.s32 0, 0
      %s2164 = smul.u32 8, %s2163
      %s2166 = ssub.s32 256, 256
      %2167 = vsyncadd [#allocation30], %s2166
      %s2168 = smul.addr %s2164, 32
      %s2169 = scalar_lea.hbm %s15, %s2168
      %s2170 = sshll.u32 [#allocation29], 4
      %s2171 = int_to_ptr.vmem [resolvable:$true] %s2170
      %2176 = dma.vmem_to_hbm [thread:$0]  %s2171, 256, %s2169, [#allocation30], 32, 32, 2
    $region109: #{tpu_custom_call.1} parent=1 // pred_fallthru
      _
    // Predicated region
    $region110: #{tpu_custom_call.1} parent=1 // pred_check
      _
    $region111: #{tpu_custom_call.1} parent=1 // pred_check_branch
      %2178 = sbr.rel (0) target = $region113
    $region112: #{tpu_custom_call.1} parent=1 // pred_region
      %s2180 = ssub.s32 32, 32
      %2181 = vsyncadd [#allocation30], %s2180
      %s2183 = sshll.u32 [#allocation31], 4
      %s2184 = int_to_ptr.vmem [resolvable:$true] %s2183
      %2186 = dma.vmem_to_hbm [thread:$0]  %s2184, 32, %s16, [#allocation30]
    $region113: #{tpu_custom_call.1} parent=1 // pred_fallthru
      _
    // Predicated region
    $region114: #{tpu_custom_call.1} parent=1 // pred_check
      _
    $region115: #{tpu_custom_call.1} parent=1 // pred_check_branch
      %2188 = sbr.rel (0) target = $region117
    $region116: #{tpu_custom_call.1} parent=1 // pred_region
      %s2190 = ssub.s32 32, 32
      %2191 = vsyncadd [#allocation33], %s2190
      %s2193 = sshll.u32 [#allocation32], 4
      %s2194 = int_to_ptr.vmem [resolvable:$true] %s2193
      %2196 = dma.vmem_to_hbm [thread:$0]  %s2194, 32, %s17, [#allocation33]
    $region117: #{tpu_custom_call.1} parent=1 // pred_fallthru
      _
    // Predicated region
    $region118: #{tpu_custom_call.1} parent=1 // pred_check
      _
    $region119: #{tpu_custom_call.1} parent=1 // pred_check_branch
      %2198 = sbr.rel (0) target = $region121
    $region120: #{tpu_custom_call.1} parent=1 // pred_region
      %2199 = dma.done [#allocation10], 256
    $region121: #{tpu_custom_call.1} parent=1 // pred_fallthru
      _
    // Predicated region
    $region122: #{tpu_custom_call.1} parent=1 // pred_check
      _
    $region123: #{tpu_custom_call.1} parent=1 // pred_check_branch
      %2201 = sbr.rel (0) target = $region125
    $region124: #{tpu_custom_call.1} parent=1 // pred_region
      %2202 = dma.done [#allocation27], 32
    $region125: #{tpu_custom_call.1} parent=1 // pred_fallthru
      _
    // Predicated region
    $region126: #{tpu_custom_call.1} parent=1 // pred_check
      _
    $region127: #{tpu_custom_call.1} parent=1 // pred_check_branch
      %2204 = sbr.rel (0) target = $region129
    $region128: #{tpu_custom_call.1} parent=1 // pred_region
      %2205 = dma.done [#allocation27], 32
    $region129: #{tpu_custom_call.1} parent=1 // pred_fallthru
      _
    // Predicated region
    $region130: #{tpu_custom_call.1} parent=1 // pred_check
      _
    $region131: #{tpu_custom_call.1} parent=1 // pred_check_branch
      %2207 = sbr.rel (0) target = $region133
    $region132: #{tpu_custom_call.1} parent=1 // pred_region
      %2208 = dma.done [#allocation30], 256
    $region133: #{tpu_custom_call.1} parent=1 // pred_fallthru
      _
    // Predicated region
    $region134: #{tpu_custom_call.1} parent=1 // pred_check
      _
    $region135: #{tpu_custom_call.1} parent=1 // pred_check_branch
      %2210 = sbr.rel (0) target = $region137
    $region136: #{tpu_custom_call.1} parent=1 // pred_region
      %2211 = dma.done [#allocation30], 32
    $region137: #{tpu_custom_call.1} parent=1 // pred_fallthru
      _
    // Predicated region
    $region138: #{tpu_custom_call.1} parent=1 // pred_check
      _
    $region139: #{tpu_custom_call.1} parent=1 // pred_check_branch
      %2213 = sbr.rel (0) target = $region141
    $region140: #{tpu_custom_call.1} parent=1 // pred_region
      %2214 = dma.done [#allocation33], 32
    $region141: #{tpu_custom_call.1} parent=1 // pred_fallthru
      _
    %2215 = vsyncpa [#allocation9], 1
    %2216 = vsyncpa [#allocation12], 1
    %2217 = vsyncpa [#allocation15], 1
    %2218 = vsyncpa [#allocation18], 1
    %2219 = vsyncpa [#allocation21], 1
    %2220 = vsyncpa [#allocation24], 1
    %2221 = vsyncpa [#allocation10], 1
    %2222 = vsyncpa [#allocation27], 1
    %2223 = vsyncpa [#allocation30], 1
    %2224 = vsyncpa [#allocation33], 1

</llo_original>
